<compile_context>
chip_gen: v6e
topology: v6e:2x2x1
jax: 0.10.0
libtpu: 0.0.40
codegen_flags: <defaults>
</compile_context>

<pallas_src>
import functools
import math

import jax
import jax.numpy as jnp
from jax import lax
from jax.experimental import pallas as pl
from jax.experimental.pallas import tpu as pltpu


# ---------------------------------------------------------------------------
# Small helpers
# ---------------------------------------------------------------------------
def _vmem_budget_bytes():
    """Generation-aware VMEM request with headroom below physical capacity
    (v5e/v6e: 128 MiB -> ~112 MiB, v7x: 64 MiB -> ~52 MiB)."""
    cap = None
    try:
        cap = int(pltpu.get_tpu_info().vmem_capacity_bytes)
    except Exception:
        cap = None
    if not cap:
        cap = 64 * 1024 * 1024            # conservative (v7x-sized) fallback
    return min(cap - 12 * 1024 * 1024, 112 * 1024 * 1024)


def _pick_q_tile(length, cap):
    """Largest q-tile <= cap that divides `length`, preferring MXU/lane
    friendly multiples of 128, then bf16-sublane multiples of 16."""
    if length <= cap:
        return length
    best16 = None
    for t in range(cap, 0, -1):
        if length % t:
            continue
        if t % 128 == 0:
            return t
        if best16 is None and t % 16 == 0:
            best16 = t
    if best16 is not None:
        return best16
    # TODO(synk): pad Lq + masked tail instead of falling back to full length.
    return length


# ---------------------------------------------------------------------------
# Fused kernel: per-(batch, q-tile) Q projection + all-head attention + fc.
# K/V projections are computed at qi == 0 and cached in VMEM scratch.
# ---------------------------------------------------------------------------
def _mhsa_kernel(*refs, n_heads, kv_same):
    f32, bf16 = jnp.float32, jnp.bfloat16

    if kv_same:
        (xq_ref, xkv_ref,
         wq_ref, wk_ref, wv_ref, wfc_ref,
         bq_ref, bk_ref, bv_ref, bfc_ref,
         out_ref, k_scr, v_scr) = refs
        xk_ref = xv_ref = xkv_ref
    else:
        (xq_ref, xk_ref, xv_ref,
         wq_ref, wk_ref, wv_ref, wfc_ref,
         bq_ref, bk_ref, bv_ref, bfc_ref,
         out_ref, k_scr, v_scr) = refs

    qi = pl.program_id(1)

    # Project K and V once per batch element (first q-tile), cache in VMEM.
    @pl.when(qi == 0)
    def _():
        k = jnp.dot(xk_ref[0], wk_ref[...],
                    preferred_element_type=f32) + bk_ref[...]
        v = jnp.dot(xv_ref[0], wv_ref[...],
                    preferred_element_type=f32) + bv_ref[...]
        k_scr[...] = k.astype(bf16)
        v_scr[...] = v.astype(bf16)

    # Q projection for this tile (1/sqrt(dh) pre-folded into wq/bq).
    q = (jnp.dot(xq_ref[0], wq_ref[...], preferred_element_type=f32)
         + bq_ref[...]).astype(bf16)                           # (tq, D)

    tq, d_model = q.shape
    dh = d_model // n_heads

    acc = jnp.zeros((tq, d_model), dtype=f32)
    for h in range(n_heads):                                    # static unroll
        sl = slice(h * dh, (h + 1) * dh)
        q_h = q[:, sl]                                          # (tq, dh)
        k_h = k_scr[:, sl]                                      # (Lk, dh)
        v_h = v_scr[:, sl]                                      # (Lk, dh)

        # QK^T contracting the last dims -> no K transpose materialized.
        s = lax.dot_general(q_h, k_h, (((1,), (1,)), ((), ())),
                            preferred_element_type=f32)         # (tq, Lk)
        m = jnp.max(s, axis=-1, keepdims=True)
        p = jnp.exp(s - m)                                      # f32
        l = jnp.sum(p, axis=-1, keepdims=True)                  # (tq, 1)

        ctx_h = jnp.dot(p.astype(bf16), v_h,
                        preferred_element_type=f32)             # (tq, dh)
        ctx_h = ctx_h * pl.reciprocal(l, approx=True)           # EUP divide

        # Per-head fc accumulation: consumes ctx_h immediately, slices wfc on
        # the sublane axis, no lane-dim concat of sub-128 head pieces.
        acc = acc + jnp.dot(ctx_h.astype(bf16), wfc_ref[sl, :],
                            preferred_element_type=f32)         # (tq, D)

    out_ref[0] = (acc + bfc_ref[...]).astype(out_ref.dtype)


# ---------------------------------------------------------------------------
# pallas_call builder + public wrapper
# ---------------------------------------------------------------------------
def _build_attention_call(*, B, Lq, Lk, D, tq, n_heads, kv_same, out_dtype,
                          vmem_budget, buffered_weights):
    n_qt = Lq // tq

    def const_spec(shape):
        idx = lambda b, qi: (0, 0)
        if buffered_weights:
            # Constant block index -> single buffer (no double-buffer waste).
            return pl.BlockSpec(shape, idx, pipeline_mode=pl.Buffered(1))
        return pl.BlockSpec(shape, idx)

    q_spec = pl.BlockSpec((1, tq, D), lambda b, qi: (b, qi, 0))
    kv_spec = pl.BlockSpec((1, Lk, D), lambda b, qi: (b, 0, 0))
    w_spec = const_spec((D, D))
    b_spec = const_spec((1, D))

    act_specs = [q_spec, kv_spec] if kv_same else [q_spec, kv_spec, kv_spec]

    kernel = functools.partial(_mhsa_kernel, n_heads=n_heads, kv_same=kv_same)

    return pl.pallas_call(
        kernel,
        out_shape=jax.ShapeDtypeStruct((B, Lq, D), out_dtype),
        grid_spec=pltpu.PrefetchScalarGridSpec(
            num_scalar_prefetch=0,
            grid=(B, n_qt),
            in_specs=act_specs + [w_spec] * 4 + [b_spec] * 4,
            out_specs=pl.BlockSpec((1, tq, D), lambda b, qi: (b, qi, 0)),
            scratch_shapes=[pltpu.VMEM((Lk, D), jnp.bfloat16),   # cached K
                            pltpu.VMEM((Lk, D), jnp.bfloat16)],  # cached V
        ),
        compiler_params=pltpu.CompilerParams(
            # batch axis parallel (megacore on v7x); q-tile axis arbitrary
            # because the K/V scratch is reused across q-tiles of one batch.
            dimension_semantics=("parallel", "arbitrary"),
            vmem_limit_bytes=vmem_budget),
    )


def multi_head_self_attention(Q, K, V, params, n_heads, *, q_tile_cap=None):
    """Pallas forward of MultiHeadSelfAttention (eval mode, no mask/rope)."""
    B, Lq, D = Q.shape
    Bk, Lk, Dk = K.shape
    assert K.shape == V.shape and Bk == B and Dk == D
    assert D % n_heads == 0
    dh = D // n_heads
    inv_scale = 1.0 / math.sqrt(float(dh))

    bf16, f32 = jnp.bfloat16, jnp.float32

    vmem_budget = _vmem_budget_bytes()
    if q_tile_cap is None:
        q_tile_cap = 1024 if vmem_budget >= 96 * 1024 * 1024 else 512
    tq = _pick_q_tile(Lq, q_tile_cap)

    kv_same = K is V   # self-attention: pass the K/V source slab only once

    # bf16 activations: halves HBM->VMEM DMA bytes and VMEM buffer footprint.
    xq = Q.astype(bf16)
    if kv_same:
        act_args = (xq, K.astype(bf16))
    else:
        act_args = (xq, K.astype(bf16), V.astype(bf16))

    # Weights in native (in, out) layout, cast once to bf16; 1/sqrt(dh) folded
    # into wq/bq. Biases stay f32 and are added after f32 MXU accumulation.
    wq = (params["wq"] * inv_scale).astype(bf16)
    wk = params["wk"].astype(bf16)
    wv = params["wv"].astype(bf16)
    wfc = params["wfc"].astype(bf16)
    bq = (params["bq"] * inv_scale).reshape(1, D).astype(f32)
    bk = params["bk"].reshape(1, D).astype(f32)
    bv = params["bv"].reshape(1, D).astype(f32)
    bfc = params["bfc"].reshape(1, D).astype(f32)

    args = (*act_args, wq, wk, wv, wfc, bq, bk, bv, bfc)
    build = functools.partial(
        _build_attention_call, B=B, Lq=Lq, Lk=Lk, D=D, tq=tq,
        n_heads=n_heads, kv_same=kv_same, out_dtype=Q.dtype,
        vmem_budget=vmem_budget)

    if hasattr(pl, "Buffered"):
        try:
            return build(buffered_weights=True)(*args)
        except Exception:
            pass   # fall back to default buffering (older Pallas versions)
    return build(buffered_weights=False)(*args)


# ---------------------------------------------------------------------------
# Pure-JAX reference (mirrors the PyTorch forward, eval mode, no mask/rope).
# ---------------------------------------------------------------------------
def reference_forward(Q, K, V, params, n_heads):
    B, Lq, D = Q.shape
    _, Lk, _ = K.shape
    dh = D // n_heads
    scale = math.sqrt(float(dh))

    q = Q @ params["wq"] + params["bq"]
    k = K @ params["wk"] + params["bk"]
    v = V @ params["wv"] + params["bv"]

    q = q.reshape(B, Lq, n_heads, dh).transpose(0, 2, 1, 3)
    k = k.reshape(B, Lk, n_heads, dh).transpose(0, 2, 1, 3)
    v = v.reshape(B, Lk, n_heads, dh).transpose(0, 2, 1, 3)

    s = jnp.einsum("bhqd,bhkd->bhqk", q, k) / scale
    p = jax.nn.softmax(s, axis=-1)
    ctx = jnp.einsum("bhqk,bhkd->bhqd", p, v)
    ctx = ctx.transpose(0, 2, 1, 3).reshape(B, Lq, D)
    return ctx @ params["wfc"] + params["bfc"]


# ---------------------------------------------------------------------------
# Deterministic synthetic parameters (nn.Linear-style uniform init).
# ---------------------------------------------------------------------------
def make_params(key, d_model):
    bound = 1.0 / math.sqrt(d_model)
    names = ["wq", "bq", "wk", "bk", "wv", "bv", "wfc", "bfc"]
    keys = jax.random.split(key, len(names))
    params = {}
    for name, k in zip(names, keys):
        shape = (d_model, d_model) if name.startswith("w") else (d_model,)
        params[name] = jax.random.uniform(k, shape, jnp.float32,
                                          minval=-bound, maxval=bound)
    return params


if __name__ == "__main__":
    B, L, D, H = 2, 8, 32, 4

    root = jax.random.PRNGKey(0)
    kx, kp = jax.random.split(root)
    x = jax.random.normal(kx, (B, L, D), dtype=jnp.float32)
    params = make_params(kp, D)

    # self-attention: Q = K = V = x
    out = multi_head_self_attention(x, x, x, params, H)
    out = jax.block_until_ready(out)

    ref = reference_forward(x, x, x, params, H)
    assert out.shape == (B, L, D)
    # Tolerance loosened vs. the f32 reference: the MXU is fed bf16 inputs
    # (accumulation stays f32) and reciprocal is the fast EUP approximation.
    err = float(jnp.max(jnp.abs(out - ref)))
    assert jnp.allclose(out, ref, rtol=3e-2, atol=3e-2), err

    print("KERNEL_OK")
</pallas_src>

<mosaic_0001>
module attributes {stable_mosaic.version = 11 : i64} {
  func.func @_mhsa_kernel(%arg0: i32, %arg1: i32, %arg2: memref<1x8x32xbf16, #tpu.memory_space<vmem>>, %arg3: memref<1x8x32xbf16, #tpu.memory_space<vmem>>, %arg4: memref<32x32xbf16, #tpu.memory_space<vmem>>, %arg5: memref<32x32xbf16, #tpu.memory_space<vmem>>, %arg6: memref<32x32xbf16, #tpu.memory_space<vmem>>, %arg7: memref<32x32xbf16, #tpu.memory_space<vmem>>, %arg8: memref<1x32xf32, #tpu.memory_space<vmem>>, %arg9: memref<1x32xf32, #tpu.memory_space<vmem>>, %arg10: memref<1x32xf32, #tpu.memory_space<vmem>>, %arg11: memref<1x32xf32, #tpu.memory_space<vmem>>, %arg12: memref<1x8x32xf32, #tpu.memory_space<vmem>>, %arg13: memref<8x32xbf16, #tpu.memory_space<vmem>>, %arg14: memref<8x32xbf16, #tpu.memory_space<vmem>>) attributes {dimension_semantics = [#tpu.dimension_semantics<parallel>, #tpu.dimension_semantics<arbitrary>], iteration_bounds = array<i64: 2, 1>, scalar_prefetch = 0 : i64, scratch_operands = 2 : i64, tpu.core_type = #tpu.core_type<tc>, window_params = [{transform_indices = @transform_0, window_bounds = array<i64: 1, 8, 32>}, {transform_indices = @transform_1, window_bounds = array<i64: 1, 8, 32>}, {pipeline_mode = #tpu.pipeline_mode<synchronous>, transform_indices = @transform_2, window_bounds = array<i64: 32, 32>}, {pipeline_mode = #tpu.pipeline_mode<synchronous>, transform_indices = @transform_3, window_bounds = array<i64: 32, 32>}, {pipeline_mode = #tpu.pipeline_mode<synchronous>, transform_indices = @transform_4, window_bounds = array<i64: 32, 32>}, {pipeline_mode = #tpu.pipeline_mode<synchronous>, transform_indices = @transform_5, window_bounds = array<i64: 32, 32>}, {pipeline_mode = #tpu.pipeline_mode<synchronous>, transform_indices = @transform_6, window_bounds = array<i64: 1, 32>}, {pipeline_mode = #tpu.pipeline_mode<synchronous>, transform_indices = @transform_7, window_bounds = array<i64: 1, 32>}, {pipeline_mode = #tpu.pipeline_mode<synchronous>, transform_indices = @transform_8, window_bounds = array<i64: 1, 32>}, {pipeline_mode = #tpu.pipeline_mode<synchronous>, transform_indices = @transform_9, window_bounds = array<i64: 1, 32>}, {transform_indices = @transform_10, window_bounds = array<i64: 1, 8, 32>}]} {
    %c0_i32 = arith.constant 0 : i32
    %0 = arith.cmpi eq, %arg1, %c0_i32 : i32
    %1 = arith.extui %0 : i1 to i32
    %c0_i32_0 = arith.constant 0 : i32
    %2 = arith.cmpi ne, %1, %c0_i32_0 : i32
    scf.if %2 {
      %c0_54 = arith.constant 0 : index
      %c0_55 = arith.constant 0 : index
      %c0_56 = arith.constant 0 : index
      %98 = vector.load %arg3[%c0_54, %c0_55, %c0_56] : memref<1x8x32xbf16, #tpu.memory_space<vmem>>, vector<1x8x32xbf16>
      %99 = vector.shape_cast %98 : vector<1x8x32xbf16> to vector<8x32xbf16>
      %c0_57 = arith.constant 0 : index
      %c0_58 = arith.constant 0 : index
      %100 = vector.load %arg5[%c0_57, %c0_58] : memref<32x32xbf16, #tpu.memory_space<vmem>>, vector<32x32xbf16>
      %cst_59 = arith.constant dense<0.000000e+00> : vector<8x32xf32>
      %101 = tpu.matmul %99, %100, %cst_59 {dimension_numbers = #tpu.dot_dimension_numbers<[1], [0], [0], [1], [0, 0, 1, 1], [], []>} : vector<8x32xbf16>, vector<32x32xbf16>, vector<8x32xf32> -> vector<8x32xf32>
      %c0_60 = arith.constant 0 : index
      %c0_61 = arith.constant 0 : index
      %102 = vector.load %arg9[%c0_60, %c0_61] : memref<1x32xf32, #tpu.memory_space<vmem>>, vector<1x32xf32>
      %103 = vector.broadcast %102 : vector<1x32xf32> to vector<8x32xf32>
      %104 = arith.addf %101, %103 : vector<8x32xf32>
      %c0_62 = arith.constant 0 : index
      %c0_63 = arith.constant 0 : index
      %c0_64 = arith.constant 0 : index
      %105 = vector.load %arg3[%c0_62, %c0_63, %c0_64] : memref<1x8x32xbf16, #tpu.memory_space<vmem>>, vector<1x8x32xbf16>
      %106 = vector.shape_cast %105 : vector<1x8x32xbf16> to vector<8x32xbf16>
      %c0_65 = arith.constant 0 : index
      %c0_66 = arith.constant 0 : index
      %107 = vector.load %arg6[%c0_65, %c0_66] : memref<32x32xbf16, #tpu.memory_space<vmem>>, vector<32x32xbf16>
      %cst_67 = arith.constant dense<0.000000e+00> : vector<8x32xf32>
      %108 = tpu.matmul %106, %107, %cst_67 {dimension_numbers = #tpu.dot_dimension_numbers<[1], [0], [0], [1], [0, 0, 1, 1], [], []>} : vector<8x32xbf16>, vector<32x32xbf16>, vector<8x32xf32> -> vector<8x32xf32>
      %c0_68 = arith.constant 0 : index
      %c0_69 = arith.constant 0 : index
      %109 = vector.load %arg10[%c0_68, %c0_69] : memref<1x32xf32, #tpu.memory_space<vmem>>, vector<1x32xf32>
      %110 = vector.broadcast %109 : vector<1x32xf32> to vector<8x32xf32>
      %111 = arith.addf %108, %110 : vector<8x32xf32>
      %112 = arith.truncf %104 : vector<8x32xf32> to vector<8x32xbf16>
      %c0_70 = arith.constant 0 : index
      %c0_71 = arith.constant 0 : index
      %113 = vector.load %arg13[%c0_70, %c0_71] : memref<8x32xbf16, #tpu.memory_space<vmem>>, vector<8x32xbf16>
      tpu.vector_store %arg13[%c0_70, %c0_71], %112 {strides = array<i32>} : memref<8x32xbf16, #tpu.memory_space<vmem>>, vector<8x32xbf16>,
      %114 = arith.truncf %111 : vector<8x32xf32> to vector<8x32xbf16>
      %c0_72 = arith.constant 0 : index
      %c0_73 = arith.constant 0 : index
      %115 = vector.load %arg14[%c0_72, %c0_73] : memref<8x32xbf16, #tpu.memory_space<vmem>>, vector<8x32xbf16>
      tpu.vector_store %arg14[%c0_72, %c0_73], %114 {strides = array<i32>} : memref<8x32xbf16, #tpu.memory_space<vmem>>, vector<8x32xbf16>,
    } else {
    }
    %c0 = arith.constant 0 : index
    %c0_1 = arith.constant 0 : index
    %c0_2 = arith.constant 0 : index
    %3 = vector.load %arg2[%c0, %c0_1, %c0_2] : memref<1x8x32xbf16, #tpu.memory_space<vmem>>, vector<1x8x32xbf16>
    %4 = vector.shape_cast %3 : vector<1x8x32xbf16> to vector<8x32xbf16>
    %c0_3 = arith.constant 0 : index
    %c0_4 = arith.constant 0 : index
    %5 = vector.load %arg4[%c0_3, %c0_4] : memref<32x32xbf16, #tpu.memory_space<vmem>>, vector<32x32xbf16>
    %cst = arith.constant dense<0.000000e+00> : vector<8x32xf32>
    %6 = tpu.matmul %4, %5, %cst {dimension_numbers = #tpu.dot_dimension_numbers<[1], [0], [0], [1], [0, 0, 1, 1], [], []>} : vector<8x32xbf16>, vector<32x32xbf16>, vector<8x32xf32> -> vector<8x32xf32>
    %c0_5 = arith.constant 0 : index
    %c0_6 = arith.constant 0 : index
    %7 = vector.load %arg8[%c0_5, %c0_6] : memref<1x32xf32, #tpu.memory_space<vmem>>, vector<1x32xf32>
    %8 = vector.broadcast %7 : vector<1x32xf32> to vector<8x32xf32>
    %9 = arith.addf %6, %8 : vector<8x32xf32>
    %10 = arith.truncf %9 : vector<8x32xf32> to vector<8x32xbf16>
    %cst_7 = arith.constant 0.000000e+00 : f32
    %11 = vector.broadcast %cst_7 : f32 to vector<8x32xf32>
    %12 = vector.extract_strided_slice %10 {offsets = [0, 0], sizes = [8, 8], strides = [1, 1]} : vector<8x32xbf16> to vector<8x8xbf16>
    %c0_8 = arith.constant 0 : index
    %c0_9 = arith.constant 0 : index
    %13 = vector.load %arg13[%c0_8, %c0_9] : memref<8x32xbf16, #tpu.memory_space<vmem>>, vector<8x8xbf16>
    %c0_10 = arith.constant 0 : index
    %c0_11 = arith.constant 0 : index
    %14 = vector.load %arg14[%c0_10, %c0_11] : memref<8x32xbf16, #tpu.memory_space<vmem>>, vector<8x8xbf16>
    %cst_12 = arith.constant dense<0.000000e+00> : vector<8x8xf32>
    %15 = tpu.matmul %12, %13, %cst_12 {dimension_numbers = #tpu.dot_dimension_numbers<[1], [1], [0], [0], [0, 0, 1, 0], [], []>} : vector<8x8xbf16>, vector<8x8xbf16>, vector<8x8xf32> -> vector<8x8xf32>
    %cst_13 = arith.constant dense<0xFF800000> : vector<8xf32>
    %16 = vector.multi_reduction <maximumf>, %15, %cst_13 [1] : vector<8x8xf32> to vector<8xf32>
    %17 = vector.shape_cast %16 : vector<8xf32> to vector<8x1xf32>
    %18 = vector.broadcast %17 : vector<8x1xf32> to vector<8x8xf32>
    %19 = arith.subf %15, %18 : vector<8x8xf32>
    %20 = math.exp %19 : vector<8x8xf32>
    %cst_14 = arith.constant dense<0.000000e+00> : vector<8xf32>
    %21 = vector.multi_reduction <add>, %20, %cst_14 [1] : vector<8x8xf32> to vector<8xf32>
    %22 = vector.shape_cast %21 : vector<8xf32> to vector<8x1xf32>
    %23 = arith.truncf %20 : vector<8x8xf32> to vector<8x8xbf16>
    %cst_15 = arith.constant dense<0.000000e+00> : vector<8x8xf32>
    %24 = tpu.matmul %23, %14, %cst_15 {dimension_numbers = #tpu.dot_dimension_numbers<[1], [0], [0], [1], [0, 0, 1, 1], [], []>} : vector<8x8xbf16>, vector<8x8xbf16>, vector<8x8xf32> -> vector<8x8xf32>
    %25 = tpu.reciprocal %22 {approx = true} : vector<8x1xf32> -> vector<8x1xf32>
    %26 = vector.broadcast %25 : vector<8x1xf32> to vector<8x8xf32>
    %27 = arith.mulf %24, %26 : vector<8x8xf32>
    %28 = arith.truncf %27 : vector<8x8xf32> to vector<8x8xbf16>
    %c0_16 = arith.constant 0 : index
    %c0_17 = arith.constant 0 : index
    %29 = vector.load %arg7[%c0_16, %c0_17] : memref<32x32xbf16, #tpu.memory_space<vmem>>, vector<8x32xbf16>
    %cst_18 = arith.constant dense<0.000000e+00> : vector<8x32xf32>
    %30 = tpu.matmul %28, %29, %cst_18 {dimension_numbers = #tpu.dot_dimension_numbers<[1], [0], [0], [1], [0, 0, 1, 1], [], []>} : vector<8x8xbf16>, vector<8x32xbf16>, vector<8x32xf32> -> vector<8x32xf32>
    %31 = arith.addf %11, %30 : vector<8x32xf32>
    %32 = vector.extract_strided_slice %10 {offsets = [0, 8], sizes = [8, 8], strides = [1, 1]} : vector<8x32xbf16> to vector<8x8xbf16>
    %c0_19 = arith.constant 0 : index
    %c8 = arith.constant 8 : index
    %33 = vector.load %arg13[%c0_19, %c8] : memref<8x32xbf16, #tpu.memory_space<vmem>>, vector<8x8xbf16>
    %c0_20 = arith.constant 0 : index
    %c8_21 = arith.constant 8 : index
    %34 = vector.load %arg14[%c0_20, %c8_21] : memref<8x32xbf16, #tpu.memory_space<vmem>>, vector<8x8xbf16>
    %cst_22 = arith.constant dense<0.000000e+00> : vector<8x8xf32>
    %35 = tpu.matmul %32, %33, %cst_22 {dimension_numbers = #tpu.dot_dimension_numbers<[1], [1], [0], [0], [0, 0, 1, 0], [], []>} : vector<8x8xbf16>, vector<8x8xbf16>, vector<8x8xf32> -> vector<8x8xf32>
    %cst_23 = arith.constant dense<0xFF800000> : vector<8xf32>
    %36 = vector.multi_reduction <maximumf>, %35, %cst_23 [1] : vector<8x8xf32> to vector<8xf32>
    %37 = vector.shape_cast %36 : vector<8xf32> to vector<8x1xf32>
    %38 = vector.broadcast %37 : vector<8x1xf32> to vector<8x8xf32>
    %39 = arith.subf %35, %38 : vector<8x8xf32>
    %40 = math.exp %39 : vector<8x8xf32>
    %cst_24 = arith.constant dense<0.000000e+00> : vector<8xf32>
    %41 = vector.multi_reduction <add>, %40, %cst_24 [1] : vector<8x8xf32> to vector<8xf32>
    %42 = vector.shape_cast %41 : vector<8xf32> to vector<8x1xf32>
    %43 = arith.truncf %40 : vector<8x8xf32> to vector<8x8xbf16>
    %cst_25 = arith.constant dense<0.000000e+00> : vector<8x8xf32>
    %44 = tpu.matmul %43, %34, %cst_25 {dimension_numbers = #tpu.dot_dimension_numbers<[1], [0], [0], [1], [0, 0, 1, 1], [], []>} : vector<8x8xbf16>, vector<8x8xbf16>, vector<8x8xf32> -> vector<8x8xf32>
    %45 = tpu.reciprocal %42 {approx = true} : vector<8x1xf32> -> vector<8x1xf32>
    %46 = vector.broadcast %45 : vector<8x1xf32> to vector<8x8xf32>
    %47 = arith.mulf %44, %46 : vector<8x8xf32>
    %48 = arith.truncf %47 : vector<8x8xf32> to vector<8x8xbf16>
    %c8_26 = arith.constant 8 : index
    %c0_27 = arith.constant 0 : index
    %49 = vector.load %arg7[%c8_26, %c0_27] : memref<32x32xbf16, #tpu.memory_space<vmem>>, vector<8x32xbf16>
    %cst_28 = arith.constant dense<0.000000e+00> : vector<8x32xf32>
    %50 = tpu.matmul %48, %49, %cst_28 {dimension_numbers = #tpu.dot_dimension_numbers<[1], [0], [0], [1], [0, 0, 1, 1], [], []>} : vector<8x8xbf16>, vector<8x32xbf16>, vector<8x32xf32> -> vector<8x32xf32>
    %51 = arith.addf %31, %50 : vector<8x32xf32>
    %52 = vector.extract_strided_slice %10 {offsets = [0, 16], sizes = [8, 8], strides = [1, 1]} : vector<8x32xbf16> to vector<8x8xbf16>
    %c0_29 = arith.constant 0 : index
    %c16 = arith.constant 16 : index
    %53 = vector.load %arg13[%c0_29, %c16] : memref<8x32xbf16, #tpu.memory_space<vmem>>, vector<8x8xbf16>
    %c0_30 = arith.constant 0 : index
    %c16_31 = arith.constant 16 : index
    %54 = vector.load %arg14[%c0_30, %c16_31] : memref<8x32xbf16, #tpu.memory_space<vmem>>, vector<8x8xbf16>
    %cst_32 = arith.constant dense<0.000000e+00> : vector<8x8xf32>
    %55 = tpu.matmul %52, %53, %cst_32 {dimension_numbers = #tpu.dot_dimension_numbers<[1], [1], [0], [0], [0, 0, 1, 0], [], []>} : vector<8x8xbf16>, vector<8x8xbf16>, vector<8x8xf32> -> vector<8x8xf32>
    %cst_33 = arith.constant dense<0xFF800000> : vector<8xf32>
    %56 = vector.multi_reduction <maximumf>, %55, %cst_33 [1] : vector<8x8xf32> to vector<8xf32>
    %57 = vector.shape_cast %56 : vector<8xf32> to vector<8x1xf32>
    %58 = vector.broadcast %57 : vector<8x1xf32> to vector<8x8xf32>
    %59 = arith.subf %55, %58 : vector<8x8xf32>
    %60 = math.exp %59 : vector<8x8xf32>
    %cst_34 = arith.constant dense<0.000000e+00> : vector<8xf32>
    %61 = vector.multi_reduction <add>, %60, %cst_34 [1] : vector<8x8xf32> to vector<8xf32>
    %62 = vector.shape_cast %61 : vector<8xf32> to vector<8x1xf32>
    %63 = arith.truncf %60 : vector<8x8xf32> to vector<8x8xbf16>
    %cst_35 = arith.constant dense<0.000000e+00> : vector<8x8xf32>
    %64 = tpu.matmul %63, %54, %cst_35 {dimension_numbers = #tpu.dot_dimension_numbers<[1], [0], [0], [1], [0, 0, 1, 1], [], []>} : vector<8x8xbf16>, vector<8x8xbf16>, vector<8x8xf32> -> vector<8x8xf32>
    %65 = tpu.reciprocal %62 {approx = true} : vector<8x1xf32> -> vector<8x1xf32>
    %66 = vector.broadcast %65 : vector<8x1xf32> to vector<8x8xf32>
    %67 = arith.mulf %64, %66 : vector<8x8xf32>
    %68 = arith.truncf %67 : vector<8x8xf32> to vector<8x8xbf16>
    %c16_36 = arith.constant 16 : index
    %c0_37 = arith.constant 0 : index
    %69 = vector.load %arg7[%c16_36, %c0_37] : memref<32x32xbf16, #tpu.memory_space<vmem>>, vector<8x32xbf16>
    %cst_38 = arith.constant dense<0.000000e+00> : vector<8x32xf32>
    %70 = tpu.matmul %68, %69, %cst_38 {dimension_numbers = #tpu.dot_dimension_numbers<[1], [0], [0], [1], [0, 0, 1, 1], [], []>} : vector<8x8xbf16>, vector<8x32xbf16>, vector<8x32xf32> -> vector<8x32xf32>
    %71 = arith.addf %51, %70 : vector<8x32xf32>
    %72 = vector.extract_strided_slice %10 {offsets = [0, 24], sizes = [8, 8], strides = [1, 1]} : vector<8x32xbf16> to vector<8x8xbf16>
    %c0_39 = arith.constant 0 : index
    %c24 = arith.constant 24 : index
    %73 = vector.load %arg13[%c0_39, %c24] : memref<8x32xbf16, #tpu.memory_space<vmem>>, vector<8x8xbf16>
    %c0_40 = arith.constant 0 : index
    %c24_41 = arith.constant 24 : index
    %74 = vector.load %arg14[%c0_40, %c24_41] : memref<8x32xbf16, #tpu.memory_space<vmem>>, vector<8x8xbf16>
    %cst_42 = arith.constant dense<0.000000e+00> : vector<8x8xf32>
    %75 = tpu.matmul %72, %73, %cst_42 {dimension_numbers = #tpu.dot_dimension_numbers<[1], [1], [0], [0], [0, 0, 1, 0], [], []>} : vector<8x8xbf16>, vector<8x8xbf16>, vector<8x8xf32> -> vector<8x8xf32>
    %cst_43 = arith.constant dense<0xFF800000> : vector<8xf32>
    %76 = vector.multi_reduction <maximumf>, %75, %cst_43 [1] : vector<8x8xf32> to vector<8xf32>
    %77 = vector.shape_cast %76 : vector<8xf32> to vector<8x1xf32>
    %78 = vector.broadcast %77 : vector<8x1xf32> to vector<8x8xf32>
    %79 = arith.subf %75, %78 : vector<8x8xf32>
    %80 = math.exp %79 : vector<8x8xf32>
    %cst_44 = arith.constant dense<0.000000e+00> : vector<8xf32>
    %81 = vector.multi_reduction <add>, %80, %cst_44 [1] : vector<8x8xf32> to vector<8xf32>
    %82 = vector.shape_cast %81 : vector<8xf32> to vector<8x1xf32>
    %83 = arith.truncf %80 : vector<8x8xf32> to vector<8x8xbf16>
    %cst_45 = arith.constant dense<0.000000e+00> : vector<8x8xf32>
    %84 = tpu.matmul %83, %74, %cst_45 {dimension_numbers = #tpu.dot_dimension_numbers<[1], [0], [0], [1], [0, 0, 1, 1], [], []>} : vector<8x8xbf16>, vector<8x8xbf16>, vector<8x8xf32> -> vector<8x8xf32>
    %85 = tpu.reciprocal %82 {approx = true} : vector<8x1xf32> -> vector<8x1xf32>
    %86 = vector.broadcast %85 : vector<8x1xf32> to vector<8x8xf32>
    %87 = arith.mulf %84, %86 : vector<8x8xf32>
    %88 = arith.truncf %87 : vector<8x8xf32> to vector<8x8xbf16>
    %c24_46 = arith.constant 24 : index
    %c0_47 = arith.constant 0 : index
    %89 = vector.load %arg7[%c24_46, %c0_47] : memref<32x32xbf16, #tpu.memory_space<vmem>>, vector<8x32xbf16>
    %cst_48 = arith.constant dense<0.000000e+00> : vector<8x32xf32>
    %90 = tpu.matmul %88, %89, %cst_48 {dimension_numbers = #tpu.dot_dimension_numbers<[1], [0], [0], [1], [0, 0, 1, 1], [], []>} : vector<8x8xbf16>, vector<8x32xbf16>, vector<8x32xf32> -> vector<8x32xf32>
    %91 = arith.addf %71, %90 : vector<8x32xf32>
    %c0_49 = arith.constant 0 : index
    %c0_50 = arith.constant 0 : index
    %92 = vector.load %arg11[%c0_49, %c0_50] : memref<1x32xf32, #tpu.memory_space<vmem>>, vector<1x32xf32>
    %93 = vector.broadcast %92 : vector<1x32xf32> to vector<8x32xf32>
    %94 = arith.addf %91, %93 : vector<8x32xf32>
    %c0_51 = arith.constant 0 : index
    %c0_52 = arith.constant 0 : index
    %c0_53 = arith.constant 0 : index
    %95 = vector.load %arg12[%c0_51, %c0_52, %c0_53] : memref<1x8x32xf32, #tpu.memory_space<vmem>>, vector<1x8x32xf32>
    %96 = vector.shape_cast %95 : vector<1x8x32xf32> to vector<8x32xf32>
    %97 = vector.shape_cast %94 : vector<8x32xf32> to vector<1x8x32xf32>
    tpu.vector_store %arg12[%c0_51, %c0_52, %c0_53], %97 {strides = array<i32>} : memref<1x8x32xf32, #tpu.memory_space<vmem>>, vector<1x8x32xf32>,
    return
  }
  func.func @transform_0(%arg0: i32, %arg1: i32) -> (i32, i32, i32) {
    %c0_i32 = arith.constant 0 : i32
    %c0_i32_0 = arith.constant 0 : i32
    return %arg0, %arg1, %c0_i32 : i32, i32, i32
  }
  func.func @transform_1(%arg0: i32, %arg1: i32) -> (i32, i32, i32) {
    %c0_i32 = arith.constant 0 : i32
    %c0_i32_0 = arith.constant 0 : i32
    %c0_i32_1 = arith.constant 0 : i32
    return %arg0, %c0_i32, %c0_i32_0 : i32, i32, i32
  }
  func.func @transform_2(%arg0: i32, %arg1: i32) -> (i32, i32) {
    %c0_i32 = arith.constant 0 : i32
    %c0_i32_0 = arith.constant 0 : i32
    %c0_i32_1 = arith.constant 0 : i32
    return %c0_i32, %c0_i32_0 : i32, i32
  }
  func.func @transform_3(%arg0: i32, %arg1: i32) -> (i32, i32) {
    %c0_i32 = arith.constant 0 : i32
    %c0_i32_0 = arith.constant 0 : i32
    %c0_i32_1 = arith.constant 0 : i32
    return %c0_i32, %c0_i32_0 : i32, i32
  }
  func.func @transform_4(%arg0: i32, %arg1: i32) -> (i32, i32) {
    %c0_i32 = arith.constant 0 : i32
    %c0_i32_0 = arith.constant 0 : i32
    %c0_i32_1 = arith.constant 0 : i32
    return %c0_i32, %c0_i32_0 : i32, i32
  }
  func.func @transform_5(%arg0: i32, %arg1: i32) -> (i32, i32) {
    %c0_i32 = arith.constant 0 : i32
    %c0_i32_0 = arith.constant 0 : i32
    %c0_i32_1 = arith.constant 0 : i32
    return %c0_i32, %c0_i32_0 : i32, i32
  }
  func.func @transform_6(%arg0: i32, %arg1: i32) -> (i32, i32) {
    %c0_i32 = arith.constant 0 : i32
    %c0_i32_0 = arith.constant 0 : i32
    %c0_i32_1 = arith.constant 0 : i32
    return %c0_i32, %c0_i32_0 : i32, i32
  }
  func.func @transform_7(%arg0: i32, %arg1: i32) -> (i32, i32) {
    %c0_i32 = arith.constant 0 : i32
    %c0_i32_0 = arith.constant 0 : i32
    %c0_i32_1 = arith.constant 0 : i32
    return %c0_i32, %c0_i32_0 : i32, i32
  }
  func.func @transform_8(%arg0: i32, %arg1: i32) -> (i32, i32) {
    %c0_i32 = arith.constant 0 : i32
    %c0_i32_0 = arith.constant 0 : i32
    %c0_i32_1 = arith.constant 0 : i32
    return %c0_i32, %c0_i32_0 : i32, i32
  }
  func.func @transform_9(%arg0: i32, %arg1: i32) -> (i32, i32) {
    %c0_i32 = arith.constant 0 : i32
    %c0_i32_0 = arith.constant 0 : i32
    %c0_i32_1 = arith.constant 0 : i32
    return %c0_i32, %c0_i32_0 : i32, i32
  }
  func.func @transform_10(%arg0: i32, %arg1: i32) -> (i32, i32, i32) {
    %c0_i32 = arith.constant 0 : i32
    %c0_i32_0 = arith.constant 0 : i32
    return %arg0, %arg1, %c0_i32 : i32, i32, i32
  }
}

module attributes {stable_mosaic.version = 11 : i64} {
  func.func @_mhsa_kernel(%arg0: i32, %arg1: i32, %arg2: memref<1x8x32xbf16, #tpu.memory_space<vmem>>, %arg3: memref<1x8x32xbf16, #tpu.memory_space<vmem>>, %arg4: memref<32x32xbf16, #tpu.memory_space<vmem>>, %arg5: memref<32x32xbf16, #tpu.memory_space<vmem>>, %arg6: memref<32x32xbf16, #tpu.memory_space<vmem>>, %arg7: memref<32x32xbf16, #tpu.memory_space<vmem>>, %arg8: memref<1x32xf32, #tpu.memory_space<vmem>>, %arg9: memref<1x32xf32, #tpu.memory_space<vmem>>, %arg10: memref<1x32xf32, #tpu.memory_space<vmem>>, %arg11: memref<1x32xf32, #tpu.memory_space<vmem>>, %arg12: memref<1x8x32xf32, #tpu.memory_space<vmem>>, %arg13: memref<8x32xbf16, #tpu.memory_space<vmem>>, %arg14: memref<8x32xbf16, #tpu.memory_space<vmem>>) attributes {dimension_semantics = [#tpu.dimension_semantics<parallel>, #tpu.dimension_semantics<arbitrary>], iteration_bounds = array<i64: 2, 1>, scalar_prefetch = 0 : i64, scratch_operands = 2 : i64, tpu.core_type = #tpu.core_type<tc>, window_params = [{transform_indices = @transform_0, window_bounds = array<i64: 1, 8, 32>}, {transform_indices = @transform_1, window_bounds = array<i64: 1, 8, 32>}, {pipeline_mode = #tpu.pipeline_mode<synchronous>, transform_indices = @transform_2, window_bounds = array<i64: 32, 32>}, {pipeline_mode = #tpu.pipeline_mode<synchronous>, transform_indices = @transform_3, window_bounds = array<i64: 32, 32>}, {pipeline_mode = #tpu.pipeline_mode<synchronous>, transform_indices = @transform_4, window_bounds = array<i64: 32, 32>}, {pipeline_mode = #tpu.pipeline_mode<synchronous>, transform_indices = @transform_5, window_bounds = array<i64: 32, 32>}, {pipeline_mode = #tpu.pipeline_mode<synchronous>, transform_indices = @transform_6, window_bounds = array<i64: 1, 32>}, {pipeline_mode = #tpu.pipeline_mode<synchronous>, transform_indices = @transform_7, window_bounds = array<i64: 1, 32>}, {pipeline_mode = #tpu.pipeline_mode<synchronous>, transform_indices = @transform_8, window_bounds = array<i64: 1, 32>}, {pipeline_mode = #tpu.pipeline_mode<synchronous>, transform_indices = @transform_9, window_bounds = array<i64: 1, 32>}, {transform_indices = @transform_10, window_bounds = array<i64: 1, 8, 32>}]} {
    %c0_i32 = arith.constant 0 : i32
    %0 = arith.cmpi eq, %arg1, %c0_i32 : i32
    %1 = arith.extui %0 : i1 to i32
    %c0_i32_0 = arith.constant 0 : i32
    %2 = arith.cmpi ne, %1, %c0_i32_0 : i32
    scf.if %2 {
      %c0_54 = arith.constant 0 : index
      %c0_55 = arith.constant 0 : index
      %c0_56 = arith.constant 0 : index
      %98 = vector.load %arg3[%c0_54, %c0_55, %c0_56] : memref<1x8x32xbf16, #tpu.memory_space<vmem>>, vector<1x8x32xbf16>
      %99 = vector.shape_cast %98 : vector<1x8x32xbf16> to vector<8x32xbf16>
      %c0_57 = arith.constant 0 : index
      %c0_58 = arith.constant 0 : index
      %100 = vector.load %arg5[%c0_57, %c0_58] : memref<32x32xbf16, #tpu.memory_space<vmem>>, vector<32x32xbf16>
      %cst_59 = arith.constant dense<0.000000e+00> : vector<8x32xf32>
      %101 = tpu.matmul %99, %100, %cst_59 {dimension_numbers = #tpu.dot_dimension_numbers<[1], [0], [0], [1], [0, 0, 1, 1], [], []>} : vector<8x32xbf16>, vector<32x32xbf16>, vector<8x32xf32> -> vector<8x32xf32>
      %c0_60 = arith.constant 0 : index
      %c0_61 = arith.constant 0 : index
      %102 = vector.load %arg9[%c0_60, %c0_61] : memref<1x32xf32, #tpu.memory_space<vmem>>, vector<1x32xf32>
      %103 = vector.broadcast %102 : vector<1x32xf32> to vector<8x32xf32>
      %104 = arith.addf %101, %103 : vector<8x32xf32>
      %c0_62 = arith.constant 0 : index
      %c0_63 = arith.constant 0 : index
      %c0_64 = arith.constant 0 : index
      %105 = vector.load %arg3[%c0_62, %c0_63, %c0_64] : memref<1x8x32xbf16, #tpu.memory_space<vmem>>, vector<1x8x32xbf16>
      %106 = vector.shape_cast %105 : vector<1x8x32xbf16> to vector<8x32xbf16>
      %c0_65 = arith.constant 0 : index
      %c0_66 = arith.constant 0 : index
      %107 = vector.load %arg6[%c0_65, %c0_66] : memref<32x32xbf16, #tpu.memory_space<vmem>>, vector<32x32xbf16>
      %cst_67 = arith.constant dense<0.000000e+00> : vector<8x32xf32>
      %108 = tpu.matmul %106, %107, %cst_67 {dimension_numbers = #tpu.dot_dimension_numbers<[1], [0], [0], [1], [0, 0, 1, 1], [], []>} : vector<8x32xbf16>, vector<32x32xbf16>, vector<8x32xf32> -> vector<8x32xf32>
      %c0_68 = arith.constant 0 : index
      %c0_69 = arith.constant 0 : index
      %109 = vector.load %arg10[%c0_68, %c0_69] : memref<1x32xf32, #tpu.memory_space<vmem>>, vector<1x32xf32>
      %110 = vector.broadcast %109 : vector<1x32xf32> to vector<8x32xf32>
      %111 = arith.addf %108, %110 : vector<8x32xf32>
      %112 = arith.truncf %104 : vector<8x32xf32> to vector<8x32xbf16>
      %c0_70 = arith.constant 0 : index
      %c0_71 = arith.constant 0 : index
      %113 = vector.load %arg13[%c0_70, %c0_71] : memref<8x32xbf16, #tpu.memory_space<vmem>>, vector<8x32xbf16>
      tpu.vector_store %arg13[%c0_70, %c0_71], %112 {strides = array<i32>} : memref<8x32xbf16, #tpu.memory_space<vmem>>, vector<8x32xbf16>,
      %114 = arith.truncf %111 : vector<8x32xf32> to vector<8x32xbf16>
      %c0_72 = arith.constant 0 : index
      %c0_73 = arith.constant 0 : index
      %115 = vector.load %arg14[%c0_72, %c0_73] : memref<8x32xbf16, #tpu.memory_space<vmem>>, vector<8x32xbf16>
      tpu.vector_store %arg14[%c0_72, %c0_73], %114 {strides = array<i32>} : memref<8x32xbf16, #tpu.memory_space<vmem>>, vector<8x32xbf16>,
    } else {
    }
    %c0 = arith.constant 0 : index
    %c0_1 = arith.constant 0 : index
    %c0_2 = arith.constant 0 : index
    %3 = vector.load %arg2[%c0, %c0_1, %c0_2] : memref<1x8x32xbf16, #tpu.memory_space<vmem>>, vector<1x8x32xbf16>
    %4 = vector.shape_cast %3 : vector<1x8x32xbf16> to vector<8x32xbf16>
    %c0_3 = arith.constant 0 : index
    %c0_4 = arith.constant 0 : index
    %5 = vector.load %arg4[%c0_3, %c0_4] : memref<32x32xbf16, #tpu.memory_space<vmem>>, vector<32x32xbf16>
    %cst = arith.constant dense<0.000000e+00> : vector<8x32xf32>
    %6 = tpu.matmul %4, %5, %cst {dimension_numbers = #tpu.dot_dimension_numbers<[1], [0], [0], [1], [0, 0, 1, 1], [], []>} : vector<8x32xbf16>, vector<32x32xbf16>, vector<8x32xf32> -> vector<8x32xf32>
    %c0_5 = arith.constant 0 : index
    %c0_6 = arith.constant 0 : index
    %7 = vector.load %arg8[%c0_5, %c0_6] : memref<1x32xf32, #tpu.memory_space<vmem>>, vector<1x32xf32>
    %8 = vector.broadcast %7 : vector<1x32xf32> to vector<8x32xf32>
    %9 = arith.addf %6, %8 : vector<8x32xf32>
    %10 = arith.truncf %9 : vector<8x32xf32> to vector<8x32xbf16>
    %cst_7 = arith.constant 0.000000e+00 : f32
    %11 = vector.broadcast %cst_7 : f32 to vector<8x32xf32>
    %12 = vector.extract_strided_slice %10 {offsets = [0, 0], sizes = [8, 8], strides = [1, 1]} : vector<8x32xbf16> to vector<8x8xbf16>
    %c0_8 = arith.constant 0 : index
    %c0_9 = arith.constant 0 : index
    %13 = vector.load %arg13[%c0_8, %c0_9] : memref<8x32xbf16, #tpu.memory_space<vmem>>, vector<8x8xbf16>
    %c0_10 = arith.constant 0 : index
    %c0_11 = arith.constant 0 : index
    %14 = vector.load %arg14[%c0_10, %c0_11] : memref<8x32xbf16, #tpu.memory_space<vmem>>, vector<8x8xbf16>
    %cst_12 = arith.constant dense<0.000000e+00> : vector<8x8xf32>
    %15 = tpu.matmul %12, %13, %cst_12 {dimension_numbers = #tpu.dot_dimension_numbers<[1], [1], [0], [0], [0, 0, 1, 0], [], []>} : vector<8x8xbf16>, vector<8x8xbf16>, vector<8x8xf32> -> vector<8x8xf32>
    %cst_13 = arith.constant dense<0xFF800000> : vector<8xf32>
    %16 = vector.multi_reduction <maximumf>, %15, %cst_13 [1] : vector<8x8xf32> to vector<8xf32>
    %17 = vector.shape_cast %16 : vector<8xf32> to vector<8x1xf32>
    %18 = vector.broadcast %17 : vector<8x1xf32> to vector<8x8xf32>
    %19 = arith.subf %15, %18 : vector<8x8xf32>
    %20 = math.exp %19 : vector<8x8xf32>
    %cst_14 = arith.constant dense<0.000000e+00> : vector<8xf32>
    %21 = vector.multi_reduction <add>, %20, %cst_14 [1] : vector<8x8xf32> to vector<8xf32>
    %22 = vector.shape_cast %21 : vector<8xf32> to vector<8x1xf32>
    %23 = arith.truncf %20 : vector<8x8xf32> to vector<8x8xbf16>
    %cst_15 = arith.constant dense<0.000000e+00> : vector<8x8xf32>
    %24 = tpu.matmul %23, %14, %cst_15 {dimension_numbers = #tpu.dot_dimension_numbers<[1], [0], [0], [1], [0, 0, 1, 1], [], []>} : vector<8x8xbf16>, vector<8x8xbf16>, vector<8x8xf32> -> vector<8x8xf32>
    %25 = tpu.reciprocal %22 {approx = true} : vector<8x1xf32> -> vector<8x1xf32>
    %26 = vector.broadcast %25 : vector<8x1xf32> to vector<8x8xf32>
    %27 = arith.mulf %24, %26 : vector<8x8xf32>
    %28 = arith.truncf %27 : vector<8x8xf32> to vector<8x8xbf16>
    %c0_16 = arith.constant 0 : index
    %c0_17 = arith.constant 0 : index
    %29 = vector.load %arg7[%c0_16, %c0_17] : memref<32x32xbf16, #tpu.memory_space<vmem>>, vector<8x32xbf16>
    %cst_18 = arith.constant dense<0.000000e+00> : vector<8x32xf32>
    %30 = tpu.matmul %28, %29, %cst_18 {dimension_numbers = #tpu.dot_dimension_numbers<[1], [0], [0], [1], [0, 0, 1, 1], [], []>} : vector<8x8xbf16>, vector<8x32xbf16>, vector<8x32xf32> -> vector<8x32xf32>
    %31 = arith.addf %11, %30 : vector<8x32xf32>
    %32 = vector.extract_strided_slice %10 {offsets = [0, 8], sizes = [8, 8], strides = [1, 1]} : vector<8x32xbf16> to vector<8x8xbf16>
    %c0_19 = arith.constant 0 : index
    %c8 = arith.constant 8 : index
    %33 = vector.load %arg13[%c0_19, %c8] : memref<8x32xbf16, #tpu.memory_space<vmem>>, vector<8x8xbf16>
    %c0_20 = arith.constant 0 : index
    %c8_21 = arith.constant 8 : index
    %34 = vector.load %arg14[%c0_20, %c8_21] : memref<8x32xbf16, #tpu.memory_space<vmem>>, vector<8x8xbf16>
    %cst_22 = arith.constant dense<0.000000e+00> : vector<8x8xf32>
    %35 = tpu.matmul %32, %33, %cst_22 {dimension_numbers = #tpu.dot_dimension_numbers<[1], [1], [0], [0], [0, 0, 1, 0], [], []>} : vector<8x8xbf16>, vector<8x8xbf16>, vector<8x8xf32> -> vector<8x8xf32>
    %cst_23 = arith.constant dense<0xFF800000> : vector<8xf32>
    %36 = vector.multi_reduction <maximumf>, %35, %cst_23 [1] : vector<8x8xf32> to vector<8xf32>
    %37 = vector.shape_cast %36 : vector<8xf32> to vector<8x1xf32>
    %38 = vector.broadcast %37 : vector<8x1xf32> to vector<8x8xf32>
    %39 = arith.subf %35, %38 : vector<8x8xf32>
    %40 = math.exp %39 : vector<8x8xf32>
    %cst_24 = arith.constant dense<0.000000e+00> : vector<8xf32>
    %41 = vector.multi_reduction <add>, %40, %cst_24 [1] : vector<8x8xf32> to vector<8xf32>
    %42 = vector.shape_cast %41 : vector<8xf32> to vector<8x1xf32>
    %43 = arith.truncf %40 : vector<8x8xf32> to vector<8x8xbf16>
    %cst_25 = arith.constant dense<0.000000e+00> : vector<8x8xf32>
    %44 = tpu.matmul %43, %34, %cst_25 {dimension_numbers = #tpu.dot_dimension_numbers<[1], [0], [0], [1], [0, 0, 1, 1], [], []>} : vector<8x8xbf16>, vector<8x8xbf16>, vector<8x8xf32> -> vector<8x8xf32>
    %45 = tpu.reciprocal %42 {approx = true} : vector<8x1xf32> -> vector<8x1xf32>
    %46 = vector.broadcast %45 : vector<8x1xf32> to vector<8x8xf32>
    %47 = arith.mulf %44, %46 : vector<8x8xf32>
    %48 = arith.truncf %47 : vector<8x8xf32> to vector<8x8xbf16>
    %c8_26 = arith.constant 8 : index
    %c0_27 = arith.constant 0 : index
    %49 = vector.load %arg7[%c8_26, %c0_27] : memref<32x32xbf16, #tpu.memory_space<vmem>>, vector<8x32xbf16>
    %cst_28 = arith.constant dense<0.000000e+00> : vector<8x32xf32>
    %50 = tpu.matmul %48, %49, %cst_28 {dimension_numbers = #tpu.dot_dimension_numbers<[1], [0], [0], [1], [0, 0, 1, 1], [], []>} : vector<8x8xbf16>, vector<8x32xbf16>, vector<8x32xf32> -> vector<8x32xf32>
    %51 = arith.addf %31, %50 : vector<8x32xf32>
    %52 = vector.extract_strided_slice %10 {offsets = [0, 16], sizes = [8, 8], strides = [1, 1]} : vector<8x32xbf16> to vector<8x8xbf16>
    %c0_29 = arith.constant 0 : index
    %c16 = arith.constant 16 : index
    %53 = vector.load %arg13[%c0_29, %c16] : memref<8x32xbf16, #tpu.memory_space<vmem>>, vector<8x8xbf16>
    %c0_30 = arith.constant 0 : index
    %c16_31 = arith.constant 16 : index
    %54 = vector.load %arg14[%c0_30, %c16_31] : memref<8x32xbf16, #tpu.memory_space<vmem>>, vector<8x8xbf16>
    %cst_32 = arith.constant dense<0.000000e+00> : vector<8x8xf32>
    %55 = tpu.matmul %52, %53, %cst_32 {dimension_numbers = #tpu.dot_dimension_numbers<[1], [1], [0], [0], [0, 0, 1, 0], [], []>} : vector<8x8xbf16>, vector<8x8xbf16>, vector<8x8xf32> -> vector<8x8xf32>
    %cst_33 = arith.constant dense<0xFF800000> : vector<8xf32>
    %56 = vector.multi_reduction <maximumf>, %55, %cst_33 [1] : vector<8x8xf32> to vector<8xf32>
    %57 = vector.shape_cast %56 : vector<8xf32> to vector<8x1xf32>
    %58 = vector.broadcast %57 : vector<8x1xf32> to vector<8x8xf32>
    %59 = arith.subf %55, %58 : vector<8x8xf32>
    %60 = math.exp %59 : vector<8x8xf32>
    %cst_34 = arith.constant dense<0.000000e+00> : vector<8xf32>
    %61 = vector.multi_reduction <add>, %60, %cst_34 [1] : vector<8x8xf32> to vector<8xf32>
    %62 = vector.shape_cast %61 : vector<8xf32> to vector<8x1xf32>
    %63 = arith.truncf %60 : vector<8x8xf32> to vector<8x8xbf16>
    %cst_35 = arith.constant dense<0.000000e+00> : vector<8x8xf32>
    %64 = tpu.matmul %63, %54, %cst_35 {dimension_numbers = #tpu.dot_dimension_numbers<[1], [0], [0], [1], [0, 0, 1, 1], [], []>} : vector<8x8xbf16>, vector<8x8xbf16>, vector<8x8xf32> -> vector<8x8xf32>
    %65 = tpu.reciprocal %62 {approx = true} : vector<8x1xf32> -> vector<8x1xf32>
    %66 = vector.broadcast %65 : vector<8x1xf32> to vector<8x8xf32>
    %67 = arith.mulf %64, %66 : vector<8x8xf32>
    %68 = arith.truncf %67 : vector<8x8xf32> to vector<8x8xbf16>
    %c16_36 = arith.constant 16 : index
    %c0_37 = arith.constant 0 : index
    %69 = vector.load %arg7[%c16_36, %c0_37] : memref<32x32xbf16, #tpu.memory_space<vmem>>, vector<8x32xbf16>
    %cst_38 = arith.constant dense<0.000000e+00> : vector<8x32xf32>
    %70 = tpu.matmul %68, %69, %cst_38 {dimension_numbers = #tpu.dot_dimension_numbers<[1], [0], [0], [1], [0, 0, 1, 1], [], []>} : vector<8x8xbf16>, vector<8x32xbf16>, vector<8x32xf32> -> vector<8x32xf32>
    %71 = arith.addf %51, %70 : vector<8x32xf32>
    %72 = vector.extract_strided_slice %10 {offsets = [0, 24], sizes = [8, 8], strides = [1, 1]} : vector<8x32xbf16> to vector<8x8xbf16>
    %c0_39 = arith.constant 0 : index
    %c24 = arith.constant 24 : index
    %73 = vector.load %arg13[%c0_39, %c24] : memref<8x32xbf16, #tpu.memory_space<vmem>>, vector<8x8xbf16>
    %c0_40 = arith.constant 0 : index
    %c24_41 = arith.constant 24 : index
    %74 = vector.load %arg14[%c0_40, %c24_41] : memref<8x32xbf16, #tpu.memory_space<vmem>>, vector<8x8xbf16>
    %cst_42 = arith.constant dense<0.000000e+00> : vector<8x8xf32>
    %75 = tpu.matmul %72, %73, %cst_42 {dimension_numbers = #tpu.dot_dimension_numbers<[1], [1], [0], [0], [0, 0, 1, 0], [], []>} : vector<8x8xbf16>, vector<8x8xbf16>, vector<8x8xf32> -> vector<8x8xf32>
    %cst_43 = arith.constant dense<0xFF800000> : vector<8xf32>
    %76 = vector.multi_reduction <maximumf>, %75, %cst_43 [1] : vector<8x8xf32> to vector<8xf32>
    %77 = vector.shape_cast %76 : vector<8xf32> to vector<8x1xf32>
    %78 = vector.broadcast %77 : vector<8x1xf32> to vector<8x8xf32>
    %79 = arith.subf %75, %78 : vector<8x8xf32>
    %80 = math.exp %79 : vector<8x8xf32>
    %cst_44 = arith.constant dense<0.000000e+00> : vector<8xf32>
    %81 = vector.multi_reduction <add>, %80, %cst_44 [1] : vector<8x8xf32> to vector<8xf32>
    %82 = vector.shape_cast %81 : vector<8xf32> to vector<8x1xf32>
    %83 = arith.truncf %80 : vector<8x8xf32> to vector<8x8xbf16>
    %cst_45 = arith.constant dense<0.000000e+00> : vector<8x8xf32>
    %84 = tpu.matmul %83, %74, %cst_45 {dimension_numbers = #tpu.dot_dimension_numbers<[1], [0], [0], [1], [0, 0, 1, 1], [], []>} : vector<8x8xbf16>, vector<8x8xbf16>, vector<8x8xf32> -> vector<8x8xf32>
    %85 = tpu.reciprocal %82 {approx = true} : vector<8x1xf32> -> vector<8x1xf32>
    %86 = vector.broadcast %85 : vector<8x1xf32> to vector<8x8xf32>
    %87 = arith.mulf %84, %86 : vector<8x8xf32>
    %88 = arith.truncf %87 : vector<8x8xf32> to vector<8x8xbf16>
    %c24_46 = arith.constant 24 : index
    %c0_47 = arith.constant 0 : index
    %89 = vector.load %arg7[%c24_46, %c0_47] : memref<32x32xbf16, #tpu.memory_space<vmem>>, vector<8x32xbf16>
    %cst_48 = arith.constant dense<0.000000e+00> : vector<8x32xf32>
    %90 = tpu.matmul %88, %89, %cst_48 {dimension_numbers = #tpu.dot_dimension_numbers<[1], [0], [0], [1], [0, 0, 1, 1], [], []>} : vector<8x8xbf16>, vector<8x32xbf16>, vector<8x32xf32> -> vector<8x32xf32>
    %91 = arith.addf %71, %90 : vector<8x32xf32>
    %c0_49 = arith.constant 0 : index
    %c0_50 = arith.constant 0 : index
    %92 = vector.load %arg11[%c0_49, %c0_50] : memref<1x32xf32, #tpu.memory_space<vmem>>, vector<1x32xf32>
    %93 = vector.broadcast %92 : vector<1x32xf32> to vector<8x32xf32>
    %94 = arith.addf %91, %93 : vector<8x32xf32>
    %c0_51 = arith.constant 0 : index
    %c0_52 = arith.constant 0 : index
    %c0_53 = arith.constant 0 : index
    %95 = vector.load %arg12[%c0_51, %c0_52, %c0_53] : memref<1x8x32xf32, #tpu.memory_space<vmem>>, vector<1x8x32xf32>
    %96 = vector.shape_cast %95 : vector<1x8x32xf32> to vector<8x32xf32>
    %97 = vector.shape_cast %94 : vector<8x32xf32> to vector<1x8x32xf32>
    tpu.vector_store %arg12[%c0_51, %c0_52, %c0_53], %97 {strides = array<i32>} : memref<1x8x32xf32, #tpu.memory_space<vmem>>, vector<1x8x32xf32>,
    return
  }
  func.func @transform_0(%arg0: i32, %arg1: i32) -> (i32, i32, i32) {
    %c0_i32 = arith.constant 0 : i32
    %c0_i32_0 = arith.constant 0 : i32
    return %arg0, %arg1, %c0_i32 : i32, i32, i32
  }
  func.func @transform_1(%arg0: i32, %arg1: i32) -> (i32, i32, i32) {
    %c0_i32 = arith.constant 0 : i32
    %c0_i32_0 = arith.constant 0 : i32
    %c0_i32_1 = arith.constant 0 : i32
    return %arg0, %c0_i32, %c0_i32_0 : i32, i32, i32
  }
  func.func @transform_2(%arg0: i32, %arg1: i32) -> (i32, i32) {
    %c0_i32 = arith.constant 0 : i32
    %c0_i32_0 = arith.constant 0 : i32
    %c0_i32_1 = arith.constant 0 : i32
    return %c0_i32, %c0_i32_0 : i32, i32
  }
  func.func @transform_3(%arg0: i32, %arg1: i32) -> (i32, i32) {
    %c0_i32 = arith.constant 0 : i32
    %c0_i32_0 = arith.constant 0 : i32
    %c0_i32_1 = arith.constant 0 : i32
    return %c0_i32, %c0_i32_0 : i32, i32
  }
  func.func @transform_4(%arg0: i32, %arg1: i32) -> (i32, i32) {
    %c0_i32 = arith.constant 0 : i32
    %c0_i32_0 = arith.constant 0 : i32
    %c0_i32_1 = arith.constant 0 : i32
    return %c0_i32, %c0_i32_0 : i32, i32
  }
  func.func @transform_5(%arg0: i32, %arg1: i32) -> (i32, i32) {
    %c0_i32 = arith.constant 0 : i32
    %c0_i32_0 = arith.constant 0 : i32
    %c0_i32_1 = arith.constant 0 : i32
    return %c0_i32, %c0_i32_0 : i32, i32
  }
  func.func @transform_6(%arg0: i32, %arg1: i32) -> (i32, i32) {
    %c0_i32 = arith.constant 0 : i32
    %c0_i32_0 = arith.constant 0 : i32
    %c0_i32_1 = arith.constant 0 : i32
    return %c0_i32, %c0_i32_0 : i32, i32
  }
  func.func @transform_7(%arg0: i32, %arg1: i32) -> (i32, i32) {
    %c0_i32 = arith.constant 0 : i32
    %c0_i32_0 = arith.constant 0 : i32
    %c0_i32_1 = arith.constant 0 : i32
    return %c0_i32, %c0_i32_0 : i32, i32
  }
  func.func @transform_8(%arg0: i32, %arg1: i32) -> (i32, i32) {
    %c0_i32 = arith.constant 0 : i32
    %c0_i32_0 = arith.constant 0 : i32
    %c0_i32_1 = arith.constant 0 : i32
    return %c0_i32, %c0_i32_0 : i32, i32
  }
  func.func @transform_9(%arg0: i32, %arg1: i32) -> (i32, i32) {
    %c0_i32 = arith.constant 0 : i32
    %c0_i32_0 = arith.constant 0 : i32
    %c0_i32_1 = arith.constant 0 : i32
    return %c0_i32, %c0_i32_0 : i32, i32
  }
  func.func @transform_10(%arg0: i32, %arg1: i32) -> (i32, i32, i32) {
    %c0_i32 = arith.constant 0 : i32
    %c0_i32_0 = arith.constant 0 : i32
    return %arg0, %arg1, %c0_i32 : i32, i32, i32
  }
}

</mosaic_0001>

<llo_original>
// kernel: tpu_custom_call.1
$region0: #{tpu_custom_call.1}
  #allocation0 [shape = 'u32[]', space=smem, size = 0x4, offset = 0x4, fixed_abs, tag = 'smem constant byte address 0x4 - core index']
  #allocation1 [shape = 'u32[144,128]{1,0:T(1,128)}', space=vmem, size = 0x12000, scoped, tag = 'internal scratch']
  #allocation2 [shape = 'bf16[8,32]{1,0:T(8,128)(2,1)}', space=vmem, size = 0x800, scoped, tag = 'scratch operand']
  #allocation3 [shape = 'bf16[8,32]{1,0:T(8,128)(2,1)}', space=vmem, size = 0x800, scoped, tag = 'scratch operand']
  %s0 = inlined_call_operand.hbm [shape: bf16[2,8,32], index: 0, kind: input, shape index: {}]
  %s1 = inlined_call_operand.hbm [shape: bf16[2,8,32], index: 1, kind: input, shape index: {}]
  %s2 = inlined_call_operand.hbm [shape: bf16[32,32], index: 2, kind: input, shape index: {}]
  %s3 = inlined_call_operand.hbm [shape: bf16[32,32], index: 3, kind: input, shape index: {}]
  %s4 = inlined_call_operand.hbm [shape: bf16[32,32], index: 4, kind: input, shape index: {}]
  %s5 = inlined_call_operand.hbm [shape: bf16[32,32], index: 5, kind: input, shape index: {}]
  %s6 = inlined_call_operand.vmem [shape: f32[1,32], index: 6, kind: input, shape index: {}]
  %s7 = inlined_call_operand.vmem [shape: f32[1,32], index: 7, kind: input, shape index: {}]
  %s8 = inlined_call_operand.vmem [shape: f32[1,32], index: 8, kind: input, shape index: {}]
  %s9 = inlined_call_operand.vmem [shape: f32[1,32], index: 9, kind: input, shape index: {}]
  %s10 = inlined_call_operand.hbm [shape: f32[2,8,32], index: 10, kind: output, shape index: {}]
  %s11 = sld [smem:[#allocation0]]
  $region101: #{tpu_custom_call.1} parent=0
    _
  %s13 = ssub.s32 1, %s11
  %s14 = scalar_select 0, %s13, %s11
  $region1: #{tpu_custom_call.1} parent=0
    #allocation4 [shape = 'u8[4096]{0}', space=vmem, size = 0x1000, scoped, tag = 'input window, operand 0']
    #allocation5 [shape = 's32[2]{0}', space=sflag, size = 0x8, scoped, tag = 'scoped memory for tpu_custom_call.1']
    #allocation6 [shape = 's32[2]{0}', space=sflag, size = 0x8, scoped, tag = 'scoped memory for tpu_custom_call.1']
    #allocation7 [shape = 'u8[4096]{0}', space=vmem, size = 0x1000, scoped, tag = 'input window, operand 1']
    #allocation8 [shape = 's32[2]{0}', space=sflag, size = 0x8, scoped, tag = 'scoped memory for tpu_custom_call.1']
    #allocation9 [shape = 'u8[8192]{0}', space=vmem, size = 0x2000, scoped, tag = 'input window, operand 2, single buffered']
    #allocation10 [shape = 'u8[8192]{0}', space=vmem, size = 0x2000, scoped, tag = 'input window, operand 3, single buffered']
    #allocation11 [shape = 's32[1]{0}', space=sflag, size = 0x4, scoped, tag = 'scoped memory for tpu_custom_call.1']
    #allocation12 [shape = 'u8[8192]{0}', space=vmem, size = 0x2000, scoped, tag = 'input window, operand 4, single buffered']
    #allocation13 [shape = 'u8[8192]{0}', space=vmem, size = 0x2000, scoped, tag = 'input window, operand 5, single buffered']
    #allocation14 [shape = 's32[1]{0}', space=sflag, size = 0x4, scoped, tag = 'scoped memory for tpu_custom_call.1']
    #allocation15 [shape = 'u8[8192]{0}', space=vmem, size = 0x2000, scoped, tag = 'output window, operand 0']
    %15 = vsyncpa [#allocation5], 0
    %s16 = scalar_lea.sflag [#allocation5], 1
    %17 = vsyncpa %s16, 0
    %18 = vsyncpa [#allocation8], 0
    %s19 = scalar_lea.sflag [#allocation8], 1
    %20 = vsyncpa %s19, 0
    %21 = vsyncpa [#allocation11], 0
    %22 = vsyncpa [#allocation14], 0
    %23 = vsyncpa [#allocation6], 0
    %s24 = scalar_lea.sflag [#allocation6], 1
    %25 = vsyncpa %s24, 0
    loop: start=0, step=1, limit=4
    $region2: #{tpu_custom_call.1} parent=1 // loop_pre_header
      _
    $region3: #{tpu_custom_call.1} parent=1 // loop_header
      %s27 = sphi 0, %s31
      %p28 = scmp.ge.s32.totalorder %s27, 4
      %s34 = sphi 0, %s46
      %s35 = sphi 0, %s42
      %s36 = sphi 0, %s34
      %s37 = sphi 0, %s35
      %s38 = sphi 0, %s36
      %s39 = sphi 0, %s37
      %s51 = sphi 0, %s53
      %s54 = sphi 0, %s51
      %s55 = sphi 0, %s54
      %s71 = sphi 0, %s55
      %s77 = sphi 0, %s79
      %s80 = sphi 0, %s77
      %s81 = sphi 0, %s80
      %s97 = sphi 0, %s81
      %s101 = sphi 0, %s101
      %s103 = sphi 0, %s101
      %s104 = sphi 0, %s103
      %s118 = sphi 0, %s104
      %s122 = sphi 0, %s122
      %s124 = sphi 0, %s122
      %s125 = sphi 0, %s124
      %s139 = sphi 0, %s125
      %s143 = sphi 0, %s143
      %s145 = sphi 0, %s143
      %s146 = sphi 0, %s145
      %s160 = sphi 0, %s146
      %s164 = sphi 0, %s164
      %s166 = sphi 0, %s164
      %s167 = sphi 0, %s166
      %s181 = sphi 0, %s167
      %s185 = sphi 0, %s185
      %s187 = sphi 0, %s185
      %s188 = sphi 0, %s187
      %s202 = sphi 0, %s188
      %s206 = sphi 0, %s206
      %s208 = sphi 0, %s206
      %s209 = sphi 0, %s208
      %s223 = sphi 0, %s209
      %s227 = sphi 0, %s227
      %s229 = sphi 0, %s227
      %s230 = sphi 0, %s229
      %s244 = sphi 0, %s230
      %s248 = sphi 0, %s248
      %s250 = sphi 0, %s248
      %s251 = sphi 0, %s250
      %s265 = sphi 0, %s251
      %s273 = sphi 0, %s275
      %s276 = sphi 0, %s273
      %s277 = sphi 0, %s276
      %s293 = sphi 0, %s277
    $region4: #{tpu_custom_call.1} parent=1 // loop_header_branch
      %30 = sbr.rel (%p28) target = $region8
    $region5: #{tpu_custom_call.1} parent=1 // loop_body
      %s32 = ssub.s32 %s27, 1
      %s33 = ssub.s32 %s27, 2
      %s40 = sadd.s32 1, %s35
      %p41 = scmp.ge.s32.totalorder %s40, 1
      %s42 = scalar_select %p41, 0, %s40
      %s43 = sadd.s32 1, %s34
      %s44 = scalar_select %p41, %s43, %s34
      %p45 = scmp.ge.s32.totalorder %s44, 2
      %s46 = scalar_select %p45, 0, %s44
      %s47 = ssub.s32 %s34, %s46
      %s48 = ssub.s32 %s35, %s42
      %s49 = sor.u32 %s47, %s48
      %p50 = scmp.eq.s32.totalorder %s49, 0
      %s52 = sadd.s32 %s51, 1
      %s53 = scalar_select %p50, %s51, %s52
      %p56 = pneg %p50
      %p57 = scmp.eq.s32.totalorder %s27, 1
      %p58 = por %p56, %p57
      %p59 = scmp.ne.s32.totalorder %s51, %s54
      %p60 = scmp.eq.s32.totalorder %s27, 0
      %p61 = por %p59, %p60
      %p62 = scmp.ne.s32.totalorder %s51, %s54
      %p63 = scmp.eq.s32.totalorder %s32, 1
      %p64 = por %p62, %p63
      %p65 = scmp.ne.s32.totalorder %s54, %s55
      %p66 = scmp.eq.s32.totalorder %s32, 0
      %p67 = por %p65, %p66
      %p68 = scmp.ne.s32.totalorder %s54, %s55
      %p69 = scmp.eq.s32.totalorder %s33, 1
      %p70 = por %p68, %p69
      %p72 = scmp.ne.s32.totalorder %s55, %s71
      %p73 = scmp.eq.s32.totalorder %s33, 0
      %p74 = por %p72, %p73
      %s75 = ssub.s32 %s34, %s46
      %p76 = scmp.eq.s32.totalorder %s75, 0
      %s78 = sadd.s32 %s77, 1
      %s79 = scalar_select %p76, %s77, %s78
      %p82 = pneg %p76
      %p83 = scmp.eq.s32.totalorder %s27, 1
      %p84 = por %p82, %p83
      %p85 = scmp.ne.s32.totalorder %s77, %s80
      %p86 = scmp.eq.s32.totalorder %s27, 0
      %p87 = por %p85, %p86
      %p88 = scmp.ne.s32.totalorder %s77, %s80
      %p89 = scmp.eq.s32.totalorder %s32, 1
      %p90 = por %p88, %p89
      %p91 = scmp.ne.s32.totalorder %s80, %s81
      %p92 = scmp.eq.s32.totalorder %s32, 0
      %p93 = por %p91, %p92
      %p94 = scmp.ne.s32.totalorder %s80, %s81
      %p95 = scmp.eq.s32.totalorder %s33, 1
      %p96 = por %p94, %p95
      %p98 = scmp.ne.s32.totalorder %s81, %s97
      %p99 = scmp.eq.s32.totalorder %s33, 0
      %p100 = por %p98, %p99
      %s102 = sadd.s32 %s101, 1
      %p105 = scmp.eq.s32.totalorder %s27, 1
      %p106 = scmp.ne.s32.totalorder %s101, %s103
      %p107 = scmp.eq.s32.totalorder %s27, 0
      %p108 = por %p106, %p107
      %p109 = scmp.ne.s32.totalorder %s101, %s103
      %p110 = scmp.eq.s32.totalorder %s32, 1
      %p111 = por %p109, %p110
      %p112 = scmp.ne.s32.totalorder %s103, %s104
      %p113 = scmp.eq.s32.totalorder %s32, 0
      %p114 = por %p112, %p113
      %p115 = scmp.ne.s32.totalorder %s103, %s104
      %p116 = scmp.eq.s32.totalorder %s33, 1
      %p117 = por %p115, %p116
      %p119 = scmp.ne.s32.totalorder %s104, %s118
      %p120 = scmp.eq.s32.totalorder %s33, 0
      %p121 = por %p119, %p120
      %s123 = sadd.s32 %s122, 1
      %p126 = scmp.eq.s32.totalorder %s27, 1
      %p127 = scmp.ne.s32.totalorder %s122, %s124
      %p128 = scmp.eq.s32.totalorder %s27, 0
      %p129 = por %p127, %p128
      %p130 = scmp.ne.s32.totalorder %s122, %s124
      %p131 = scmp.eq.s32.totalorder %s32, 1
      %p132 = por %p130, %p131
      %p133 = scmp.ne.s32.totalorder %s124, %s125
      %p134 = scmp.eq.s32.totalorder %s32, 0
      %p135 = por %p133, %p134
      %p136 = scmp.ne.s32.totalorder %s124, %s125
      %p137 = scmp.eq.s32.totalorder %s33, 1
      %p138 = por %p136, %p137
      %p140 = scmp.ne.s32.totalorder %s125, %s139
      %p141 = scmp.eq.s32.totalorder %s33, 0
      %p142 = por %p140, %p141
      %s144 = sadd.s32 %s143, 1
      %p147 = scmp.eq.s32.totalorder %s27, 1
      %p148 = scmp.ne.s32.totalorder %s143, %s145
      %p149 = scmp.eq.s32.totalorder %s27, 0
      %p150 = por %p148, %p149
      %p151 = scmp.ne.s32.totalorder %s143, %s145
      %p152 = scmp.eq.s32.totalorder %s32, 1
      %p153 = por %p151, %p152
      %p154 = scmp.ne.s32.totalorder %s145, %s146
      %p155 = scmp.eq.s32.totalorder %s32, 0
      %p156 = por %p154, %p155
      %p157 = scmp.ne.s32.totalorder %s145, %s146
      %p158 = scmp.eq.s32.totalorder %s33, 1
      %p159 = por %p157, %p158
      %p161 = scmp.ne.s32.totalorder %s146, %s160
      %p162 = scmp.eq.s32.totalorder %s33, 0
      %p163 = por %p161, %p162
      %s165 = sadd.s32 %s164, 1
      %p168 = scmp.eq.s32.totalorder %s27, 1
      %p169 = scmp.ne.s32.totalorder %s164, %s166
      %p170 = scmp.eq.s32.totalorder %s27, 0
      %p171 = por %p169, %p170
      %p172 = scmp.ne.s32.totalorder %s164, %s166
      %p173 = scmp.eq.s32.totalorder %s32, 1
      %p174 = por %p172, %p173
      %p175 = scmp.ne.s32.totalorder %s166, %s167
      %p176 = scmp.eq.s32.totalorder %s32, 0
      %p177 = por %p175, %p176
      %p178 = scmp.ne.s32.totalorder %s166, %s167
      %p179 = scmp.eq.s32.totalorder %s33, 1
      %p180 = por %p178, %p179
      %p182 = scmp.ne.s32.totalorder %s167, %s181
      %p183 = scmp.eq.s32.totalorder %s33, 0
      %p184 = por %p182, %p183
      %s186 = sadd.s32 %s185, 1
      %p189 = scmp.eq.s32.totalorder %s27, 1
      %p190 = scmp.ne.s32.totalorder %s185, %s187
      %p191 = scmp.eq.s32.totalorder %s27, 0
      %p192 = por %p190, %p191
      %p193 = scmp.ne.s32.totalorder %s185, %s187
      %p194 = scmp.eq.s32.totalorder %s32, 1
      %p195 = por %p193, %p194
      %p196 = scmp.ne.s32.totalorder %s187, %s188
      %p197 = scmp.eq.s32.totalorder %s32, 0
      %p198 = por %p196, %p197
      %p199 = scmp.ne.s32.totalorder %s187, %s188
      %p200 = scmp.eq.s32.totalorder %s33, 1
      %p201 = por %p199, %p200
      %p203 = scmp.ne.s32.totalorder %s188, %s202
      %p204 = scmp.eq.s32.totalorder %s33, 0
      %p205 = por %p203, %p204
      %s207 = sadd.s32 %s206, 1
      %p210 = scmp.eq.s32.totalorder %s27, 1
      %p211 = scmp.ne.s32.totalorder %s206, %s208
      %p212 = scmp.eq.s32.totalorder %s27, 0
      %p213 = por %p211, %p212
      %p214 = scmp.ne.s32.totalorder %s206, %s208
      %p215 = scmp.eq.s32.totalorder %s32, 1
      %p216 = por %p214, %p215
      %p217 = scmp.ne.s32.totalorder %s208, %s209
      %p218 = scmp.eq.s32.totalorder %s32, 0
      %p219 = por %p217, %p218
      %p220 = scmp.ne.s32.totalorder %s208, %s209
      %p221 = scmp.eq.s32.totalorder %s33, 1
      %p222 = por %p220, %p221
      %p224 = scmp.ne.s32.totalorder %s209, %s223
      %p225 = scmp.eq.s32.totalorder %s33, 0
      %p226 = por %p224, %p225
      %s228 = sadd.s32 %s227, 1
      %p231 = scmp.eq.s32.totalorder %s27, 1
      %p232 = scmp.ne.s32.totalorder %s227, %s229
      %p233 = scmp.eq.s32.totalorder %s27, 0
      %p234 = por %p232, %p233
      %p235 = scmp.ne.s32.totalorder %s227, %s229
      %p236 = scmp.eq.s32.totalorder %s32, 1
      %p237 = por %p235, %p236
      %p238 = scmp.ne.s32.totalorder %s229, %s230
      %p239 = scmp.eq.s32.totalorder %s32, 0
      %p240 = por %p238, %p239
      %p241 = scmp.ne.s32.totalorder %s229, %s230
      %p242 = scmp.eq.s32.totalorder %s33, 1
      %p243 = por %p241, %p242
      %p245 = scmp.ne.s32.totalorder %s230, %s244
      %p246 = scmp.eq.s32.totalorder %s33, 0
      %p247 = por %p245, %p246
      %s249 = sadd.s32 %s248, 1
      %p252 = scmp.eq.s32.totalorder %s27, 1
      %p253 = scmp.ne.s32.totalorder %s248, %s250
      %p254 = scmp.eq.s32.totalorder %s27, 0
      %p255 = por %p253, %p254
      %p256 = scmp.ne.s32.totalorder %s248, %s250
      %p257 = scmp.eq.s32.totalorder %s32, 1
      %p258 = por %p256, %p257
      %p259 = scmp.ne.s32.totalorder %s250, %s251
      %p260 = scmp.eq.s32.totalorder %s32, 0
      %p261 = por %p259, %p260
      %p262 = scmp.ne.s32.totalorder %s250, %s251
      %p263 = scmp.eq.s32.totalorder %s33, 1
      %p264 = por %p262, %p263
      %p266 = scmp.ne.s32.totalorder %s251, %s265
      %p267 = scmp.eq.s32.totalorder %s33, 0
      %p268 = por %p266, %p267
      %s269 = ssub.s32 %s34, %s46
      %s270 = ssub.s32 %s35, %s42
      %s271 = sor.u32 %s269, %s270
      %p272 = scmp.eq.s32.totalorder %s271, 0
      %s274 = sadd.s32 %s273, 1
      %s275 = scalar_select %p272, %s273, %s274
      %p278 = pneg %p272
      %p279 = scmp.eq.s32.totalorder %s27, 1
      %p280 = por %p278, %p279
      %p281 = scmp.ne.s32.totalorder %s273, %s276
      %p282 = scmp.eq.s32.totalorder %s27, 0
      %p283 = por %p281, %p282
      %p284 = scmp.ne.s32.totalorder %s273, %s276
      %p285 = scmp.eq.s32.totalorder %s32, 1
      %p286 = por %p284, %p285
      %p287 = scmp.ne.s32.totalorder %s276, %s277
      %p288 = scmp.eq.s32.totalorder %s32, 0
      %p289 = por %p287, %p288
      %p290 = scmp.ne.s32.totalorder %s276, %s277
      %p291 = scmp.eq.s32.totalorder %s33, 1
      %p292 = por %p290, %p291
      %p294 = scmp.ne.s32.totalorder %s277, %s293
      %p295 = scmp.eq.s32.totalorder %s33, 0
      %p296 = por %p294, %p295
      %p297 = scmp.le.s32.totalorder 1, %s27
      %p298 = scmp.lt.s32.totalorder %s27, 3
      %p299 = pnand %p297, %p298
      %p300 = pneg %p299
      // Predicated region
      $region9: #{tpu_custom_call.1} parent=5 // pred_check
        _
      $region10: #{tpu_custom_call.1} parent=5 // pred_check_branch
        %302 = sbr.rel (%p299) target = $region12
      $region11: #{tpu_custom_call.1} parent=5 // pred_region
        %s303 = ssub.s32 %s27, 1
        // Predicated region
        $region13: #{tpu_custom_call.1} parent=11 // pred_check
          %p304 = pneg %p114
        $region14: #{tpu_custom_call.1} parent=11 // pred_check_branch
          %306 = sbr.rel (%p304) target = $region16
        $region15: #{tpu_custom_call.1} parent=11 // pred_region
          %s308 = ssub.s32 256, 256
          %309 = vsyncadd [#allocation8], %s308
          %s310 = sshll.u32 [#allocation9], 4
          %s311 = int_to_ptr.vmem [resolvable:$true] %s310
          %316 = dma.hbm_to_vmem [thread:$0]  %s2, 256, %s311, [#allocation8], 64, 64, 4
        $region16: #{tpu_custom_call.1} parent=11 // pred_fallthru
          _
        // Predicated region
        $region17: #{tpu_custom_call.1} parent=11 // pred_check
          %p317 = pneg %p135
        $region18: #{tpu_custom_call.1} parent=11 // pred_check_branch
          %319 = sbr.rel (%p317) target = $region20
        $region19: #{tpu_custom_call.1} parent=11 // pred_region
          %s321 = ssub.s32 256, 256
          %322 = vsyncadd [#allocation11], %s321
          %s323 = sshll.u32 [#allocation10], 4
          %s324 = int_to_ptr.vmem [resolvable:$true] %s323
          %329 = dma.hbm_to_vmem [thread:$0]  %s3, 256, %s324, [#allocation11], 64, 64, 4
        $region20: #{tpu_custom_call.1} parent=11 // pred_fallthru
          _
        // Predicated region
        $region21: #{tpu_custom_call.1} parent=11 // pred_check
          %p330 = pneg %p156
        $region22: #{tpu_custom_call.1} parent=11 // pred_check_branch
          %332 = sbr.rel (%p330) target = $region24
        $region23: #{tpu_custom_call.1} parent=11 // pred_region
          %s334 = ssub.s32 256, 256
          %335 = vsyncadd [#allocation11], %s334
          %s336 = sshll.u32 [#allocation12], 4
          %s337 = int_to_ptr.vmem [resolvable:$true] %s336
          %342 = dma.hbm_to_vmem [thread:$0]  %s4, 256, %s337, [#allocation11], 64, 64, 4
        $region24: #{tpu_custom_call.1} parent=11 // pred_fallthru
          _
        // Predicated region
        $region25: #{tpu_custom_call.1} parent=11 // pred_check
          %p343 = pneg %p177
        $region26: #{tpu_custom_call.1} parent=11 // pred_check_branch
          %345 = sbr.rel (%p343) target = $region28
        $region27: #{tpu_custom_call.1} parent=11 // pred_region
          %s347 = ssub.s32 256, 256
          %348 = vsyncadd [#allocation14], %s347
          %s349 = sshll.u32 [#allocation13], 4
          %s350 = int_to_ptr.vmem [resolvable:$true] %s349
          %355 = dma.hbm_to_vmem [thread:$0]  %s5, 256, %s350, [#allocation14], 64, 64, 4
        $region28: #{tpu_custom_call.1} parent=11 // pred_fallthru
          _
        // Predicated region
        $region29: #{tpu_custom_call.1} parent=11 // pred_check
          %p356 = pneg %p198
        $region30: #{tpu_custom_call.1} parent=11 // pred_check_branch
          %358 = sbr.rel (%p356) target = $region32
        $region31: #{tpu_custom_call.1} parent=11 // pred_region
          _
        $region32: #{tpu_custom_call.1} parent=11 // pred_fallthru
          _
        // Predicated region
        $region33: #{tpu_custom_call.1} parent=11 // pred_check
          %p359 = pneg %p219
        $region34: #{tpu_custom_call.1} parent=11 // pred_check_branch
          %361 = sbr.rel (%p359) target = $region36
        $region35: #{tpu_custom_call.1} parent=11 // pred_region
          _
        $region36: #{tpu_custom_call.1} parent=11 // pred_fallthru
          _
        // Predicated region
        $region37: #{tpu_custom_call.1} parent=11 // pred_check
          %p362 = pneg %p240
        $region38: #{tpu_custom_call.1} parent=11 // pred_check_branch
          %364 = sbr.rel (%p362) target = $region40
        $region39: #{tpu_custom_call.1} parent=11 // pred_region
          _
        $region40: #{tpu_custom_call.1} parent=11 // pred_fallthru
          _
        // Predicated region
        $region41: #{tpu_custom_call.1} parent=11 // pred_check
          %p365 = pneg %p261
        $region42: #{tpu_custom_call.1} parent=11 // pred_check_branch
          %367 = sbr.rel (%p365) target = $region44
        $region43: #{tpu_custom_call.1} parent=11 // pred_region
          _
        $region44: #{tpu_custom_call.1} parent=11 // pred_fallthru
          _
      $region12: #{tpu_custom_call.1} parent=5 // pred_fallthru
        _
      %p368 = scmp.lt.s32.totalorder %s27, 2
      // Predicated region
      $region45: #{tpu_custom_call.1} parent=5 // pred_check
        %p369 = pneg %p368
      $region46: #{tpu_custom_call.1} parent=5 // pred_check_branch
        %371 = sbr.rel (%p369) target = $region48
      $region47: #{tpu_custom_call.1} parent=5 // pred_region
        // Predicated region
        $region49: #{tpu_custom_call.1} parent=47 // pred_check
          %p372 = pneg %p61
        $region50: #{tpu_custom_call.1} parent=47 // pred_check_branch
          %374 = sbr.rel (%p372) target = $region52
        $region51: #{tpu_custom_call.1} parent=47 // pred_region
          %s375 = sand.u32 %s51, 1
          %s376 = scalar_lea.sflag [#allocation5], %s375
          %s377 = sand.u32 %s51, 1
          %s378 = smul.addr %s377, 4
          %s379 = scalar_lea.vmem [#allocation4], %s378
          %s381 = ssub.s32 64, 64
          %382 = vsyncadd %s376, %s381
          %s383 = sadd.s32 %s35, %s34
          %s384 = smul.addr %s383, 64
          %s385 = scalar_lea.hbm %s0, %s384
          %s387 = sshll.u32 %s379, 4
          %s388 = int_to_ptr.vmem [resolvable:$true] %s387
          %390 = dma.hbm_to_vmem [thread:$0]  %s385, 64, %s388, %s376
        $region52: #{tpu_custom_call.1} parent=47 // pred_fallthru
          _
        // Predicated region
        $region53: #{tpu_custom_call.1} parent=47 // pred_check
          %p391 = pneg %p87
        $region54: #{tpu_custom_call.1} parent=47 // pred_check_branch
          %393 = sbr.rel (%p391) target = $region56
        $region55: #{tpu_custom_call.1} parent=47 // pred_region
          %s394 = sand.u32 %s27, 1
          %s395 = scalar_lea.sflag [#allocation8], %s394
          %s396 = sand.u32 %s77, 1
          %s397 = smul.addr %s396, 4
          %s398 = scalar_lea.vmem [#allocation7], %s397
          %s400 = ssub.s32 64, 64
          %401 = vsyncadd %s395, %s400
          %s402 = smul.addr %s34, 64
          %s403 = scalar_lea.hbm %s1, %s402
          %s405 = sshll.u32 %s398, 4
          %s406 = int_to_ptr.vmem [resolvable:$true] %s405
          %408 = dma.hbm_to_vmem [thread:$0]  %s403, 64, %s406, %s395
        $region56: #{tpu_custom_call.1} parent=47 // pred_fallthru
          _
      $region48: #{tpu_custom_call.1} parent=5 // pred_fallthru
        _
      %p409 = scmp.le.s32.totalorder 1, %s27
      %p410 = scmp.lt.s32.totalorder %s27, 3
      %p411 = pnand %p409, %p410
      %p412 = pneg %p411
      // Predicated region
      $region57: #{tpu_custom_call.1} parent=5 // pred_check
        _
      $region58: #{tpu_custom_call.1} parent=5 // pred_check_branch
        %414 = sbr.rel (%p411) target = $region60
      $region59: #{tpu_custom_call.1} parent=5 // pred_region
        %s415 = ssub.s32 %s27, 1
        %s416 = sand.u32 %s54, 1
        %s417 = scalar_lea.sflag [#allocation5], %s416
        %s418 = sand.u32 %s54, 1
        %s419 = smul.addr %s418, 4
        %s420 = scalar_lea.vmem [#allocation4], %s419
        // Predicated region
        $region61: #{tpu_custom_call.1} parent=59 // pred_check
          %p421 = pneg %p67
        $region62: #{tpu_custom_call.1} parent=59 // pred_check_branch
          %423 = sbr.rel (%p421) target = $region64
        $region63: #{tpu_custom_call.1} parent=59 // pred_region
          %424 = dma.done %s417, 64
        $region64: #{tpu_custom_call.1} parent=59 // pred_fallthru
          _
        %s425 = sand.u32 %s32, 1
        %s426 = scalar_lea.sflag [#allocation8], %s425
        %s427 = sand.u32 %s80, 1
        %s428 = smul.addr %s427, 4
        %s429 = scalar_lea.vmem [#allocation7], %s428
        // Predicated region
        $region65: #{tpu_custom_call.1} parent=59 // pred_check
          %p430 = pneg %p93
        $region66: #{tpu_custom_call.1} parent=59 // pred_check_branch
          %432 = sbr.rel (%p430) target = $region68
        $region67: #{tpu_custom_call.1} parent=59 // pred_region
          %433 = dma.done %s426, 64
        $region68: #{tpu_custom_call.1} parent=59 // pred_fallthru
          _
        // Predicated region
        $region69: #{tpu_custom_call.1} parent=59 // pred_check
          %p434 = pneg %p114
        $region70: #{tpu_custom_call.1} parent=59 // pred_check_branch
          %436 = sbr.rel (%p434) target = $region72
        $region71: #{tpu_custom_call.1} parent=59 // pred_region
          %437 = dma.done [#allocation8], 256
        $region72: #{tpu_custom_call.1} parent=59 // pred_fallthru
          _
        // Predicated region
        $region73: #{tpu_custom_call.1} parent=59 // pred_check
          %p438 = pneg %p135
        $region74: #{tpu_custom_call.1} parent=59 // pred_check_branch
          %440 = sbr.rel (%p438) target = $region76
        $region75: #{tpu_custom_call.1} parent=59 // pred_region
          %441 = dma.done [#allocation11], 256
        $region76: #{tpu_custom_call.1} parent=59 // pred_fallthru
          _
        // Predicated region
        $region77: #{tpu_custom_call.1} parent=59 // pred_check
          %p442 = pneg %p156
        $region78: #{tpu_custom_call.1} parent=59 // pred_check_branch
          %444 = sbr.rel (%p442) target = $region80
        $region79: #{tpu_custom_call.1} parent=59 // pred_region
          %445 = dma.done [#allocation11], 256
        $region80: #{tpu_custom_call.1} parent=59 // pred_fallthru
          _
        // Predicated region
        $region81: #{tpu_custom_call.1} parent=59 // pred_check
          %p446 = pneg %p177
        $region82: #{tpu_custom_call.1} parent=59 // pred_check_branch
          %448 = sbr.rel (%p446) target = $region84
        $region83: #{tpu_custom_call.1} parent=59 // pred_region
          %449 = dma.done [#allocation14], 256
        $region84: #{tpu_custom_call.1} parent=59 // pred_fallthru
          _
        %s450 = sand.u32 %s54, 1
        %s451 = scalar_lea.sflag [#allocation5], %s450
        %s452 = sand.u32 %s54, 1
        %s453 = smul.addr %s452, 4
        %s454 = scalar_lea.vmem [#allocation4], %s453
        %p455 = pneg %p67
        %p456 = pneg %p64
        %s457 = sand.u32 %s32, 1
        %s458 = scalar_lea.sflag [#allocation8], %s457
        %s459 = sand.u32 %s80, 1
        %s460 = smul.addr %s459, 4
        %s461 = scalar_lea.vmem [#allocation7], %s460
        %p462 = pneg %p93
        %p463 = pneg %p90
        %p464 = pneg %p114
        %p465 = pneg %p111
        %p466 = pneg %p135
        %p467 = pneg %p132
        %p468 = pneg %p156
        %p469 = pneg %p153
        %p470 = pneg %p177
        %p471 = pneg %p174
        %p472 = pneg %p198
        %p473 = pneg %p195
        %p474 = pneg %p219
        %p475 = pneg %p216
        %p476 = pneg %p240
        %p477 = pneg %p237
        %p478 = pneg %p261
        %p479 = pneg %p258
        %p480 = pneg %p289
        %p481 = pneg %p286
        %s482 = sand.u32 %s276, 1
        %s483 = scalar_lea.sflag [#allocation6], %s482
        %s484 = sand.u32 %s276, 1
        %s485 = smul.addr %s484, 8
        %s486 = scalar_lea.vmem [#allocation15], %s485
        %p488 = scmp.eq.s32.totalorder %s37, 0
        // Predicated region
        $region85: #{tpu_custom_call.1} parent=59 // pred_check
          %p489 = pneg %p488
        $region86: #{tpu_custom_call.1} parent=59 // pred_check_branch
          %491 = sbr.rel (%p489) target = $region88
        $region87: #{tpu_custom_call.1} parent=59 // pred_region
          %v492 = vld [vmem:[%s429] sm:$0xf]
          %v493 = vld [vmem:[#allocation10] sm:$0xf]
          %v494 = vld [vmem:[#allocation10 + $0x4] sm:$0xf]
          %v495 = vld [vmem:[#allocation10 + $0x8] sm:$0xf]
          %v496 = vld [vmem:[#allocation10 + $0xc] sm:$0xf]
          %v497 = vld [vmem:[%s7] sm:$0x1]
          %v499 = vlaneseq
          %v500 = vshrl.u32 %v499, 7
          %v501 = vsub.s32 0, %v500
          %v502 = vrot.slane %v497, %v501
          %v508 = vunpack.c.l.b16 %v493
          %v509 = vunpack.c.l.b16 %v494
          %v510 = vunpack.c.l.b16 %v495
          %v511 = vunpack.c.l.b16 %v496
          %v512 = vpack.c.b16 %v509, %v508
          %v513 = vpack.c.b16 %v511, %v510
          %vm516 = vcmask 261120
          %v518 = vsel %vm516, %v492, 0
          %520 = vmatprep.subr.bf16.mxu0 0
          %521 = vmatpush1.bf16.msra.mxu0 0
          %522 = vmatprep.subr.bf16.mxu0 0
          %523 = vmatpush1.bf16.msra.mxu0 0
          %524 = vmatprep.subr.bf16.mxu0 0
          %525 = vmatpush1.bf16.msra.mxu0 0
          %526 = vmatprep.subr.bf16.mxu0 0
          %527 = vmatpush1.bf16.msra.mxu0 0
          %528 = vmatprep.subr.bf16.mxu0 0
          %529 = vmatpush1.bf16.msra.mxu0 0
          %530 = vmatprep.subr.bf16.mxu0 0
          %531 = vmatpush1.bf16.msra.mxu0 0
          %532 = vmatprep.subr.bf16.mxu0 0
          %533 = vmatpush1.bf16.msra.mxu0 %v513
          %534 = vmatprep.subr.bf16.mxu0 0
          %535 = vmatpush1.bf16.msra.mxu0 %v512
          %536 = vmatprep.subr.bf16.mxu0 0
          %537 = vmatpush2.bf16.msra.mxu0 0
          %538 = vmatprep.subr.bf16.mxu0 0
          %539 = vmatpush2.bf16.msra.mxu0 0
          %540 = vmatprep.subr.bf16.mxu0 0
          %541 = vmatpush2.bf16.msra.mxu0 0
          %542 = vmatprep.subr.bf16.mxu0 0
          %543 = vmatpush2.bf16.msra.mxu0 0
          %544 = vmatprep.subr.bf16.mxu0 0
          %545 = vmatpush2.bf16.msra.mxu0 0
          %546 = vmatprep.subr.bf16.mxu0 0
          %547 = vmatpush2.bf16.msra.mxu0 0
          %548 = vmatprep.subr.bf16.mxu0 0
          %549 = vmatpush2.bf16.msra.mxu0 0
          %550 = vmatprep.subr.bf16.mxu0 0
          %551 = vmatpush2.bf16.msra.mxu0 0
          %552 = vmatprep.mubr.bf16.mxu0 0
          %553 = vmatmul.mubr.bf16.gmra.mxu0 %v518
          %v554 = vpop.f32.mrf.mxu0
          %v555 = vadd.f32 %v502, %v554
          %v556 = vpop.f32.mrf.mxu0
          %v557 = vpop.f32.mrf.mxu0
          %v558 = vpop.f32.mrf.mxu0
          %559 = vdwg.mxu0
          %v560 = vld [vmem:[#allocation12] sm:$0xf]
          %v561 = vld [vmem:[#allocation12 + $0x4] sm:$0xf]
          %v562 = vld [vmem:[#allocation12 + $0x8] sm:$0xf]
          %v563 = vld [vmem:[#allocation12 + $0xc] sm:$0xf]
          %v564 = vld [vmem:[%s8] sm:$0x1]
          %v566 = vlaneseq
          %v567 = vshrl.u32 %v566, 7
          %v568 = vsub.s32 0, %v567
          %v569 = vrot.slane %v564, %v568
          %v575 = vunpack.c.l.b16 %v560
          %v576 = vunpack.c.l.b16 %v561
          %v577 = vunpack.c.l.b16 %v562
          %v578 = vunpack.c.l.b16 %v563
          %v579 = vpack.c.b16 %v576, %v575
          %v580 = vpack.c.b16 %v578, %v577
          %583 = vmatprep.subr.bf16.mxu0 0
          %584 = vmatpush1.bf16.msra.mxu0 0
          %585 = vmatprep.subr.bf16.mxu0 0
          %586 = vmatpush1.bf16.msra.mxu0 0
          %587 = vmatprep.subr.bf16.mxu0 0
          %588 = vmatpush1.bf16.msra.mxu0 0
          %589 = vmatprep.subr.bf16.mxu0 0
          %590 = vmatpush1.bf16.msra.mxu0 0
          %591 = vmatprep.subr.bf16.mxu0 0
          %592 = vmatpush1.bf16.msra.mxu0 0
          %593 = vmatprep.subr.bf16.mxu0 0
          %594 = vmatpush1.bf16.msra.mxu0 0
          %595 = vmatprep.subr.bf16.mxu0 0
          %596 = vmatpush1.bf16.msra.mxu0 %v580
          %597 = vmatprep.subr.bf16.mxu0 0
          %598 = vmatpush1.bf16.msra.mxu0 %v579
          %599 = vmatprep.subr.bf16.mxu0 0
          %600 = vmatpush2.bf16.msra.mxu0 0
          %601 = vmatprep.subr.bf16.mxu0 0
          %602 = vmatpush2.bf16.msra.mxu0 0
          %603 = vmatprep.subr.bf16.mxu0 0
          %604 = vmatpush2.bf16.msra.mxu0 0
          %605 = vmatprep.subr.bf16.mxu0 0
          %606 = vmatpush2.bf16.msra.mxu0 0
          %607 = vmatprep.subr.bf16.mxu0 0
          %608 = vmatpush2.bf16.msra.mxu0 0
          %609 = vmatprep.subr.bf16.mxu0 0
          %610 = vmatpush2.bf16.msra.mxu0 0
          %611 = vmatprep.subr.bf16.mxu0 0
          %612 = vmatpush2.bf16.msra.mxu0 0
          %613 = vmatprep.subr.bf16.mxu0 0
          %614 = vmatpush2.bf16.msra.mxu0 0
          %615 = vmatprep.mubr.bf16.mxu0 0
          %616 = vmatmul.mubr.bf16.gmra.mxu0 %v518
          %v617 = vpop.f32.mrf.mxu0
          %v618 = vadd.f32 %v569, %v617
          %v619 = vpop.f32.mrf.mxu0
          %v620 = vpop.f32.mrf.mxu0
          %v621 = vpop.f32.mrf.mxu0
          %622 = vdwg.mxu0
          %v623 = vpack.c.bf16 %v555, %v555
          %vm624 = vcmask 257024
          %625 = vst.msk [vmem:[#allocation2] sm:$0xf] %vm624, %v623
          %v626 = vpack.c.bf16 %v618, %v618
          %627 = vst.msk [vmem:[#allocation3] sm:$0xf] %vm624, %v626
        $region88: #{tpu_custom_call.1} parent=59 // pred_fallthru
          _
        %v628 = vld [vmem:[%s420] sm:$0xf]
        %v629 = vld [vmem:[#allocation9] sm:$0xf]
        %v630 = vld [vmem:[#allocation9 + $0x4] sm:$0xf]
        %v631 = vld [vmem:[#allocation9 + $0x8] sm:$0xf]
        %v632 = vld [vmem:[#allocation9 + $0xc] sm:$0xf]
        %v633 = vld [vmem:[%s6] sm:$0x1]
        %v635 = vlaneseq
        %v636 = vshrl.u32 %v635, 7
        %v637 = vsub.s32 0, %v636
        %v638 = vrot.slane %v633, %v637
        %v644 = vunpack.c.l.b16 %v629
        %v645 = vunpack.c.l.b16 %v630
        %v646 = vunpack.c.l.b16 %v631
        %v647 = vunpack.c.l.b16 %v632
        %v648 = vpack.c.b16 %v645, %v644
        %v649 = vpack.c.b16 %v647, %v646
        %vm652 = vcmask 261120
        %v654 = vsel %vm652, %v628, 0
        %656 = vmatprep.subr.bf16.mxu0 0
        %657 = vmatpush1.bf16.msra.mxu0 0
        %658 = vmatprep.subr.bf16.mxu0 0
        %659 = vmatpush1.bf16.msra.mxu0 0
        %660 = vmatprep.subr.bf16.mxu0 0
        %661 = vmatpush1.bf16.msra.mxu0 0
        %662 = vmatprep.subr.bf16.mxu0 0
        %663 = vmatpush1.bf16.msra.mxu0 0
        %664 = vmatprep.subr.bf16.mxu0 0
        %665 = vmatpush1.bf16.msra.mxu0 0
        %666 = vmatprep.subr.bf16.mxu0 0
        %667 = vmatpush1.bf16.msra.mxu0 0
        %668 = vmatprep.subr.bf16.mxu0 0
        %669 = vmatpush1.bf16.msra.mxu0 %v649
        %670 = vmatprep.subr.bf16.mxu0 0
        %671 = vmatpush1.bf16.msra.mxu0 %v648
        %672 = vmatprep.subr.bf16.mxu0 0
        %673 = vmatpush2.bf16.msra.mxu0 0
        %674 = vmatprep.subr.bf16.mxu0 0
        %675 = vmatpush2.bf16.msra.mxu0 0
        %676 = vmatprep.subr.bf16.mxu0 0
        %677 = vmatpush2.bf16.msra.mxu0 0
        %678 = vmatprep.subr.bf16.mxu0 0
        %679 = vmatpush2.bf16.msra.mxu0 0
        %680 = vmatprep.subr.bf16.mxu0 0
        %681 = vmatpush2.bf16.msra.mxu0 0
        %682 = vmatprep.subr.bf16.mxu0 0
        %683 = vmatpush2.bf16.msra.mxu0 0
        %684 = vmatprep.subr.bf16.mxu0 0
        %685 = vmatpush2.bf16.msra.mxu0 0
        %686 = vmatprep.subr.bf16.mxu0 0
        %687 = vmatpush2.bf16.msra.mxu0 0
        %688 = vmatprep.mubr.bf16.mxu0 0
        %689 = vmatmul.mubr.bf16.gmra.mxu0 %v654
        %v690 = vpop.f32.mrf.mxu0
        %v691 = vadd.f32 %v638, %v690
        %v692 = vpop.f32.mrf.mxu0
        %v693 = vpop.f32.mrf.mxu0
        %v694 = vpop.f32.mrf.mxu0
        %695 = vdwg.mxu0
        %v696 = vpack.c.bf16 %v691, %v691
        %v697 = vld [vmem:[#allocation2] sm:$0xf]
        %v698 = vld [vmem:[#allocation3] sm:$0xf]
        %vm699 = vcmask 64512
        %v701 = vsel %vm699, %v696, 0
        %v704 = vsel %vm699, %v697, 0
        %706 = vmatprep.subr.bf16.mxu0 0
        %707 = vmatpush1.bf16.xpose.msra.mxu0 0
        %708 = vmatprep.subr.bf16.mxu0 0
        %709 = vmatpush1.bf16.xpose.msra.mxu0 0
        %710 = vmatprep.subr.bf16.mxu0 0
        %711 = vmatpush1.bf16.xpose.msra.mxu0 0
        %712 = vmatprep.subr.bf16.mxu0 0
        %713 = vmatpush1.bf16.xpose.msra.mxu0 0
        %714 = vmatprep.subr.bf16.mxu0 0
        %715 = vmatpush1.bf16.xpose.msra.mxu0 0
        %716 = vmatprep.subr.bf16.mxu0 0
        %717 = vmatpush1.bf16.xpose.msra.mxu0 0
        %718 = vmatprep.subr.bf16.mxu0 0
        %719 = vmatpush1.bf16.xpose.msra.mxu0 0
        %720 = vmatprep.subr.bf16.mxu0 0
        %721 = vmatpush1.bf16.xpose.msra.mxu0 %v704
        %722 = vmatprep.subr.bf16.mxu0 0
        %723 = vmatpush2.bf16.xpose.msra.mxu0 0
        %724 = vmatprep.subr.bf16.mxu0 0
        %725 = vmatpush2.bf16.xpose.msra.mxu0 0
        %726 = vmatprep.subr.bf16.mxu0 0
        %727 = vmatpush2.bf16.xpose.msra.mxu0 0
        %728 = vmatprep.subr.bf16.mxu0 0
        %729 = vmatpush2.bf16.xpose.msra.mxu0 0
        %730 = vmatprep.subr.bf16.mxu0 0
        %731 = vmatpush2.bf16.xpose.msra.mxu0 0
        %732 = vmatprep.subr.bf16.mxu0 0
        %733 = vmatpush2.bf16.xpose.msra.mxu0 0
        %734 = vmatprep.subr.bf16.mxu0 0
        %735 = vmatpush2.bf16.xpose.msra.mxu0 0
        %736 = vmatprep.subr.bf16.mxu0 0
        %737 = vmatpush2.bf16.xpose.msra.mxu0 0
        %738 = vmatprep.mubr.bf16.mxu0 0
        %739 = vmatmul.mubr.bf16.gmra.mxu0 %v701
        %v740 = vpop.f32.mrf.mxu0
        %v741 = vadd.f32 0.0, %v740
        %v742 = vpop.f32.mrf.mxu0
        %v743 = vpop.f32.mrf.mxu0
        %v744 = vpop.f32.mrf.mxu0
        %745 = vdwg.mxu0
        %v746 = vsel %vm699, %v741, -inf
        %747 = vmax.xlane.f32.xlu0 %v746
        %v748 = vpop.xlane.xlu0 %747
        %v749 = vsub.f32 %v741, %v748
        %v750 = vmul.f32 %v749, 1.442695
        %v751 = vpow.pop %v750
        %v752 = vsel %vm699, %v751, 0.0
        %753 = vadd.xlane.f32.xlu0 %v752
        %v754 = vpop.xlane.xlu0 %753
        %v755 = vpack.c.bf16 %v751, %v751
        %v757 = vsel %vm699, %v755, 0
        %vm759 = vcmask 1043456
        %v761 = vsel %vm759, %v698, 0
        %763 = vmatprep.subr.bf16.mxu0 0
        %764 = vmatpush1.bf16.msra.mxu0 0
        %765 = vmatprep.subr.bf16.mxu0 0
        %766 = vmatpush1.bf16.msra.mxu0 0
        %767 = vmatprep.subr.bf16.mxu0 0
        %768 = vmatpush1.bf16.msra.mxu0 0
        %769 = vmatprep.subr.bf16.mxu0 0
        %770 = vmatpush1.bf16.msra.mxu0 0
        %771 = vmatprep.subr.bf16.mxu0 0
        %772 = vmatpush1.bf16.msra.mxu0 0
        %773 = vmatprep.subr.bf16.mxu0 0
        %774 = vmatpush1.bf16.msra.mxu0 0
        %775 = vmatprep.subr.bf16.mxu0 0
        %776 = vmatpush1.bf16.msra.mxu0 0
        %777 = vmatprep.subr.bf16.mxu0 0
        %778 = vmatpush1.bf16.msra.mxu0 %v761
        %779 = vmatprep.subr.bf16.mxu0 0
        %780 = vmatpush2.bf16.msra.mxu0 0
        %781 = vmatprep.subr.bf16.mxu0 0
        %782 = vmatpush2.bf16.msra.mxu0 0
        %783 = vmatprep.subr.bf16.mxu0 0
        %784 = vmatpush2.bf16.msra.mxu0 0
        %785 = vmatprep.subr.bf16.mxu0 0
        %786 = vmatpush2.bf16.msra.mxu0 0
        %787 = vmatprep.subr.bf16.mxu0 0
        %788 = vmatpush2.bf16.msra.mxu0 0
        %789 = vmatprep.subr.bf16.mxu0 0
        %790 = vmatpush2.bf16.msra.mxu0 0
        %791 = vmatprep.subr.bf16.mxu0 0
        %792 = vmatpush2.bf16.msra.mxu0 0
        %793 = vmatprep.subr.bf16.mxu0 0
        %794 = vmatpush2.bf16.msra.mxu0 0
        %795 = vmatprep.mubr.bf16.mxu0 0
        %796 = vmatmul.mubr.bf16.gmra.mxu0 %v757
        %v797 = vpop.f32.mrf.mxu0
        %v798 = vadd.f32 0.0, %v797
        %v799 = vpop.f32.mrf.mxu0
        %v800 = vpop.f32.mrf.mxu0
        %v801 = vpop.f32.mrf.mxu0
        %802 = vdwg.mxu0
        %v803 = vrcp.pop %v754
        %v804 = vmul.f32 %v798, %v803
        %v805 = vpack.c.bf16 %v804, %v804
        %v806 = vld [vmem:[#allocation13] sm:$0xf]
        %808 = vrot.lane.b32.xlu0 %v696, 120
        %v809 = vpop.permute.xlu0 %808
        %v811 = vunpack.c.l.b16 %v697
        %v812 = vpack.c.b16 %v811, %v811
        %813 = vrot.lane.b32.xlu0 %v812, 120
        %v814 = vpop.permute.xlu0 %813
        %v816 = vsel %vm699, %v809, 0
        %v819 = vsel %vm699, %v814, 0
        %821 = vmatprep.subr.bf16.mxu0 0
        %822 = vmatpush1.bf16.xpose.msra.mxu0 0
        %823 = vmatprep.subr.bf16.mxu0 0
        %824 = vmatpush1.bf16.xpose.msra.mxu0 0
        %825 = vmatprep.subr.bf16.mxu0 0
        %826 = vmatpush1.bf16.xpose.msra.mxu0 0
        %827 = vmatprep.subr.bf16.mxu0 0
        %828 = vmatpush1.bf16.xpose.msra.mxu0 0
        %829 = vmatprep.subr.bf16.mxu0 0
        %830 = vmatpush1.bf16.xpose.msra.mxu0 0
        %831 = vmatprep.subr.bf16.mxu0 0
        %832 = vmatpush1.bf16.xpose.msra.mxu0 0
        %833 = vmatprep.subr.bf16.mxu0 0
        %834 = vmatpush1.bf16.xpose.msra.mxu0 0
        %835 = vmatprep.subr.bf16.mxu0 0
        %836 = vmatpush1.bf16.xpose.msra.mxu0 %v819
        %837 = vmatprep.subr.bf16.mxu0 0
        %838 = vmatpush2.bf16.xpose.msra.mxu0 0
        %839 = vmatprep.subr.bf16.mxu0 0
        %840 = vmatpush2.bf16.xpose.msra.mxu0 0
        %841 = vmatprep.subr.bf16.mxu0 0
        %842 = vmatpush2.bf16.xpose.msra.mxu0 0
        %843 = vmatprep.subr.bf16.mxu0 0
        %844 = vmatpush2.bf16.xpose.msra.mxu0 0
        %845 = vmatprep.subr.bf16.mxu0 0
        %846 = vmatpush2.bf16.xpose.msra.mxu0 0
        %847 = vmatprep.subr.bf16.mxu0 0
        %848 = vmatpush2.bf16.xpose.msra.mxu0 0
        %849 = vmatprep.subr.bf16.mxu0 0
        %850 = vmatpush2.bf16.xpose.msra.mxu0 0
        %851 = vmatprep.subr.bf16.mxu0 0
        %852 = vmatpush2.bf16.xpose.msra.mxu0 0
        %853 = vmatprep.mubr.bf16.mxu0 0
        %854 = vmatmul.mubr.bf16.gmra.mxu0 %v816
        %v855 = vpop.f32.mrf.mxu0
        %v856 = vadd.f32 0.0, %v855
        %v857 = vpop.f32.mrf.mxu0
        %v858 = vpop.f32.mrf.mxu0
        %v859 = vpop.f32.mrf.mxu0
        %860 = vdwg.mxu0
        %v861 = vsel %vm699, %v856, -inf
        %862 = vmax.xlane.f32.xlu0 %v861
        %v863 = vpop.xlane.xlu0 %862
        %v864 = vsub.f32 %v856, %v863
        %v865 = vmul.f32 %v864, 1.442695
        %v866 = vpow.pop %v865
        %v867 = vsel %vm699, %v866, 0.0
        %868 = vadd.xlane.f32.xlu0 %v867
        %v869 = vpop.xlane.xlu0 %868
        %v870 = vpack.c.bf16 %v866, %v866
        %v872 = vunpack.c.l.b16 %v698
        %v873 = vpack.c.b16 %v872, %v872
        %874 = vrot.lane.b32.xlu0 %v873, 120
        %v875 = vpop.permute.xlu0 %874
        %v877 = vsel %vm699, %v870, 0
        %v880 = vsel %vm759, %v875, 0
        %882 = vmatprep.subr.bf16.mxu0 0
        %883 = vmatpush1.bf16.msra.mxu0 0
        %884 = vmatprep.subr.bf16.mxu0 0
        %885 = vmatpush1.bf16.msra.mxu0 0
        %886 = vmatprep.subr.bf16.mxu0 0
        %887 = vmatpush1.bf16.msra.mxu0 0
        %888 = vmatprep.subr.bf16.mxu0 0
        %889 = vmatpush1.bf16.msra.mxu0 0
        %890 = vmatprep.subr.bf16.mxu0 0
        %891 = vmatpush1.bf16.msra.mxu0 0
        %892 = vmatprep.subr.bf16.mxu0 0
        %893 = vmatpush1.bf16.msra.mxu0 0
        %894 = vmatprep.subr.bf16.mxu0 0
        %895 = vmatpush1.bf16.msra.mxu0 0
        %896 = vmatprep.subr.bf16.mxu0 0
        %897 = vmatpush1.bf16.msra.mxu0 %v880
        %898 = vmatprep.subr.bf16.mxu0 0
        %899 = vmatpush2.bf16.msra.mxu0 0
        %900 = vmatprep.subr.bf16.mxu0 0
        %901 = vmatpush2.bf16.msra.mxu0 0
        %902 = vmatprep.subr.bf16.mxu0 0
        %903 = vmatpush2.bf16.msra.mxu0 0
        %904 = vmatprep.subr.bf16.mxu0 0
        %905 = vmatpush2.bf16.msra.mxu0 0
        %906 = vmatprep.subr.bf16.mxu0 0
        %907 = vmatpush2.bf16.msra.mxu0 0
        %908 = vmatprep.subr.bf16.mxu0 0
        %909 = vmatpush2.bf16.msra.mxu0 0
        %910 = vmatprep.subr.bf16.mxu0 0
        %911 = vmatpush2.bf16.msra.mxu0 0
        %912 = vmatprep.subr.bf16.mxu0 0
        %913 = vmatpush2.bf16.msra.mxu0 0
        %914 = vmatprep.mubr.bf16.mxu0 0
        %915 = vmatmul.mubr.bf16.gmra.mxu0 %v877
        %v916 = vpop.f32.mrf.mxu0
        %v917 = vadd.f32 0.0, %v916
        %v918 = vpop.f32.mrf.mxu0
        %v919 = vpop.f32.mrf.mxu0
        %v920 = vpop.f32.mrf.mxu0
        %921 = vdwg.mxu0
        %v922 = vrcp.pop %v869
        %v923 = vmul.f32 %v917, %v922
        %v924 = vpack.c.bf16 %v923, %v923
        %v925 = vld [vmem:[#allocation13 + $0x4] sm:$0xf]
        %v927 = vsel %vm699, %v924, 0
        %v930 = vsel %vm759, %v925, 0
        %932 = vmatprep.subr.bf16.mxu0 0
        %933 = vmatpush1.bf16.msra.mxu0 0
        %934 = vmatprep.subr.bf16.mxu0 0
        %935 = vmatpush1.bf16.msra.mxu0 0
        %936 = vmatprep.subr.bf16.mxu0 0
        %937 = vmatpush1.bf16.msra.mxu0 0
        %938 = vmatprep.subr.bf16.mxu0 0
        %939 = vmatpush1.bf16.msra.mxu0 0
        %940 = vmatprep.subr.bf16.mxu0 0
        %941 = vmatpush1.bf16.msra.mxu0 0
        %942 = vmatprep.subr.bf16.mxu0 0
        %943 = vmatpush1.bf16.msra.mxu0 0
        %944 = vmatprep.subr.bf16.mxu0 0
        %945 = vmatpush1.bf16.msra.mxu0 0
        %946 = vmatprep.subr.bf16.mxu0 0
        %947 = vmatpush1.bf16.msra.mxu0 %v930
        %948 = vmatprep.subr.bf16.mxu0 0
        %949 = vmatpush2.bf16.msra.mxu0 0
        %950 = vmatprep.subr.bf16.mxu0 0
        %951 = vmatpush2.bf16.msra.mxu0 0
        %952 = vmatprep.subr.bf16.mxu0 0
        %953 = vmatpush2.bf16.msra.mxu0 0
        %954 = vmatprep.subr.bf16.mxu0 0
        %955 = vmatpush2.bf16.msra.mxu0 0
        %956 = vmatprep.subr.bf16.mxu0 0
        %957 = vmatpush2.bf16.msra.mxu0 0
        %958 = vmatprep.subr.bf16.mxu0 0
        %959 = vmatpush2.bf16.msra.mxu0 0
        %960 = vmatprep.subr.bf16.mxu0 0
        %961 = vmatpush2.bf16.msra.mxu0 0
        %962 = vmatprep.subr.bf16.mxu0 0
        %963 = vmatpush2.bf16.msra.mxu0 0
        %964 = vmatprep.mubr.bf16.mxu0 0
        %965 = vmatmul.mubr.bf16.gmra.mxu0 %v927
        %v966 = vpop.f32.mrf.mxu0
        %v967 = vadd.f32 0.0, %v966
        %v968 = vpop.f32.mrf.mxu0
        %v969 = vpop.f32.mrf.mxu0
        %v970 = vpop.f32.mrf.mxu0
        %971 = vdwg.mxu0
        %v973 = vsel %vm699, %v805, 0
        %v976 = vsel %vm759, %v806, 0
        %978 = vmatprep.subr.bf16.mxu0 0
        %979 = vmatpush1.bf16.msra.mxu0 0
        %980 = vmatprep.subr.bf16.mxu0 0
        %981 = vmatpush1.bf16.msra.mxu0 0
        %982 = vmatprep.subr.bf16.mxu0 0
        %983 = vmatpush1.bf16.msra.mxu0 0
        %984 = vmatprep.subr.bf16.mxu0 0
        %985 = vmatpush1.bf16.msra.mxu0 0
        %986 = vmatprep.subr.bf16.mxu0 0
        %987 = vmatpush1.bf16.msra.mxu0 0
        %988 = vmatprep.subr.bf16.mxu0 0
        %989 = vmatpush1.bf16.msra.mxu0 0
        %990 = vmatprep.subr.bf16.mxu0 0
        %991 = vmatpush1.bf16.msra.mxu0 0
        %992 = vmatprep.subr.bf16.mxu0 0
        %993 = vmatpush1.bf16.msra.mxu0 %v976
        %994 = vmatprep.subr.bf16.mxu0 0
        %995 = vmatpush2.bf16.msra.mxu0 0
        %996 = vmatprep.subr.bf16.mxu0 0
        %997 = vmatpush2.bf16.msra.mxu0 0
        %998 = vmatprep.subr.bf16.mxu0 0
        %999 = vmatpush2.bf16.msra.mxu0 0
        %1000 = vmatprep.subr.bf16.mxu0 0
        %1001 = vmatpush2.bf16.msra.mxu0 0
        %1002 = vmatprep.subr.bf16.mxu0 0
        %1003 = vmatpush2.bf16.msra.mxu0 0
        %1004 = vmatprep.subr.bf16.mxu0 0
        %1005 = vmatpush2.bf16.msra.mxu0 0
        %1006 = vmatprep.subr.bf16.mxu0 0
        %1007 = vmatpush2.bf16.msra.mxu0 0
        %1008 = vmatprep.subr.bf16.mxu0 0
        %1009 = vmatpush2.bf16.msra.mxu0 0
        %1010 = vmatprep.mubr.bf16.mxu0 0
        %1011 = vmatmul.mubr.bf16.gmra.mxu0 %v973
        %v1012 = vpop.f32.mrf.mxu0
        %v1013 = vadd.f32 %v967, %v1012
        %v1014 = vpop.f32.mrf.mxu0
        %v1015 = vpop.f32.mrf.mxu0
        %v1016 = vpop.f32.mrf.mxu0
        %1017 = vdwg.mxu0
        %1018 = vrot.lane.b32.xlu0 %v696, 112
        %v1019 = vpop.permute.xlu0 %1018
        %1020 = vrot.lane.b32.xlu0 %v812, 112
        %v1021 = vpop.permute.xlu0 %1020
        %v1023 = vsel %vm699, %v1019, 0
        %v1026 = vsel %vm699, %v1021, 0
        %1028 = vmatprep.subr.bf16.mxu0 0
        %1029 = vmatpush1.bf16.xpose.msra.mxu0 0
        %1030 = vmatprep.subr.bf16.mxu0 0
        %1031 = vmatpush1.bf16.xpose.msra.mxu0 0
        %1032 = vmatprep.subr.bf16.mxu0 0
        %1033 = vmatpush1.bf16.xpose.msra.mxu0 0
        %1034 = vmatprep.subr.bf16.mxu0 0
        %1035 = vmatpush1.bf16.xpose.msra.mxu0 0
        %1036 = vmatprep.subr.bf16.mxu0 0
        %1037 = vmatpush1.bf16.xpose.msra.mxu0 0
        %1038 = vmatprep.subr.bf16.mxu0 0
        %1039 = vmatpush1.bf16.xpose.msra.mxu0 0
        %1040 = vmatprep.subr.bf16.mxu0 0
        %1041 = vmatpush1.bf16.xpose.msra.mxu0 0
        %1042 = vmatprep.subr.bf16.mxu0 0
        %1043 = vmatpush1.bf16.xpose.msra.mxu0 %v1026
        %1044 = vmatprep.subr.bf16.mxu0 0
        %1045 = vmatpush2.bf16.xpose.msra.mxu0 0
        %1046 = vmatprep.subr.bf16.mxu0 0
        %1047 = vmatpush2.bf16.xpose.msra.mxu0 0
        %1048 = vmatprep.subr.bf16.mxu0 0
        %1049 = vmatpush2.bf16.xpose.msra.mxu0 0
        %1050 = vmatprep.subr.bf16.mxu0 0
        %1051 = vmatpush2.bf16.xpose.msra.mxu0 0
        %1052 = vmatprep.subr.bf16.mxu0 0
        %1053 = vmatpush2.bf16.xpose.msra.mxu0 0
        %1054 = vmatprep.subr.bf16.mxu0 0
        %1055 = vmatpush2.bf16.xpose.msra.mxu0 0
        %1056 = vmatprep.subr.bf16.mxu0 0
        %1057 = vmatpush2.bf16.xpose.msra.mxu0 0
        %1058 = vmatprep.subr.bf16.mxu0 0
        %1059 = vmatpush2.bf16.xpose.msra.mxu0 0
        %1060 = vmatprep.mubr.bf16.mxu0 0
        %1061 = vmatmul.mubr.bf16.gmra.mxu0 %v1023
        %v1062 = vpop.f32.mrf.mxu0
        %v1063 = vadd.f32 0.0, %v1062
        %v1064 = vpop.f32.mrf.mxu0
        %v1065 = vpop.f32.mrf.mxu0
        %v1066 = vpop.f32.mrf.mxu0
        %1067 = vdwg.mxu0
        %v1068 = vsel %vm699, %v1063, -inf
        %1069 = vmax.xlane.f32.xlu0 %v1068
        %v1070 = vpop.xlane.xlu0 %1069
        %v1071 = vsub.f32 %v1063, %v1070
        %v1072 = vmul.f32 %v1071, 1.442695
        %v1073 = vpow.pop %v1072
        %v1074 = vsel %vm699, %v1073, 0.0
        %1075 = vadd.xlane.f32.xlu0 %v1074
        %v1076 = vpop.xlane.xlu0 %1075
        %v1077 = vpack.c.bf16 %v1073, %v1073
        %1078 = vrot.lane.b32.xlu0 %v873, 112
        %v1079 = vpop.permute.xlu0 %1078
        %v1081 = vsel %vm699, %v1077, 0
        %v1084 = vsel %vm759, %v1079, 0
        %1086 = vmatprep.subr.bf16.mxu0 0
        %1087 = vmatpush1.bf16.msra.mxu0 0
        %1088 = vmatprep.subr.bf16.mxu0 0
        %1089 = vmatpush1.bf16.msra.mxu0 0
        %1090 = vmatprep.subr.bf16.mxu0 0
        %1091 = vmatpush1.bf16.msra.mxu0 0
        %1092 = vmatprep.subr.bf16.mxu0 0
        %1093 = vmatpush1.bf16.msra.mxu0 0
        %1094 = vmatprep.subr.bf16.mxu0 0
        %1095 = vmatpush1.bf16.msra.mxu0 0
        %1096 = vmatprep.subr.bf16.mxu0 0
        %1097 = vmatpush1.bf16.msra.mxu0 0
        %1098 = vmatprep.subr.bf16.mxu0 0
        %1099 = vmatpush1.bf16.msra.mxu0 0
        %1100 = vmatprep.subr.bf16.mxu0 0
        %1101 = vmatpush1.bf16.msra.mxu0 %v1084
        %1102 = vmatprep.subr.bf16.mxu0 0
        %1103 = vmatpush2.bf16.msra.mxu0 0
        %1104 = vmatprep.subr.bf16.mxu0 0
        %1105 = vmatpush2.bf16.msra.mxu0 0
        %1106 = vmatprep.subr.bf16.mxu0 0
        %1107 = vmatpush2.bf16.msra.mxu0 0
        %1108 = vmatprep.subr.bf16.mxu0 0
        %1109 = vmatpush2.bf16.msra.mxu0 0
        %1110 = vmatprep.subr.bf16.mxu0 0
        %1111 = vmatpush2.bf16.msra.mxu0 0
        %1112 = vmatprep.subr.bf16.mxu0 0
        %1113 = vmatpush2.bf16.msra.mxu0 0
        %1114 = vmatprep.subr.bf16.mxu0 0
        %1115 = vmatpush2.bf16.msra.mxu0 0
        %1116 = vmatprep.subr.bf16.mxu0 0
        %1117 = vmatpush2.bf16.msra.mxu0 0
        %1118 = vmatprep.mubr.bf16.mxu0 0
        %1119 = vmatmul.mubr.bf16.gmra.mxu0 %v1081
        %v1120 = vpop.f32.mrf.mxu0
        %v1121 = vadd.f32 0.0, %v1120
        %v1122 = vpop.f32.mrf.mxu0
        %v1123 = vpop.f32.mrf.mxu0
        %v1124 = vpop.f32.mrf.mxu0
        %1125 = vdwg.mxu0
        %v1126 = vrcp.pop %v1076
        %v1127 = vmul.f32 %v1121, %v1126
        %v1128 = vpack.c.bf16 %v1127, %v1127
        %v1129 = vld [vmem:[#allocation13 + $0x8] sm:$0xf]
        %v1131 = vsel %vm699, %v1128, 0
        %v1134 = vsel %vm759, %v1129, 0
        %1136 = vmatprep.subr.bf16.mxu0 0
        %1137 = vmatpush1.bf16.msra.mxu0 0
        %1138 = vmatprep.subr.bf16.mxu0 0
        %1139 = vmatpush1.bf16.msra.mxu0 0
        %1140 = vmatprep.subr.bf16.mxu0 0
        %1141 = vmatpush1.bf16.msra.mxu0 0
        %1142 = vmatprep.subr.bf16.mxu0 0
        %1143 = vmatpush1.bf16.msra.mxu0 0
        %1144 = vmatprep.subr.bf16.mxu0 0
        %1145 = vmatpush1.bf16.msra.mxu0 0
        %1146 = vmatprep.subr.bf16.mxu0 0
        %1147 = vmatpush1.bf16.msra.mxu0 0
        %1148 = vmatprep.subr.bf16.mxu0 0
        %1149 = vmatpush1.bf16.msra.mxu0 0
        %1150 = vmatprep.subr.bf16.mxu0 0
        %1151 = vmatpush1.bf16.msra.mxu0 %v1134
        %1152 = vmatprep.subr.bf16.mxu0 0
        %1153 = vmatpush2.bf16.msra.mxu0 0
        %1154 = vmatprep.subr.bf16.mxu0 0
        %1155 = vmatpush2.bf16.msra.mxu0 0
        %1156 = vmatprep.subr.bf16.mxu0 0
        %1157 = vmatpush2.bf16.msra.mxu0 0
        %1158 = vmatprep.subr.bf16.mxu0 0
        %1159 = vmatpush2.bf16.msra.mxu0 0
        %1160 = vmatprep.subr.bf16.mxu0 0
        %1161 = vmatpush2.bf16.msra.mxu0 0
        %1162 = vmatprep.subr.bf16.mxu0 0
        %1163 = vmatpush2.bf16.msra.mxu0 0
        %1164 = vmatprep.subr.bf16.mxu0 0
        %1165 = vmatpush2.bf16.msra.mxu0 0
        %1166 = vmatprep.subr.bf16.mxu0 0
        %1167 = vmatpush2.bf16.msra.mxu0 0
        %1168 = vmatprep.mubr.bf16.mxu0 0
        %1169 = vmatmul.mubr.bf16.gmra.mxu0 %v1131
        %v1170 = vpop.f32.mrf.mxu0
        %v1171 = vadd.f32 0.0, %v1170
        %v1172 = vpop.f32.mrf.mxu0
        %v1173 = vpop.f32.mrf.mxu0
        %v1174 = vpop.f32.mrf.mxu0
        %1175 = vdwg.mxu0
        %v1176 = vadd.f32 %v1013, %v1171
        %1177 = vrot.lane.b32.xlu0 %v696, 104
        %v1178 = vpop.permute.xlu0 %1177
        %1179 = vrot.lane.b32.xlu0 %v812, 104
        %v1180 = vpop.permute.xlu0 %1179
        %v1182 = vsel %vm699, %v1178, 0
        %v1185 = vsel %vm699, %v1180, 0
        %1187 = vmatprep.subr.bf16.mxu0 0
        %1188 = vmatpush1.bf16.xpose.msra.mxu0 0
        %1189 = vmatprep.subr.bf16.mxu0 0
        %1190 = vmatpush1.bf16.xpose.msra.mxu0 0
        %1191 = vmatprep.subr.bf16.mxu0 0
        %1192 = vmatpush1.bf16.xpose.msra.mxu0 0
        %1193 = vmatprep.subr.bf16.mxu0 0
        %1194 = vmatpush1.bf16.xpose.msra.mxu0 0
        %1195 = vmatprep.subr.bf16.mxu0 0
        %1196 = vmatpush1.bf16.xpose.msra.mxu0 0
        %1197 = vmatprep.subr.bf16.mxu0 0
        %1198 = vmatpush1.bf16.xpose.msra.mxu0 0
        %1199 = vmatprep.subr.bf16.mxu0 0
        %1200 = vmatpush1.bf16.xpose.msra.mxu0 0
        %1201 = vmatprep.subr.bf16.mxu0 0
        %1202 = vmatpush1.bf16.xpose.msra.mxu0 %v1185
        %1203 = vmatprep.subr.bf16.mxu0 0
        %1204 = vmatpush2.bf16.xpose.msra.mxu0 0
        %1205 = vmatprep.subr.bf16.mxu0 0
        %1206 = vmatpush2.bf16.xpose.msra.mxu0 0
        %1207 = vmatprep.subr.bf16.mxu0 0
        %1208 = vmatpush2.bf16.xpose.msra.mxu0 0
        %1209 = vmatprep.subr.bf16.mxu0 0
        %1210 = vmatpush2.bf16.xpose.msra.mxu0 0
        %1211 = vmatprep.subr.bf16.mxu0 0
        %1212 = vmatpush2.bf16.xpose.msra.mxu0 0
        %1213 = vmatprep.subr.bf16.mxu0 0
        %1214 = vmatpush2.bf16.xpose.msra.mxu0 0
        %1215 = vmatprep.subr.bf16.mxu0 0
        %1216 = vmatpush2.bf16.xpose.msra.mxu0 0
        %1217 = vmatprep.subr.bf16.mxu0 0
        %1218 = vmatpush2.bf16.xpose.msra.mxu0 0
        %1219 = vmatprep.mubr.bf16.mxu0 0
        %1220 = vmatmul.mubr.bf16.gmra.mxu0 %v1182
        %v1221 = vpop.f32.mrf.mxu0
        %v1222 = vadd.f32 0.0, %v1221
        %v1223 = vpop.f32.mrf.mxu0
        %v1224 = vpop.f32.mrf.mxu0
        %v1225 = vpop.f32.mrf.mxu0
        %1226 = vdwg.mxu0
        %v1227 = vsel %vm699, %v1222, -inf
        %1228 = vmax.xlane.f32.xlu0 %v1227
        %v1229 = vpop.xlane.xlu0 %1228
        %v1230 = vsub.f32 %v1222, %v1229
        %v1231 = vmul.f32 %v1230, 1.442695
        %v1232 = vpow.pop %v1231
        %v1233 = vsel %vm699, %v1232, 0.0
        %1234 = vadd.xlane.f32.xlu0 %v1233
        %v1235 = vpop.xlane.xlu0 %1234
        %v1236 = vpack.c.bf16 %v1232, %v1232
        %1237 = vrot.lane.b32.xlu0 %v873, 104
        %v1238 = vpop.permute.xlu0 %1237
        %v1240 = vsel %vm699, %v1236, 0
        %v1243 = vsel %vm759, %v1238, 0
        %1245 = vmatprep.subr.bf16.mxu0 0
        %1246 = vmatpush1.bf16.msra.mxu0 0
        %1247 = vmatprep.subr.bf16.mxu0 0
        %1248 = vmatpush1.bf16.msra.mxu0 0
        %1249 = vmatprep.subr.bf16.mxu0 0
        %1250 = vmatpush1.bf16.msra.mxu0 0
        %1251 = vmatprep.subr.bf16.mxu0 0
        %1252 = vmatpush1.bf16.msra.mxu0 0
        %1253 = vmatprep.subr.bf16.mxu0 0
        %1254 = vmatpush1.bf16.msra.mxu0 0
        %1255 = vmatprep.subr.bf16.mxu0 0
        %1256 = vmatpush1.bf16.msra.mxu0 0
        %1257 = vmatprep.subr.bf16.mxu0 0
        %1258 = vmatpush1.bf16.msra.mxu0 0
        %1259 = vmatprep.subr.bf16.mxu0 0
        %1260 = vmatpush1.bf16.msra.mxu0 %v1243
        %1261 = vmatprep.subr.bf16.mxu0 0
        %1262 = vmatpush2.bf16.msra.mxu0 0
        %1263 = vmatprep.subr.bf16.mxu0 0
        %1264 = vmatpush2.bf16.msra.mxu0 0
        %1265 = vmatprep.subr.bf16.mxu0 0
        %1266 = vmatpush2.bf16.msra.mxu0 0
        %1267 = vmatprep.subr.bf16.mxu0 0
        %1268 = vmatpush2.bf16.msra.mxu0 0
        %1269 = vmatprep.subr.bf16.mxu0 0
        %1270 = vmatpush2.bf16.msra.mxu0 0
        %1271 = vmatprep.subr.bf16.mxu0 0
        %1272 = vmatpush2.bf16.msra.mxu0 0
        %1273 = vmatprep.subr.bf16.mxu0 0
        %1274 = vmatpush2.bf16.msra.mxu0 0
        %1275 = vmatprep.subr.bf16.mxu0 0
        %1276 = vmatpush2.bf16.msra.mxu0 0
        %1277 = vmatprep.mubr.bf16.mxu0 0
        %1278 = vmatmul.mubr.bf16.gmra.mxu0 %v1240
        %v1279 = vpop.f32.mrf.mxu0
        %v1280 = vadd.f32 0.0, %v1279
        %v1281 = vpop.f32.mrf.mxu0
        %v1282 = vpop.f32.mrf.mxu0
        %v1283 = vpop.f32.mrf.mxu0
        %1284 = vdwg.mxu0
        %v1285 = vrcp.pop %v1235
        %v1286 = vmul.f32 %v1280, %v1285
        %v1287 = vpack.c.bf16 %v1286, %v1286
        %v1288 = vld [vmem:[#allocation13 + $0xc] sm:$0xf]
        %v1290 = vsel %vm699, %v1287, 0
        %v1293 = vsel %vm759, %v1288, 0
        %1295 = vmatprep.subr.bf16.mxu0 0
        %1296 = vmatpush1.bf16.msra.mxu0 0
        %1297 = vmatprep.subr.bf16.mxu0 0
        %1298 = vmatpush1.bf16.msra.mxu0 0
        %1299 = vmatprep.subr.bf16.mxu0 0
        %1300 = vmatpush1.bf16.msra.mxu0 0
        %1301 = vmatprep.subr.bf16.mxu0 0
        %1302 = vmatpush1.bf16.msra.mxu0 0
        %1303 = vmatprep.subr.bf16.mxu0 0
        %1304 = vmatpush1.bf16.msra.mxu0 0
        %1305 = vmatprep.subr.bf16.mxu0 0
        %1306 = vmatpush1.bf16.msra.mxu0 0
        %1307 = vmatprep.subr.bf16.mxu0 0
        %1308 = vmatpush1.bf16.msra.mxu0 0
        %1309 = vmatprep.subr.bf16.mxu0 0
        %1310 = vmatpush1.bf16.msra.mxu0 %v1293
        %1311 = vmatprep.subr.bf16.mxu0 0
        %1312 = vmatpush2.bf16.msra.mxu0 0
        %1313 = vmatprep.subr.bf16.mxu0 0
        %1314 = vmatpush2.bf16.msra.mxu0 0
        %1315 = vmatprep.subr.bf16.mxu0 0
        %1316 = vmatpush2.bf16.msra.mxu0 0
        %1317 = vmatprep.subr.bf16.mxu0 0
        %1318 = vmatpush2.bf16.msra.mxu0 0
        %1319 = vmatprep.subr.bf16.mxu0 0
        %1320 = vmatpush2.bf16.msra.mxu0 0
        %1321 = vmatprep.subr.bf16.mxu0 0
        %1322 = vmatpush2.bf16.msra.mxu0 0
        %1323 = vmatprep.subr.bf16.mxu0 0
        %1324 = vmatpush2.bf16.msra.mxu0 0
        %1325 = vmatprep.subr.bf16.mxu0 0
        %1326 = vmatpush2.bf16.msra.mxu0 0
        %1327 = vmatprep.mubr.bf16.mxu0 0
        %1328 = vmatmul.mubr.bf16.gmra.mxu0 %v1290
        %v1329 = vpop.f32.mrf.mxu0
        %v1330 = vadd.f32 0.0, %v1329
        %v1331 = vpop.f32.mrf.mxu0
        %v1332 = vpop.f32.mrf.mxu0
        %v1333 = vpop.f32.mrf.mxu0
        %1334 = vdwg.mxu0
        %v1335 = vadd.f32 %v1176, %v1330
        %v1336 = vld [vmem:[%s9] sm:$0x1]
        %v1338 = vlaneseq
        %v1339 = vshrl.u32 %v1338, 7
        %v1340 = vsub.s32 0, %v1339
        %v1341 = vrot.slane %v1336, %v1340
        %v1343 = vadd.f32 %v1335, %v1341
        %1344 = vst.msk [vmem:[%s486] sm:$0xff] %vm652, %v1343
        %s1345 = sand.u32 %s276, 1
        %s1346 = scalar_lea.sflag [#allocation6], %s1345
        %s1347 = sand.u32 %s276, 1
        %s1348 = smul.addr %s1347, 8
        %s1349 = scalar_lea.vmem [#allocation15], %s1348
        // Predicated region
        $region89: #{tpu_custom_call.1} parent=59 // pred_check
          %p1350 = pneg %p286
        $region90: #{tpu_custom_call.1} parent=59 // pred_check_branch
          %1352 = sbr.rel (%p1350) target = $region92
        $region91: #{tpu_custom_call.1} parent=59 // pred_region
          %s1354 = ssub.s32 128, 128
          %1355 = vsyncadd %s1346, %s1354
          %s1356 = sadd.s32 %s37, %s36
          %s1357 = smul.addr %s1356, 128
          %s1358 = scalar_lea.hbm %s10, %s1357
          %s1360 = sshll.u32 %s1349, 4
          %s1361 = int_to_ptr.vmem [resolvable:$true] %s1360
          %1363 = dma.vmem_to_hbm [thread:$0]  %s1361, 128, %s1358, %s1346
        $region92: #{tpu_custom_call.1} parent=59 // pred_fallthru
          _
      $region60: #{tpu_custom_call.1} parent=5 // pred_fallthru
        _
      %p1364 = scmp.le.s32.totalorder 2, %s27
      // Predicated region
      $region93: #{tpu_custom_call.1} parent=5 // pred_check
        %p1365 = pneg %p1364
      $region94: #{tpu_custom_call.1} parent=5 // pred_check_branch
        %1367 = sbr.rel (%p1365) target = $region96
      $region95: #{tpu_custom_call.1} parent=5 // pred_region
        %s1368 = ssub.s32 %s27, 2
        // Predicated region
        $region97: #{tpu_custom_call.1} parent=95 // pred_check
          %p1369 = pneg %p292
        $region98: #{tpu_custom_call.1} parent=95 // pred_check_branch
          %1371 = sbr.rel (%p1369) target = $region100
        $region99: #{tpu_custom_call.1} parent=95 // pred_region
          %s1372 = sand.u32 %s277, 1
          %s1373 = scalar_lea.sflag [#allocation6], %s1372
          %s1374 = sand.u32 %s277, 1
          %s1375 = smul.addr %s1374, 8
          %s1376 = scalar_lea.vmem [#allocation15], %s1375
          %1377 = dma.done %s1373, 128
        $region100: #{tpu_custom_call.1} parent=95 // pred_fallthru
          _
      $region96: #{tpu_custom_call.1} parent=5 // pred_fallthru
        _
    $region6: #{tpu_custom_call.1} parent=1 // loop_footer
      %s31 = sadd.s32 1, %s27
    $region7: #{tpu_custom_call.1} parent=1 // loop_footer_branch
      %26 = sbr.rel target = $region3
    $region8: #{tpu_custom_call.1} parent=1 // loop_exit
      _
    %1378 = vsyncpa [#allocation5], 1
    %s1379 = scalar_lea.sflag [#allocation5], 1
    %1380 = vsyncpa %s1379, 1
    %1381 = vsyncpa [#allocation8], 1
    %s1382 = scalar_lea.sflag [#allocation8], 1
    %1383 = vsyncpa %s1382, 1
    %1384 = vsyncpa [#allocation11], 1
    %1385 = vsyncpa [#allocation14], 1
    %1386 = vsyncpa [#allocation6], 1
    %s1387 = scalar_lea.sflag [#allocation6], 1
    %1388 = vsyncpa %s1387, 1

// kernel: tpu_custom_call.1
$region0: #{tpu_custom_call.1}
  #allocation0 [shape = 'u32[]', space=smem, size = 0x4, offset = 0x4, fixed_abs, tag = 'smem constant byte address 0x4 - core index']
  #allocation1 [shape = 'u32[144,128]{1,0:T(1,128)}', space=vmem, size = 0x12000, scoped, tag = 'internal scratch']
  #allocation2 [shape = 'bf16[8,32]{1,0:T(8,128)(2,1)}', space=vmem, size = 0x800, scoped, tag = 'scratch operand']
  #allocation3 [shape = 'bf16[8,32]{1,0:T(8,128)(2,1)}', space=vmem, size = 0x800, scoped, tag = 'scratch operand']
  %s0 = inlined_call_operand.hbm [shape: bf16[2,8,32], index: 0, kind: input, shape index: {}]
  %s1 = inlined_call_operand.hbm [shape: bf16[2,8,32], index: 1, kind: input, shape index: {}]
  %s2 = inlined_call_operand.hbm [shape: bf16[32,32], index: 2, kind: input, shape index: {}]
  %s3 = inlined_call_operand.hbm [shape: bf16[32,32], index: 3, kind: input, shape index: {}]
  %s4 = inlined_call_operand.hbm [shape: bf16[32,32], index: 4, kind: input, shape index: {}]
  %s5 = inlined_call_operand.hbm [shape: bf16[32,32], index: 5, kind: input, shape index: {}]
  %s6 = inlined_call_operand.vmem [shape: f32[1,32], index: 6, kind: input, shape index: {}]
  %s7 = inlined_call_operand.vmem [shape: f32[1,32], index: 7, kind: input, shape index: {}]
  %s8 = inlined_call_operand.vmem [shape: f32[1,32], index: 8, kind: input, shape index: {}]
  %s9 = inlined_call_operand.vmem [shape: f32[1,32], index: 9, kind: input, shape index: {}]
  %s10 = inlined_call_operand.hbm [shape: f32[2,8,32], index: 10, kind: output, shape index: {}]
  %s11 = sld [smem:[#allocation0]]
  $region101: #{tpu_custom_call.1} parent=0
    _
  %s13 = ssub.s32 1, %s11
  %s14 = scalar_select 0, %s13, %s11
  $region1: #{tpu_custom_call.1} parent=0
    #allocation4 [shape = 'u8[4096]{0}', space=vmem, size = 0x1000, scoped, tag = 'input window, operand 0']
    #allocation5 [shape = 's32[2]{0}', space=sflag, size = 0x8, scoped, tag = 'scoped memory for tpu_custom_call.1']
    #allocation6 [shape = 's32[2]{0}', space=sflag, size = 0x8, scoped, tag = 'scoped memory for tpu_custom_call.1']
    #allocation7 [shape = 'u8[4096]{0}', space=vmem, size = 0x1000, scoped, tag = 'input window, operand 1']
    #allocation8 [shape = 's32[2]{0}', space=sflag, size = 0x8, scoped, tag = 'scoped memory for tpu_custom_call.1']
    #allocation9 [shape = 'u8[8192]{0}', space=vmem, size = 0x2000, scoped, tag = 'input window, operand 2, single buffered']
    #allocation10 [shape = 'u8[8192]{0}', space=vmem, size = 0x2000, scoped, tag = 'input window, operand 3, single buffered']
    #allocation11 [shape = 's32[1]{0}', space=sflag, size = 0x4, scoped, tag = 'scoped memory for tpu_custom_call.1']
    #allocation12 [shape = 'u8[8192]{0}', space=vmem, size = 0x2000, scoped, tag = 'input window, operand 4, single buffered']
    #allocation13 [shape = 'u8[8192]{0}', space=vmem, size = 0x2000, scoped, tag = 'input window, operand 5, single buffered']
    #allocation14 [shape = 's32[1]{0}', space=sflag, size = 0x4, scoped, tag = 'scoped memory for tpu_custom_call.1']
    #allocation15 [shape = 'u8[8192]{0}', space=vmem, size = 0x2000, scoped, tag = 'output window, operand 0']
    %15 = vsyncpa [#allocation5], 0
    %s16 = scalar_lea.sflag [#allocation5], 1
    %17 = vsyncpa %s16, 0
    %18 = vsyncpa [#allocation8], 0
    %s19 = scalar_lea.sflag [#allocation8], 1
    %20 = vsyncpa %s19, 0
    %21 = vsyncpa [#allocation11], 0
    %22 = vsyncpa [#allocation14], 0
    %23 = vsyncpa [#allocation6], 0
    %s24 = scalar_lea.sflag [#allocation6], 1
    %25 = vsyncpa %s24, 0
    loop: start=0, step=1, limit=4
    $region2: #{tpu_custom_call.1} parent=1 // loop_pre_header
      _
    $region3: #{tpu_custom_call.1} parent=1 // loop_header
      %s27 = sphi 0, %s31
      %p28 = scmp.ge.s32.totalorder %s27, 4
      %s34 = sphi 0, %s46
      %s35 = sphi 0, %s42
      %s36 = sphi 0, %s34
      %s37 = sphi 0, %s35
      %s38 = sphi 0, %s36
      %s39 = sphi 0, %s37
      %s51 = sphi 0, %s53
      %s54 = sphi 0, %s51
      %s55 = sphi 0, %s54
      %s71 = sphi 0, %s55
      %s77 = sphi 0, %s79
      %s80 = sphi 0, %s77
      %s81 = sphi 0, %s80
      %s97 = sphi 0, %s81
      %s101 = sphi 0, %s101
      %s103 = sphi 0, %s101
      %s104 = sphi 0, %s103
      %s118 = sphi 0, %s104
      %s122 = sphi 0, %s122
      %s124 = sphi 0, %s122
      %s125 = sphi 0, %s124
      %s139 = sphi 0, %s125
      %s143 = sphi 0, %s143
      %s145 = sphi 0, %s143
      %s146 = sphi 0, %s145
      %s160 = sphi 0, %s146
      %s164 = sphi 0, %s164
      %s166 = sphi 0, %s164
      %s167 = sphi 0, %s166
      %s181 = sphi 0, %s167
      %s185 = sphi 0, %s185
      %s187 = sphi 0, %s185
      %s188 = sphi 0, %s187
      %s202 = sphi 0, %s188
      %s206 = sphi 0, %s206
      %s208 = sphi 0, %s206
      %s209 = sphi 0, %s208
      %s223 = sphi 0, %s209
      %s227 = sphi 0, %s227
      %s229 = sphi 0, %s227
      %s230 = sphi 0, %s229
      %s244 = sphi 0, %s230
      %s248 = sphi 0, %s248
      %s250 = sphi 0, %s248
      %s251 = sphi 0, %s250
      %s265 = sphi 0, %s251
      %s273 = sphi 0, %s275
      %s276 = sphi 0, %s273
      %s277 = sphi 0, %s276
      %s293 = sphi 0, %s277
    $region4: #{tpu_custom_call.1} parent=1 // loop_header_branch
      %30 = sbr.rel (%p28) target = $region8
    $region5: #{tpu_custom_call.1} parent=1 // loop_body
      %s32 = ssub.s32 %s27, 1
      %s33 = ssub.s32 %s27, 2
      %s40 = sadd.s32 1, %s35
      %p41 = scmp.ge.s32.totalorder %s40, 1
      %s42 = scalar_select %p41, 0, %s40
      %s43 = sadd.s32 1, %s34
      %s44 = scalar_select %p41, %s43, %s34
      %p45 = scmp.ge.s32.totalorder %s44, 2
      %s46 = scalar_select %p45, 0, %s44
      %s47 = ssub.s32 %s34, %s46
      %s48 = ssub.s32 %s35, %s42
      %s49 = sor.u32 %s47, %s48
      %p50 = scmp.eq.s32.totalorder %s49, 0
      %s52 = sadd.s32 %s51, 1
      %s53 = scalar_select %p50, %s51, %s52
      %p56 = pneg %p50
      %p57 = scmp.eq.s32.totalorder %s27, 1
      %p58 = por %p56, %p57
      %p59 = scmp.ne.s32.totalorder %s51, %s54
      %p60 = scmp.eq.s32.totalorder %s27, 0
      %p61 = por %p59, %p60
      %p62 = scmp.ne.s32.totalorder %s51, %s54
      %p63 = scmp.eq.s32.totalorder %s32, 1
      %p64 = por %p62, %p63
      %p65 = scmp.ne.s32.totalorder %s54, %s55
      %p66 = scmp.eq.s32.totalorder %s32, 0
      %p67 = por %p65, %p66
      %p68 = scmp.ne.s32.totalorder %s54, %s55
      %p69 = scmp.eq.s32.totalorder %s33, 1
      %p70 = por %p68, %p69
      %p72 = scmp.ne.s32.totalorder %s55, %s71
      %p73 = scmp.eq.s32.totalorder %s33, 0
      %p74 = por %p72, %p73
      %s75 = ssub.s32 %s34, %s46
      %p76 = scmp.eq.s32.totalorder %s75, 0
      %s78 = sadd.s32 %s77, 1
      %s79 = scalar_select %p76, %s77, %s78
      %p82 = pneg %p76
      %p83 = scmp.eq.s32.totalorder %s27, 1
      %p84 = por %p82, %p83
      %p85 = scmp.ne.s32.totalorder %s77, %s80
      %p86 = scmp.eq.s32.totalorder %s27, 0
      %p87 = por %p85, %p86
      %p88 = scmp.ne.s32.totalorder %s77, %s80
      %p89 = scmp.eq.s32.totalorder %s32, 1
      %p90 = por %p88, %p89
      %p91 = scmp.ne.s32.totalorder %s80, %s81
      %p92 = scmp.eq.s32.totalorder %s32, 0
      %p93 = por %p91, %p92
      %p94 = scmp.ne.s32.totalorder %s80, %s81
      %p95 = scmp.eq.s32.totalorder %s33, 1
      %p96 = por %p94, %p95
      %p98 = scmp.ne.s32.totalorder %s81, %s97
      %p99 = scmp.eq.s32.totalorder %s33, 0
      %p100 = por %p98, %p99
      %s102 = sadd.s32 %s101, 1
      %p105 = scmp.eq.s32.totalorder %s27, 1
      %p106 = scmp.ne.s32.totalorder %s101, %s103
      %p107 = scmp.eq.s32.totalorder %s27, 0
      %p108 = por %p106, %p107
      %p109 = scmp.ne.s32.totalorder %s101, %s103
      %p110 = scmp.eq.s32.totalorder %s32, 1
      %p111 = por %p109, %p110
      %p112 = scmp.ne.s32.totalorder %s103, %s104
      %p113 = scmp.eq.s32.totalorder %s32, 0
      %p114 = por %p112, %p113
      %p115 = scmp.ne.s32.totalorder %s103, %s104
      %p116 = scmp.eq.s32.totalorder %s33, 1
      %p117 = por %p115, %p116
      %p119 = scmp.ne.s32.totalorder %s104, %s118
      %p120 = scmp.eq.s32.totalorder %s33, 0
      %p121 = por %p119, %p120
      %s123 = sadd.s32 %s122, 1
      %p126 = scmp.eq.s32.totalorder %s27, 1
      %p127 = scmp.ne.s32.totalorder %s122, %s124
      %p128 = scmp.eq.s32.totalorder %s27, 0
      %p129 = por %p127, %p128
      %p130 = scmp.ne.s32.totalorder %s122, %s124
      %p131 = scmp.eq.s32.totalorder %s32, 1
      %p132 = por %p130, %p131
      %p133 = scmp.ne.s32.totalorder %s124, %s125
      %p134 = scmp.eq.s32.totalorder %s32, 0
      %p135 = por %p133, %p134
      %p136 = scmp.ne.s32.totalorder %s124, %s125
      %p137 = scmp.eq.s32.totalorder %s33, 1
      %p138 = por %p136, %p137
      %p140 = scmp.ne.s32.totalorder %s125, %s139
      %p141 = scmp.eq.s32.totalorder %s33, 0
      %p142 = por %p140, %p141
      %s144 = sadd.s32 %s143, 1
      %p147 = scmp.eq.s32.totalorder %s27, 1
      %p148 = scmp.ne.s32.totalorder %s143, %s145
      %p149 = scmp.eq.s32.totalorder %s27, 0
      %p150 = por %p148, %p149
      %p151 = scmp.ne.s32.totalorder %s143, %s145
      %p152 = scmp.eq.s32.totalorder %s32, 1
      %p153 = por %p151, %p152
      %p154 = scmp.ne.s32.totalorder %s145, %s146
      %p155 = scmp.eq.s32.totalorder %s32, 0
      %p156 = por %p154, %p155
      %p157 = scmp.ne.s32.totalorder %s145, %s146
      %p158 = scmp.eq.s32.totalorder %s33, 1
      %p159 = por %p157, %p158
      %p161 = scmp.ne.s32.totalorder %s146, %s160
      %p162 = scmp.eq.s32.totalorder %s33, 0
      %p163 = por %p161, %p162
      %s165 = sadd.s32 %s164, 1
      %p168 = scmp.eq.s32.totalorder %s27, 1
      %p169 = scmp.ne.s32.totalorder %s164, %s166
      %p170 = scmp.eq.s32.totalorder %s27, 0
      %p171 = por %p169, %p170
      %p172 = scmp.ne.s32.totalorder %s164, %s166
      %p173 = scmp.eq.s32.totalorder %s32, 1
      %p174 = por %p172, %p173
      %p175 = scmp.ne.s32.totalorder %s166, %s167
      %p176 = scmp.eq.s32.totalorder %s32, 0
      %p177 = por %p175, %p176
      %p178 = scmp.ne.s32.totalorder %s166, %s167
      %p179 = scmp.eq.s32.totalorder %s33, 1
      %p180 = por %p178, %p179
      %p182 = scmp.ne.s32.totalorder %s167, %s181
      %p183 = scmp.eq.s32.totalorder %s33, 0
      %p184 = por %p182, %p183
      %s186 = sadd.s32 %s185, 1
      %p189 = scmp.eq.s32.totalorder %s27, 1
      %p190 = scmp.ne.s32.totalorder %s185, %s187
      %p191 = scmp.eq.s32.totalorder %s27, 0
      %p192 = por %p190, %p191
      %p193 = scmp.ne.s32.totalorder %s185, %s187
      %p194 = scmp.eq.s32.totalorder %s32, 1
      %p195 = por %p193, %p194
      %p196 = scmp.ne.s32.totalorder %s187, %s188
      %p197 = scmp.eq.s32.totalorder %s32, 0
      %p198 = por %p196, %p197
      %p199 = scmp.ne.s32.totalorder %s187, %s188
      %p200 = scmp.eq.s32.totalorder %s33, 1
      %p201 = por %p199, %p200
      %p203 = scmp.ne.s32.totalorder %s188, %s202
      %p204 = scmp.eq.s32.totalorder %s33, 0
      %p205 = por %p203, %p204
      %s207 = sadd.s32 %s206, 1
      %p210 = scmp.eq.s32.totalorder %s27, 1
      %p211 = scmp.ne.s32.totalorder %s206, %s208
      %p212 = scmp.eq.s32.totalorder %s27, 0
      %p213 = por %p211, %p212
      %p214 = scmp.ne.s32.totalorder %s206, %s208
      %p215 = scmp.eq.s32.totalorder %s32, 1
      %p216 = por %p214, %p215
      %p217 = scmp.ne.s32.totalorder %s208, %s209
      %p218 = scmp.eq.s32.totalorder %s32, 0
      %p219 = por %p217, %p218
      %p220 = scmp.ne.s32.totalorder %s208, %s209
      %p221 = scmp.eq.s32.totalorder %s33, 1
      %p222 = por %p220, %p221
      %p224 = scmp.ne.s32.totalorder %s209, %s223
      %p225 = scmp.eq.s32.totalorder %s33, 0
      %p226 = por %p224, %p225
      %s228 = sadd.s32 %s227, 1
      %p231 = scmp.eq.s32.totalorder %s27, 1
      %p232 = scmp.ne.s32.totalorder %s227, %s229
      %p233 = scmp.eq.s32.totalorder %s27, 0
      %p234 = por %p232, %p233
      %p235 = scmp.ne.s32.totalorder %s227, %s229
      %p236 = scmp.eq.s32.totalorder %s32, 1
      %p237 = por %p235, %p236
      %p238 = scmp.ne.s32.totalorder %s229, %s230
      %p239 = scmp.eq.s32.totalorder %s32, 0
      %p240 = por %p238, %p239
      %p241 = scmp.ne.s32.totalorder %s229, %s230
      %p242 = scmp.eq.s32.totalorder %s33, 1
      %p243 = por %p241, %p242
      %p245 = scmp.ne.s32.totalorder %s230, %s244
      %p246 = scmp.eq.s32.totalorder %s33, 0
      %p247 = por %p245, %p246
      %s249 = sadd.s32 %s248, 1
      %p252 = scmp.eq.s32.totalorder %s27, 1
      %p253 = scmp.ne.s32.totalorder %s248, %s250
      %p254 = scmp.eq.s32.totalorder %s27, 0
      %p255 = por %p253, %p254
      %p256 = scmp.ne.s32.totalorder %s248, %s250
      %p257 = scmp.eq.s32.totalorder %s32, 1
      %p258 = por %p256, %p257
      %p259 = scmp.ne.s32.totalorder %s250, %s251
      %p260 = scmp.eq.s32.totalorder %s32, 0
      %p261 = por %p259, %p260
      %p262 = scmp.ne.s32.totalorder %s250, %s251
      %p263 = scmp.eq.s32.totalorder %s33, 1
      %p264 = por %p262, %p263
      %p266 = scmp.ne.s32.totalorder %s251, %s265
      %p267 = scmp.eq.s32.totalorder %s33, 0
      %p268 = por %p266, %p267
      %s269 = ssub.s32 %s34, %s46
      %s270 = ssub.s32 %s35, %s42
      %s271 = sor.u32 %s269, %s270
      %p272 = scmp.eq.s32.totalorder %s271, 0
      %s274 = sadd.s32 %s273, 1
      %s275 = scalar_select %p272, %s273, %s274
      %p278 = pneg %p272
      %p279 = scmp.eq.s32.totalorder %s27, 1
      %p280 = por %p278, %p279
      %p281 = scmp.ne.s32.totalorder %s273, %s276
      %p282 = scmp.eq.s32.totalorder %s27, 0
      %p283 = por %p281, %p282
      %p284 = scmp.ne.s32.totalorder %s273, %s276
      %p285 = scmp.eq.s32.totalorder %s32, 1
      %p286 = por %p284, %p285
      %p287 = scmp.ne.s32.totalorder %s276, %s277
      %p288 = scmp.eq.s32.totalorder %s32, 0
      %p289 = por %p287, %p288
      %p290 = scmp.ne.s32.totalorder %s276, %s277
      %p291 = scmp.eq.s32.totalorder %s33, 1
      %p292 = por %p290, %p291
      %p294 = scmp.ne.s32.totalorder %s277, %s293
      %p295 = scmp.eq.s32.totalorder %s33, 0
      %p296 = por %p294, %p295
      %p297 = scmp.le.s32.totalorder 1, %s27
      %p298 = scmp.lt.s32.totalorder %s27, 3
      %p299 = pnand %p297, %p298
      %p300 = pneg %p299
      // Predicated region
      $region9: #{tpu_custom_call.1} parent=5 // pred_check
        _
      $region10: #{tpu_custom_call.1} parent=5 // pred_check_branch
        %302 = sbr.rel (%p299) target = $region12
      $region11: #{tpu_custom_call.1} parent=5 // pred_region
        %s303 = ssub.s32 %s27, 1
        // Predicated region
        $region13: #{tpu_custom_call.1} parent=11 // pred_check
          %p304 = pneg %p114
        $region14: #{tpu_custom_call.1} parent=11 // pred_check_branch
          %306 = sbr.rel (%p304) target = $region16
        $region15: #{tpu_custom_call.1} parent=11 // pred_region
          %s308 = ssub.s32 256, 256
          %309 = vsyncadd [#allocation8], %s308
          %s310 = sshll.u32 [#allocation9], 4
          %s311 = int_to_ptr.vmem [resolvable:$true] %s310
          %316 = dma.hbm_to_vmem [thread:$0]  %s2, 256, %s311, [#allocation8], 64, 64, 4
        $region16: #{tpu_custom_call.1} parent=11 // pred_fallthru
          _
        // Predicated region
        $region17: #{tpu_custom_call.1} parent=11 // pred_check
          %p317 = pneg %p135
        $region18: #{tpu_custom_call.1} parent=11 // pred_check_branch
          %319 = sbr.rel (%p317) target = $region20
        $region19: #{tpu_custom_call.1} parent=11 // pred_region
          %s321 = ssub.s32 256, 256
          %322 = vsyncadd [#allocation11], %s321
          %s323 = sshll.u32 [#allocation10], 4
          %s324 = int_to_ptr.vmem [resolvable:$true] %s323
          %329 = dma.hbm_to_vmem [thread:$0]  %s3, 256, %s324, [#allocation11], 64, 64, 4
        $region20: #{tpu_custom_call.1} parent=11 // pred_fallthru
          _
        // Predicated region
        $region21: #{tpu_custom_call.1} parent=11 // pred_check
          %p330 = pneg %p156
        $region22: #{tpu_custom_call.1} parent=11 // pred_check_branch
          %332 = sbr.rel (%p330) target = $region24
        $region23: #{tpu_custom_call.1} parent=11 // pred_region
          %s334 = ssub.s32 256, 256
          %335 = vsyncadd [#allocation11], %s334
          %s336 = sshll.u32 [#allocation12], 4
          %s337 = int_to_ptr.vmem [resolvable:$true] %s336
          %342 = dma.hbm_to_vmem [thread:$0]  %s4, 256, %s337, [#allocation11], 64, 64, 4
        $region24: #{tpu_custom_call.1} parent=11 // pred_fallthru
          _
        // Predicated region
        $region25: #{tpu_custom_call.1} parent=11 // pred_check
          %p343 = pneg %p177
        $region26: #{tpu_custom_call.1} parent=11 // pred_check_branch
          %345 = sbr.rel (%p343) target = $region28
        $region27: #{tpu_custom_call.1} parent=11 // pred_region
          %s347 = ssub.s32 256, 256
          %348 = vsyncadd [#allocation14], %s347
          %s349 = sshll.u32 [#allocation13], 4
          %s350 = int_to_ptr.vmem [resolvable:$true] %s349
          %355 = dma.hbm_to_vmem [thread:$0]  %s5, 256, %s350, [#allocation14], 64, 64, 4
        $region28: #{tpu_custom_call.1} parent=11 // pred_fallthru
          _
        // Predicated region
        $region29: #{tpu_custom_call.1} parent=11 // pred_check
          %p356 = pneg %p198
        $region30: #{tpu_custom_call.1} parent=11 // pred_check_branch
          %358 = sbr.rel (%p356) target = $region32
        $region31: #{tpu_custom_call.1} parent=11 // pred_region
          _
        $region32: #{tpu_custom_call.1} parent=11 // pred_fallthru
          _
        // Predicated region
        $region33: #{tpu_custom_call.1} parent=11 // pred_check
          %p359 = pneg %p219
        $region34: #{tpu_custom_call.1} parent=11 // pred_check_branch
          %361 = sbr.rel (%p359) target = $region36
        $region35: #{tpu_custom_call.1} parent=11 // pred_region
          _
        $region36: #{tpu_custom_call.1} parent=11 // pred_fallthru
          _
        // Predicated region
        $region37: #{tpu_custom_call.1} parent=11 // pred_check
          %p362 = pneg %p240
        $region38: #{tpu_custom_call.1} parent=11 // pred_check_branch
          %364 = sbr.rel (%p362) target = $region40
        $region39: #{tpu_custom_call.1} parent=11 // pred_region
          _
        $region40: #{tpu_custom_call.1} parent=11 // pred_fallthru
          _
        // Predicated region
        $region41: #{tpu_custom_call.1} parent=11 // pred_check
          %p365 = pneg %p261
        $region42: #{tpu_custom_call.1} parent=11 // pred_check_branch
          %367 = sbr.rel (%p365) target = $region44
        $region43: #{tpu_custom_call.1} parent=11 // pred_region
          _
        $region44: #{tpu_custom_call.1} parent=11 // pred_fallthru
          _
      $region12: #{tpu_custom_call.1} parent=5 // pred_fallthru
        _
      %p368 = scmp.lt.s32.totalorder %s27, 2
      // Predicated region
      $region45: #{tpu_custom_call.1} parent=5 // pred_check
        %p369 = pneg %p368
      $region46: #{tpu_custom_call.1} parent=5 // pred_check_branch
        %371 = sbr.rel (%p369) target = $region48
      $region47: #{tpu_custom_call.1} parent=5 // pred_region
        // Predicated region
        $region49: #{tpu_custom_call.1} parent=47 // pred_check
          %p372 = pneg %p61
        $region50: #{tpu_custom_call.1} parent=47 // pred_check_branch
          %374 = sbr.rel (%p372) target = $region52
        $region51: #{tpu_custom_call.1} parent=47 // pred_region
          %s375 = sand.u32 %s51, 1
          %s376 = scalar_lea.sflag [#allocation5], %s375
          %s377 = sand.u32 %s51, 1
          %s378 = smul.addr %s377, 4
          %s379 = scalar_lea.vmem [#allocation4], %s378
          %s381 = ssub.s32 64, 64
          %382 = vsyncadd %s376, %s381
          %s383 = sadd.s32 %s35, %s34
          %s384 = smul.addr %s383, 64
          %s385 = scalar_lea.hbm %s0, %s384
          %s387 = sshll.u32 %s379, 4
          %s388 = int_to_ptr.vmem [resolvable:$true] %s387
          %390 = dma.hbm_to_vmem [thread:$0]  %s385, 64, %s388, %s376
        $region52: #{tpu_custom_call.1} parent=47 // pred_fallthru
          _
        // Predicated region
        $region53: #{tpu_custom_call.1} parent=47 // pred_check
          %p391 = pneg %p87
        $region54: #{tpu_custom_call.1} parent=47 // pred_check_branch
          %393 = sbr.rel (%p391) target = $region56
        $region55: #{tpu_custom_call.1} parent=47 // pred_region
          %s394 = sand.u32 %s27, 1
          %s395 = scalar_lea.sflag [#allocation8], %s394
          %s396 = sand.u32 %s77, 1
          %s397 = smul.addr %s396, 4
          %s398 = scalar_lea.vmem [#allocation7], %s397
          %s400 = ssub.s32 64, 64
          %401 = vsyncadd %s395, %s400
          %s402 = smul.addr %s34, 64
          %s403 = scalar_lea.hbm %s1, %s402
          %s405 = sshll.u32 %s398, 4
          %s406 = int_to_ptr.vmem [resolvable:$true] %s405
          %408 = dma.hbm_to_vmem [thread:$0]  %s403, 64, %s406, %s395
        $region56: #{tpu_custom_call.1} parent=47 // pred_fallthru
          _
      $region48: #{tpu_custom_call.1} parent=5 // pred_fallthru
        _
      %p409 = scmp.le.s32.totalorder 1, %s27
      %p410 = scmp.lt.s32.totalorder %s27, 3
      %p411 = pnand %p409, %p410
      %p412 = pneg %p411
      // Predicated region
      $region57: #{tpu_custom_call.1} parent=5 // pred_check
        _
      $region58: #{tpu_custom_call.1} parent=5 // pred_check_branch
        %414 = sbr.rel (%p411) target = $region60
      $region59: #{tpu_custom_call.1} parent=5 // pred_region
        %s415 = ssub.s32 %s27, 1
        %s416 = sand.u32 %s54, 1
        %s417 = scalar_lea.sflag [#allocation5], %s416
        %s418 = sand.u32 %s54, 1
        %s419 = smul.addr %s418, 4
        %s420 = scalar_lea.vmem [#allocation4], %s419
        // Predicated region
        $region61: #{tpu_custom_call.1} parent=59 // pred_check
          %p421 = pneg %p67
        $region62: #{tpu_custom_call.1} parent=59 // pred_check_branch
          %423 = sbr.rel (%p421) target = $region64
        $region63: #{tpu_custom_call.1} parent=59 // pred_region
          %424 = dma.done %s417, 64
        $region64: #{tpu_custom_call.1} parent=59 // pred_fallthru
          _
        %s425 = sand.u32 %s32, 1
        %s426 = scalar_lea.sflag [#allocation8], %s425
        %s427 = sand.u32 %s80, 1
        %s428 = smul.addr %s427, 4
        %s429 = scalar_lea.vmem [#allocation7], %s428
        // Predicated region
        $region65: #{tpu_custom_call.1} parent=59 // pred_check
          %p430 = pneg %p93
        $region66: #{tpu_custom_call.1} parent=59 // pred_check_branch
          %432 = sbr.rel (%p430) target = $region68
        $region67: #{tpu_custom_call.1} parent=59 // pred_region
          %433 = dma.done %s426, 64
        $region68: #{tpu_custom_call.1} parent=59 // pred_fallthru
          _
        // Predicated region
        $region69: #{tpu_custom_call.1} parent=59 // pred_check
          %p434 = pneg %p114
        $region70: #{tpu_custom_call.1} parent=59 // pred_check_branch
          %436 = sbr.rel (%p434) target = $region72
        $region71: #{tpu_custom_call.1} parent=59 // pred_region
          %437 = dma.done [#allocation8], 256
        $region72: #{tpu_custom_call.1} parent=59 // pred_fallthru
          _
        // Predicated region
        $region73: #{tpu_custom_call.1} parent=59 // pred_check
          %p438 = pneg %p135
        $region74: #{tpu_custom_call.1} parent=59 // pred_check_branch
          %440 = sbr.rel (%p438) target = $region76
        $region75: #{tpu_custom_call.1} parent=59 // pred_region
          %441 = dma.done [#allocation11], 256
        $region76: #{tpu_custom_call.1} parent=59 // pred_fallthru
          _
        // Predicated region
        $region77: #{tpu_custom_call.1} parent=59 // pred_check
          %p442 = pneg %p156
        $region78: #{tpu_custom_call.1} parent=59 // pred_check_branch
          %444 = sbr.rel (%p442) target = $region80
        $region79: #{tpu_custom_call.1} parent=59 // pred_region
          %445 = dma.done [#allocation11], 256
        $region80: #{tpu_custom_call.1} parent=59 // pred_fallthru
          _
        // Predicated region
        $region81: #{tpu_custom_call.1} parent=59 // pred_check
          %p446 = pneg %p177
        $region82: #{tpu_custom_call.1} parent=59 // pred_check_branch
          %448 = sbr.rel (%p446) target = $region84
        $region83: #{tpu_custom_call.1} parent=59 // pred_region
          %449 = dma.done [#allocation14], 256
        $region84: #{tpu_custom_call.1} parent=59 // pred_fallthru
          _
        %s450 = sand.u32 %s54, 1
        %s451 = scalar_lea.sflag [#allocation5], %s450
        %s452 = sand.u32 %s54, 1
        %s453 = smul.addr %s452, 4
        %s454 = scalar_lea.vmem [#allocation4], %s453
        %p455 = pneg %p67
        %p456 = pneg %p64
        %s457 = sand.u32 %s32, 1
        %s458 = scalar_lea.sflag [#allocation8], %s457
        %s459 = sand.u32 %s80, 1
        %s460 = smul.addr %s459, 4
        %s461 = scalar_lea.vmem [#allocation7], %s460
        %p462 = pneg %p93
        %p463 = pneg %p90
        %p464 = pneg %p114
        %p465 = pneg %p111
        %p466 = pneg %p135
        %p467 = pneg %p132
        %p468 = pneg %p156
        %p469 = pneg %p153
        %p470 = pneg %p177
        %p471 = pneg %p174
        %p472 = pneg %p198
        %p473 = pneg %p195
        %p474 = pneg %p219
        %p475 = pneg %p216
        %p476 = pneg %p240
        %p477 = pneg %p237
        %p478 = pneg %p261
        %p479 = pneg %p258
        %p480 = pneg %p289
        %p481 = pneg %p286
        %s482 = sand.u32 %s276, 1
        %s483 = scalar_lea.sflag [#allocation6], %s482
        %s484 = sand.u32 %s276, 1
        %s485 = smul.addr %s484, 8
        %s486 = scalar_lea.vmem [#allocation15], %s485
        %p488 = scmp.eq.s32.totalorder %s37, 0
        // Predicated region
        $region85: #{tpu_custom_call.1} parent=59 // pred_check
          %p489 = pneg %p488
        $region86: #{tpu_custom_call.1} parent=59 // pred_check_branch
          %491 = sbr.rel (%p489) target = $region88
        $region87: #{tpu_custom_call.1} parent=59 // pred_region
          %v492 = vld [vmem:[%s429] sm:$0xf]
          %v493 = vld [vmem:[#allocation10] sm:$0xf]
          %v494 = vld [vmem:[#allocation10 + $0x4] sm:$0xf]
          %v495 = vld [vmem:[#allocation10 + $0x8] sm:$0xf]
          %v496 = vld [vmem:[#allocation10 + $0xc] sm:$0xf]
          %v497 = vld [vmem:[%s7] sm:$0x1]
          %v499 = vlaneseq
          %v500 = vshrl.u32 %v499, 7
          %v501 = vsub.s32 0, %v500
          %v502 = vrot.slane %v497, %v501
          %v508 = vunpack.c.l.b16 %v493
          %v509 = vunpack.c.l.b16 %v494
          %v510 = vunpack.c.l.b16 %v495
          %v511 = vunpack.c.l.b16 %v496
          %v512 = vpack.c.b16 %v509, %v508
          %v513 = vpack.c.b16 %v511, %v510
          %vm516 = vcmask 261120
          %v518 = vsel %vm516, %v492, 0
          %520 = vmatprep.subr.bf16.mxu0 0
          %521 = vmatpush1.bf16.msra.mxu0 0
          %522 = vmatprep.subr.bf16.mxu0 0
          %523 = vmatpush1.bf16.msra.mxu0 0
          %524 = vmatprep.subr.bf16.mxu0 0
          %525 = vmatpush1.bf16.msra.mxu0 0
          %526 = vmatprep.subr.bf16.mxu0 0
          %527 = vmatpush1.bf16.msra.mxu0 0
          %528 = vmatprep.subr.bf16.mxu0 0
          %529 = vmatpush1.bf16.msra.mxu0 0
          %530 = vmatprep.subr.bf16.mxu0 0
          %531 = vmatpush1.bf16.msra.mxu0 0
          %532 = vmatprep.subr.bf16.mxu0 0
          %533 = vmatpush1.bf16.msra.mxu0 %v513
          %534 = vmatprep.subr.bf16.mxu0 0
          %535 = vmatpush1.bf16.msra.mxu0 %v512
          %536 = vmatprep.subr.bf16.mxu0 0
          %537 = vmatpush2.bf16.msra.mxu0 0
          %538 = vmatprep.subr.bf16.mxu0 0
          %539 = vmatpush2.bf16.msra.mxu0 0
          %540 = vmatprep.subr.bf16.mxu0 0
          %541 = vmatpush2.bf16.msra.mxu0 0
          %542 = vmatprep.subr.bf16.mxu0 0
          %543 = vmatpush2.bf16.msra.mxu0 0
          %544 = vmatprep.subr.bf16.mxu0 0
          %545 = vmatpush2.bf16.msra.mxu0 0
          %546 = vmatprep.subr.bf16.mxu0 0
          %547 = vmatpush2.bf16.msra.mxu0 0
          %548 = vmatprep.subr.bf16.mxu0 0
          %549 = vmatpush2.bf16.msra.mxu0 0
          %550 = vmatprep.subr.bf16.mxu0 0
          %551 = vmatpush2.bf16.msra.mxu0 0
          %552 = vmatprep.mubr.bf16.mxu0 0
          %553 = vmatmul.mubr.bf16.gmra.mxu0 %v518
          %v554 = vpop.f32.mrf.mxu0
          %v555 = vadd.f32 %v502, %v554
          %v556 = vpop.f32.mrf.mxu0
          %v557 = vpop.f32.mrf.mxu0
          %v558 = vpop.f32.mrf.mxu0
          %559 = vdwg.mxu0
          %v560 = vld [vmem:[#allocation12] sm:$0xf]
          %v561 = vld [vmem:[#allocation12 + $0x4] sm:$0xf]
          %v562 = vld [vmem:[#allocation12 + $0x8] sm:$0xf]
          %v563 = vld [vmem:[#allocation12 + $0xc] sm:$0xf]
          %v564 = vld [vmem:[%s8] sm:$0x1]
          %v566 = vlaneseq
          %v567 = vshrl.u32 %v566, 7
          %v568 = vsub.s32 0, %v567
          %v569 = vrot.slane %v564, %v568
          %v575 = vunpack.c.l.b16 %v560
          %v576 = vunpack.c.l.b16 %v561
          %v577 = vunpack.c.l.b16 %v562
          %v578 = vunpack.c.l.b16 %v563
          %v579 = vpack.c.b16 %v576, %v575
          %v580 = vpack.c.b16 %v578, %v577
          %583 = vmatprep.subr.bf16.mxu0 0
          %584 = vmatpush1.bf16.msra.mxu0 0
          %585 = vmatprep.subr.bf16.mxu0 0
          %586 = vmatpush1.bf16.msra.mxu0 0
          %587 = vmatprep.subr.bf16.mxu0 0
          %588 = vmatpush1.bf16.msra.mxu0 0
          %589 = vmatprep.subr.bf16.mxu0 0
          %590 = vmatpush1.bf16.msra.mxu0 0
          %591 = vmatprep.subr.bf16.mxu0 0
          %592 = vmatpush1.bf16.msra.mxu0 0
          %593 = vmatprep.subr.bf16.mxu0 0
          %594 = vmatpush1.bf16.msra.mxu0 0
          %595 = vmatprep.subr.bf16.mxu0 0
          %596 = vmatpush1.bf16.msra.mxu0 %v580
          %597 = vmatprep.subr.bf16.mxu0 0
          %598 = vmatpush1.bf16.msra.mxu0 %v579
          %599 = vmatprep.subr.bf16.mxu0 0
          %600 = vmatpush2.bf16.msra.mxu0 0
          %601 = vmatprep.subr.bf16.mxu0 0
          %602 = vmatpush2.bf16.msra.mxu0 0
          %603 = vmatprep.subr.bf16.mxu0 0
          %604 = vmatpush2.bf16.msra.mxu0 0
          %605 = vmatprep.subr.bf16.mxu0 0
          %606 = vmatpush2.bf16.msra.mxu0 0
          %607 = vmatprep.subr.bf16.mxu0 0
          %608 = vmatpush2.bf16.msra.mxu0 0
          %609 = vmatprep.subr.bf16.mxu0 0
          %610 = vmatpush2.bf16.msra.mxu0 0
          %611 = vmatprep.subr.bf16.mxu0 0
          %612 = vmatpush2.bf16.msra.mxu0 0
          %613 = vmatprep.subr.bf16.mxu0 0
          %614 = vmatpush2.bf16.msra.mxu0 0
          %615 = vmatprep.mubr.bf16.mxu0 0
          %616 = vmatmul.mubr.bf16.gmra.mxu0 %v518
          %v617 = vpop.f32.mrf.mxu0
          %v618 = vadd.f32 %v569, %v617
          %v619 = vpop.f32.mrf.mxu0
          %v620 = vpop.f32.mrf.mxu0
          %v621 = vpop.f32.mrf.mxu0
          %622 = vdwg.mxu0
          %v623 = vpack.c.bf16 %v555, %v555
          %vm624 = vcmask 257024
          %625 = vst.msk [vmem:[#allocation2] sm:$0xf] %vm624, %v623
          %v626 = vpack.c.bf16 %v618, %v618
          %627 = vst.msk [vmem:[#allocation3] sm:$0xf] %vm624, %v626
        $region88: #{tpu_custom_call.1} parent=59 // pred_fallthru
          _
        %v628 = vld [vmem:[%s420] sm:$0xf]
        %v629 = vld [vmem:[#allocation9] sm:$0xf]
        %v630 = vld [vmem:[#allocation9 + $0x4] sm:$0xf]
        %v631 = vld [vmem:[#allocation9 + $0x8] sm:$0xf]
        %v632 = vld [vmem:[#allocation9 + $0xc] sm:$0xf]
        %v633 = vld [vmem:[%s6] sm:$0x1]
        %v635 = vlaneseq
        %v636 = vshrl.u32 %v635, 7
        %v637 = vsub.s32 0, %v636
        %v638 = vrot.slane %v633, %v637
        %v644 = vunpack.c.l.b16 %v629
        %v645 = vunpack.c.l.b16 %v630
        %v646 = vunpack.c.l.b16 %v631
        %v647 = vunpack.c.l.b16 %v632
        %v648 = vpack.c.b16 %v645, %v644
        %v649 = vpack.c.b16 %v647, %v646
        %vm652 = vcmask 261120
        %v654 = vsel %vm652, %v628, 0
        %656 = vmatprep.subr.bf16.mxu0 0
        %657 = vmatpush1.bf16.msra.mxu0 0
        %658 = vmatprep.subr.bf16.mxu0 0
        %659 = vmatpush1.bf16.msra.mxu0 0
        %660 = vmatprep.subr.bf16.mxu0 0
        %661 = vmatpush1.bf16.msra.mxu0 0
        %662 = vmatprep.subr.bf16.mxu0 0
        %663 = vmatpush1.bf16.msra.mxu0 0
        %664 = vmatprep.subr.bf16.mxu0 0
        %665 = vmatpush1.bf16.msra.mxu0 0
        %666 = vmatprep.subr.bf16.mxu0 0
        %667 = vmatpush1.bf16.msra.mxu0 0
        %668 = vmatprep.subr.bf16.mxu0 0
        %669 = vmatpush1.bf16.msra.mxu0 %v649
        %670 = vmatprep.subr.bf16.mxu0 0
        %671 = vmatpush1.bf16.msra.mxu0 %v648
        %672 = vmatprep.subr.bf16.mxu0 0
        %673 = vmatpush2.bf16.msra.mxu0 0
        %674 = vmatprep.subr.bf16.mxu0 0
        %675 = vmatpush2.bf16.msra.mxu0 0
        %676 = vmatprep.subr.bf16.mxu0 0
        %677 = vmatpush2.bf16.msra.mxu0 0
        %678 = vmatprep.subr.bf16.mxu0 0
        %679 = vmatpush2.bf16.msra.mxu0 0
        %680 = vmatprep.subr.bf16.mxu0 0
        %681 = vmatpush2.bf16.msra.mxu0 0
        %682 = vmatprep.subr.bf16.mxu0 0
        %683 = vmatpush2.bf16.msra.mxu0 0
        %684 = vmatprep.subr.bf16.mxu0 0
        %685 = vmatpush2.bf16.msra.mxu0 0
        %686 = vmatprep.subr.bf16.mxu0 0
        %687 = vmatpush2.bf16.msra.mxu0 0
        %688 = vmatprep.mubr.bf16.mxu0 0
        %689 = vmatmul.mubr.bf16.gmra.mxu0 %v654
        %v690 = vpop.f32.mrf.mxu0
        %v691 = vadd.f32 %v638, %v690
        %v692 = vpop.f32.mrf.mxu0
        %v693 = vpop.f32.mrf.mxu0
        %v694 = vpop.f32.mrf.mxu0
        %695 = vdwg.mxu0
        %v696 = vpack.c.bf16 %v691, %v691
        %v697 = vld [vmem:[#allocation2] sm:$0xf]
        %v698 = vld [vmem:[#allocation3] sm:$0xf]
        %vm699 = vcmask 64512
        %v701 = vsel %vm699, %v696, 0
        %v704 = vsel %vm699, %v697, 0
        %706 = vmatprep.subr.bf16.mxu0 0
        %707 = vmatpush1.bf16.xpose.msra.mxu0 0
        %708 = vmatprep.subr.bf16.mxu0 0
        %709 = vmatpush1.bf16.xpose.msra.mxu0 0
        %710 = vmatprep.subr.bf16.mxu0 0
        %711 = vmatpush1.bf16.xpose.msra.mxu0 0
        %712 = vmatprep.subr.bf16.mxu0 0
        %713 = vmatpush1.bf16.xpose.msra.mxu0 0
        %714 = vmatprep.subr.bf16.mxu0 0
        %715 = vmatpush1.bf16.xpose.msra.mxu0 0
        %716 = vmatprep.subr.bf16.mxu0 0
        %717 = vmatpush1.bf16.xpose.msra.mxu0 0
        %718 = vmatprep.subr.bf16.mxu0 0
        %719 = vmatpush1.bf16.xpose.msra.mxu0 0
        %720 = vmatprep.subr.bf16.mxu0 0
        %721 = vmatpush1.bf16.xpose.msra.mxu0 %v704
        %722 = vmatprep.subr.bf16.mxu0 0
        %723 = vmatpush2.bf16.xpose.msra.mxu0 0
        %724 = vmatprep.subr.bf16.mxu0 0
        %725 = vmatpush2.bf16.xpose.msra.mxu0 0
        %726 = vmatprep.subr.bf16.mxu0 0
        %727 = vmatpush2.bf16.xpose.msra.mxu0 0
        %728 = vmatprep.subr.bf16.mxu0 0
        %729 = vmatpush2.bf16.xpose.msra.mxu0 0
        %730 = vmatprep.subr.bf16.mxu0 0
        %731 = vmatpush2.bf16.xpose.msra.mxu0 0
        %732 = vmatprep.subr.bf16.mxu0 0
        %733 = vmatpush2.bf16.xpose.msra.mxu0 0
        %734 = vmatprep.subr.bf16.mxu0 0
        %735 = vmatpush2.bf16.xpose.msra.mxu0 0
        %736 = vmatprep.subr.bf16.mxu0 0
        %737 = vmatpush2.bf16.xpose.msra.mxu0 0
        %738 = vmatprep.mubr.bf16.mxu0 0
        %739 = vmatmul.mubr.bf16.gmra.mxu0 %v701
        %v740 = vpop.f32.mrf.mxu0
        %v741 = vadd.f32 0.0, %v740
        %v742 = vpop.f32.mrf.mxu0
        %v743 = vpop.f32.mrf.mxu0
        %v744 = vpop.f32.mrf.mxu0
        %745 = vdwg.mxu0
        %v746 = vsel %vm699, %v741, -inf
        %747 = vmax.xlane.f32.xlu0 %v746
        %v748 = vpop.xlane.xlu0 %747
        %v749 = vsub.f32 %v741, %v748
        %v750 = vmul.f32 %v749, 1.442695
        %v751 = vpow.pop %v750
        %v752 = vsel %vm699, %v751, 0.0
        %753 = vadd.xlane.f32.xlu0 %v752
        %v754 = vpop.xlane.xlu0 %753
        %v755 = vpack.c.bf16 %v751, %v751
        %v757 = vsel %vm699, %v755, 0
        %vm759 = vcmask 1043456
        %v761 = vsel %vm759, %v698, 0
        %763 = vmatprep.subr.bf16.mxu0 0
        %764 = vmatpush1.bf16.msra.mxu0 0
        %765 = vmatprep.subr.bf16.mxu0 0
        %766 = vmatpush1.bf16.msra.mxu0 0
        %767 = vmatprep.subr.bf16.mxu0 0
        %768 = vmatpush1.bf16.msra.mxu0 0
        %769 = vmatprep.subr.bf16.mxu0 0
        %770 = vmatpush1.bf16.msra.mxu0 0
        %771 = vmatprep.subr.bf16.mxu0 0
        %772 = vmatpush1.bf16.msra.mxu0 0
        %773 = vmatprep.subr.bf16.mxu0 0
        %774 = vmatpush1.bf16.msra.mxu0 0
        %775 = vmatprep.subr.bf16.mxu0 0
        %776 = vmatpush1.bf16.msra.mxu0 0
        %777 = vmatprep.subr.bf16.mxu0 0
        %778 = vmatpush1.bf16.msra.mxu0 %v761
        %779 = vmatprep.subr.bf16.mxu0 0
        %780 = vmatpush2.bf16.msra.mxu0 0
        %781 = vmatprep.subr.bf16.mxu0 0
        %782 = vmatpush2.bf16.msra.mxu0 0
        %783 = vmatprep.subr.bf16.mxu0 0
        %784 = vmatpush2.bf16.msra.mxu0 0
        %785 = vmatprep.subr.bf16.mxu0 0
        %786 = vmatpush2.bf16.msra.mxu0 0
        %787 = vmatprep.subr.bf16.mxu0 0
        %788 = vmatpush2.bf16.msra.mxu0 0
        %789 = vmatprep.subr.bf16.mxu0 0
        %790 = vmatpush2.bf16.msra.mxu0 0
        %791 = vmatprep.subr.bf16.mxu0 0
        %792 = vmatpush2.bf16.msra.mxu0 0
        %793 = vmatprep.subr.bf16.mxu0 0
        %794 = vmatpush2.bf16.msra.mxu0 0
        %795 = vmatprep.mubr.bf16.mxu0 0
        %796 = vmatmul.mubr.bf16.gmra.mxu0 %v757
        %v797 = vpop.f32.mrf.mxu0
        %v798 = vadd.f32 0.0, %v797
        %v799 = vpop.f32.mrf.mxu0
        %v800 = vpop.f32.mrf.mxu0
        %v801 = vpop.f32.mrf.mxu0
        %802 = vdwg.mxu0
        %v803 = vrcp.pop %v754
        %v804 = vmul.f32 %v798, %v803
        %v805 = vpack.c.bf16 %v804, %v804
        %v806 = vld [vmem:[#allocation13] sm:$0xf]
        %808 = vrot.lane.b32.xlu0 %v696, 120
        %v809 = vpop.permute.xlu0 %808
        %v811 = vunpack.c.l.b16 %v697
        %v812 = vpack.c.b16 %v811, %v811
        %813 = vrot.lane.b32.xlu0 %v812, 120
        %v814 = vpop.permute.xlu0 %813
        %v816 = vsel %vm699, %v809, 0
        %v819 = vsel %vm699, %v814, 0
        %821 = vmatprep.subr.bf16.mxu0 0
        %822 = vmatpush1.bf16.xpose.msra.mxu0 0
        %823 = vmatprep.subr.bf16.mxu0 0
        %824 = vmatpush1.bf16.xpose.msra.mxu0 0
        %825 = vmatprep.subr.bf16.mxu0 0
        %826 = vmatpush1.bf16.xpose.msra.mxu0 0
        %827 = vmatprep.subr.bf16.mxu0 0
        %828 = vmatpush1.bf16.xpose.msra.mxu0 0
        %829 = vmatprep.subr.bf16.mxu0 0
        %830 = vmatpush1.bf16.xpose.msra.mxu0 0
        %831 = vmatprep.subr.bf16.mxu0 0
        %832 = vmatpush1.bf16.xpose.msra.mxu0 0
        %833 = vmatprep.subr.bf16.mxu0 0
        %834 = vmatpush1.bf16.xpose.msra.mxu0 0
        %835 = vmatprep.subr.bf16.mxu0 0
        %836 = vmatpush1.bf16.xpose.msra.mxu0 %v819
        %837 = vmatprep.subr.bf16.mxu0 0
        %838 = vmatpush2.bf16.xpose.msra.mxu0 0
        %839 = vmatprep.subr.bf16.mxu0 0
        %840 = vmatpush2.bf16.xpose.msra.mxu0 0
        %841 = vmatprep.subr.bf16.mxu0 0
        %842 = vmatpush2.bf16.xpose.msra.mxu0 0
        %843 = vmatprep.subr.bf16.mxu0 0
        %844 = vmatpush2.bf16.xpose.msra.mxu0 0
        %845 = vmatprep.subr.bf16.mxu0 0
        %846 = vmatpush2.bf16.xpose.msra.mxu0 0
        %847 = vmatprep.subr.bf16.mxu0 0
        %848 = vmatpush2.bf16.xpose.msra.mxu0 0
        %849 = vmatprep.subr.bf16.mxu0 0
        %850 = vmatpush2.bf16.xpose.msra.mxu0 0
        %851 = vmatprep.subr.bf16.mxu0 0
        %852 = vmatpush2.bf16.xpose.msra.mxu0 0
        %853 = vmatprep.mubr.bf16.mxu0 0
        %854 = vmatmul.mubr.bf16.gmra.mxu0 %v816
        %v855 = vpop.f32.mrf.mxu0
        %v856 = vadd.f32 0.0, %v855
        %v857 = vpop.f32.mrf.mxu0
        %v858 = vpop.f32.mrf.mxu0
        %v859 = vpop.f32.mrf.mxu0
        %860 = vdwg.mxu0
        %v861 = vsel %vm699, %v856, -inf
        %862 = vmax.xlane.f32.xlu0 %v861
        %v863 = vpop.xlane.xlu0 %862
        %v864 = vsub.f32 %v856, %v863
        %v865 = vmul.f32 %v864, 1.442695
        %v866 = vpow.pop %v865
        %v867 = vsel %vm699, %v866, 0.0
        %868 = vadd.xlane.f32.xlu0 %v867
        %v869 = vpop.xlane.xlu0 %868
        %v870 = vpack.c.bf16 %v866, %v866
        %v872 = vunpack.c.l.b16 %v698
        %v873 = vpack.c.b16 %v872, %v872
        %874 = vrot.lane.b32.xlu0 %v873, 120
        %v875 = vpop.permute.xlu0 %874
        %v877 = vsel %vm699, %v870, 0
        %v880 = vsel %vm759, %v875, 0
        %882 = vmatprep.subr.bf16.mxu0 0
        %883 = vmatpush1.bf16.msra.mxu0 0
        %884 = vmatprep.subr.bf16.mxu0 0
        %885 = vmatpush1.bf16.msra.mxu0 0
        %886 = vmatprep.subr.bf16.mxu0 0
        %887 = vmatpush1.bf16.msra.mxu0 0
        %888 = vmatprep.subr.bf16.mxu0 0
        %889 = vmatpush1.bf16.msra.mxu0 0
        %890 = vmatprep.subr.bf16.mxu0 0
        %891 = vmatpush1.bf16.msra.mxu0 0
        %892 = vmatprep.subr.bf16.mxu0 0
        %893 = vmatpush1.bf16.msra.mxu0 0
        %894 = vmatprep.subr.bf16.mxu0 0
        %895 = vmatpush1.bf16.msra.mxu0 0
        %896 = vmatprep.subr.bf16.mxu0 0
        %897 = vmatpush1.bf16.msra.mxu0 %v880
        %898 = vmatprep.subr.bf16.mxu0 0
        %899 = vmatpush2.bf16.msra.mxu0 0
        %900 = vmatprep.subr.bf16.mxu0 0
        %901 = vmatpush2.bf16.msra.mxu0 0
        %902 = vmatprep.subr.bf16.mxu0 0
        %903 = vmatpush2.bf16.msra.mxu0 0
        %904 = vmatprep.subr.bf16.mxu0 0
        %905 = vmatpush2.bf16.msra.mxu0 0
        %906 = vmatprep.subr.bf16.mxu0 0
        %907 = vmatpush2.bf16.msra.mxu0 0
        %908 = vmatprep.subr.bf16.mxu0 0
        %909 = vmatpush2.bf16.msra.mxu0 0
        %910 = vmatprep.subr.bf16.mxu0 0
        %911 = vmatpush2.bf16.msra.mxu0 0
        %912 = vmatprep.subr.bf16.mxu0 0
        %913 = vmatpush2.bf16.msra.mxu0 0
        %914 = vmatprep.mubr.bf16.mxu0 0
        %915 = vmatmul.mubr.bf16.gmra.mxu0 %v877
        %v916 = vpop.f32.mrf.mxu0
        %v917 = vadd.f32 0.0, %v916
        %v918 = vpop.f32.mrf.mxu0
        %v919 = vpop.f32.mrf.mxu0
        %v920 = vpop.f32.mrf.mxu0
        %921 = vdwg.mxu0
        %v922 = vrcp.pop %v869
        %v923 = vmul.f32 %v917, %v922
        %v924 = vpack.c.bf16 %v923, %v923
        %v925 = vld [vmem:[#allocation13 + $0x4] sm:$0xf]
        %v927 = vsel %vm699, %v924, 0
        %v930 = vsel %vm759, %v925, 0
        %932 = vmatprep.subr.bf16.mxu0 0
        %933 = vmatpush1.bf16.msra.mxu0 0
        %934 = vmatprep.subr.bf16.mxu0 0
        %935 = vmatpush1.bf16.msra.mxu0 0
        %936 = vmatprep.subr.bf16.mxu0 0
        %937 = vmatpush1.bf16.msra.mxu0 0
        %938 = vmatprep.subr.bf16.mxu0 0
        %939 = vmatpush1.bf16.msra.mxu0 0
        %940 = vmatprep.subr.bf16.mxu0 0
        %941 = vmatpush1.bf16.msra.mxu0 0
        %942 = vmatprep.subr.bf16.mxu0 0
        %943 = vmatpush1.bf16.msra.mxu0 0
        %944 = vmatprep.subr.bf16.mxu0 0
        %945 = vmatpush1.bf16.msra.mxu0 0
        %946 = vmatprep.subr.bf16.mxu0 0
        %947 = vmatpush1.bf16.msra.mxu0 %v930
        %948 = vmatprep.subr.bf16.mxu0 0
        %949 = vmatpush2.bf16.msra.mxu0 0
        %950 = vmatprep.subr.bf16.mxu0 0
        %951 = vmatpush2.bf16.msra.mxu0 0
        %952 = vmatprep.subr.bf16.mxu0 0
        %953 = vmatpush2.bf16.msra.mxu0 0
        %954 = vmatprep.subr.bf16.mxu0 0
        %955 = vmatpush2.bf16.msra.mxu0 0
        %956 = vmatprep.subr.bf16.mxu0 0
        %957 = vmatpush2.bf16.msra.mxu0 0
        %958 = vmatprep.subr.bf16.mxu0 0
        %959 = vmatpush2.bf16.msra.mxu0 0
        %960 = vmatprep.subr.bf16.mxu0 0
        %961 = vmatpush2.bf16.msra.mxu0 0
        %962 = vmatprep.subr.bf16.mxu0 0
        %963 = vmatpush2.bf16.msra.mxu0 0
        %964 = vmatprep.mubr.bf16.mxu0 0
        %965 = vmatmul.mubr.bf16.gmra.mxu0 %v927
        %v966 = vpop.f32.mrf.mxu0
        %v967 = vadd.f32 0.0, %v966
        %v968 = vpop.f32.mrf.mxu0
        %v969 = vpop.f32.mrf.mxu0
        %v970 = vpop.f32.mrf.mxu0
        %971 = vdwg.mxu0
        %v973 = vsel %vm699, %v805, 0
        %v976 = vsel %vm759, %v806, 0
        %978 = vmatprep.subr.bf16.mxu0 0
        %979 = vmatpush1.bf16.msra.mxu0 0
        %980 = vmatprep.subr.bf16.mxu0 0
        %981 = vmatpush1.bf16.msra.mxu0 0
        %982 = vmatprep.subr.bf16.mxu0 0
        %983 = vmatpush1.bf16.msra.mxu0 0
        %984 = vmatprep.subr.bf16.mxu0 0
        %985 = vmatpush1.bf16.msra.mxu0 0
        %986 = vmatprep.subr.bf16.mxu0 0
        %987 = vmatpush1.bf16.msra.mxu0 0
        %988 = vmatprep.subr.bf16.mxu0 0
        %989 = vmatpush1.bf16.msra.mxu0 0
        %990 = vmatprep.subr.bf16.mxu0 0
        %991 = vmatpush1.bf16.msra.mxu0 0
        %992 = vmatprep.subr.bf16.mxu0 0
        %993 = vmatpush1.bf16.msra.mxu0 %v976
        %994 = vmatprep.subr.bf16.mxu0 0
        %995 = vmatpush2.bf16.msra.mxu0 0
        %996 = vmatprep.subr.bf16.mxu0 0
        %997 = vmatpush2.bf16.msra.mxu0 0
        %998 = vmatprep.subr.bf16.mxu0 0
        %999 = vmatpush2.bf16.msra.mxu0 0
        %1000 = vmatprep.subr.bf16.mxu0 0
        %1001 = vmatpush2.bf16.msra.mxu0 0
        %1002 = vmatprep.subr.bf16.mxu0 0
        %1003 = vmatpush2.bf16.msra.mxu0 0
        %1004 = vmatprep.subr.bf16.mxu0 0
        %1005 = vmatpush2.bf16.msra.mxu0 0
        %1006 = vmatprep.subr.bf16.mxu0 0
        %1007 = vmatpush2.bf16.msra.mxu0 0
        %1008 = vmatprep.subr.bf16.mxu0 0
        %1009 = vmatpush2.bf16.msra.mxu0 0
        %1010 = vmatprep.mubr.bf16.mxu0 0
        %1011 = vmatmul.mubr.bf16.gmra.mxu0 %v973
        %v1012 = vpop.f32.mrf.mxu0
        %v1013 = vadd.f32 %v967, %v1012
        %v1014 = vpop.f32.mrf.mxu0
        %v1015 = vpop.f32.mrf.mxu0
        %v1016 = vpop.f32.mrf.mxu0
        %1017 = vdwg.mxu0
        %1018 = vrot.lane.b32.xlu0 %v696, 112
        %v1019 = vpop.permute.xlu0 %1018
        %1020 = vrot.lane.b32.xlu0 %v812, 112
        %v1021 = vpop.permute.xlu0 %1020
        %v1023 = vsel %vm699, %v1019, 0
        %v1026 = vsel %vm699, %v1021, 0
        %1028 = vmatprep.subr.bf16.mxu0 0
        %1029 = vmatpush1.bf16.xpose.msra.mxu0 0
        %1030 = vmatprep.subr.bf16.mxu0 0
        %1031 = vmatpush1.bf16.xpose.msra.mxu0 0
        %1032 = vmatprep.subr.bf16.mxu0 0
        %1033 = vmatpush1.bf16.xpose.msra.mxu0 0
        %1034 = vmatprep.subr.bf16.mxu0 0
        %1035 = vmatpush1.bf16.xpose.msra.mxu0 0
        %1036 = vmatprep.subr.bf16.mxu0 0
        %1037 = vmatpush1.bf16.xpose.msra.mxu0 0
        %1038 = vmatprep.subr.bf16.mxu0 0
        %1039 = vmatpush1.bf16.xpose.msra.mxu0 0
        %1040 = vmatprep.subr.bf16.mxu0 0
        %1041 = vmatpush1.bf16.xpose.msra.mxu0 0
        %1042 = vmatprep.subr.bf16.mxu0 0
        %1043 = vmatpush1.bf16.xpose.msra.mxu0 %v1026
        %1044 = vmatprep.subr.bf16.mxu0 0
        %1045 = vmatpush2.bf16.xpose.msra.mxu0 0
        %1046 = vmatprep.subr.bf16.mxu0 0
        %1047 = vmatpush2.bf16.xpose.msra.mxu0 0
        %1048 = vmatprep.subr.bf16.mxu0 0
        %1049 = vmatpush2.bf16.xpose.msra.mxu0 0
        %1050 = vmatprep.subr.bf16.mxu0 0
        %1051 = vmatpush2.bf16.xpose.msra.mxu0 0
        %1052 = vmatprep.subr.bf16.mxu0 0
        %1053 = vmatpush2.bf16.xpose.msra.mxu0 0
        %1054 = vmatprep.subr.bf16.mxu0 0
        %1055 = vmatpush2.bf16.xpose.msra.mxu0 0
        %1056 = vmatprep.subr.bf16.mxu0 0
        %1057 = vmatpush2.bf16.xpose.msra.mxu0 0
        %1058 = vmatprep.subr.bf16.mxu0 0
        %1059 = vmatpush2.bf16.xpose.msra.mxu0 0
        %1060 = vmatprep.mubr.bf16.mxu0 0
        %1061 = vmatmul.mubr.bf16.gmra.mxu0 %v1023
        %v1062 = vpop.f32.mrf.mxu0
        %v1063 = vadd.f32 0.0, %v1062
        %v1064 = vpop.f32.mrf.mxu0
        %v1065 = vpop.f32.mrf.mxu0
        %v1066 = vpop.f32.mrf.mxu0
        %1067 = vdwg.mxu0
        %v1068 = vsel %vm699, %v1063, -inf
        %1069 = vmax.xlane.f32.xlu0 %v1068
        %v1070 = vpop.xlane.xlu0 %1069
        %v1071 = vsub.f32 %v1063, %v1070
        %v1072 = vmul.f32 %v1071, 1.442695
        %v1073 = vpow.pop %v1072
        %v1074 = vsel %vm699, %v1073, 0.0
        %1075 = vadd.xlane.f32.xlu0 %v1074
        %v1076 = vpop.xlane.xlu0 %1075
        %v1077 = vpack.c.bf16 %v1073, %v1073
        %1078 = vrot.lane.b32.xlu0 %v873, 112
        %v1079 = vpop.permute.xlu0 %1078
        %v1081 = vsel %vm699, %v1077, 0
        %v1084 = vsel %vm759, %v1079, 0
        %1086 = vmatprep.subr.bf16.mxu0 0
        %1087 = vmatpush1.bf16.msra.mxu0 0
        %1088 = vmatprep.subr.bf16.mxu0 0
        %1089 = vmatpush1.bf16.msra.mxu0 0
        %1090 = vmatprep.subr.bf16.mxu0 0
        %1091 = vmatpush1.bf16.msra.mxu0 0
        %1092 = vmatprep.subr.bf16.mxu0 0
        %1093 = vmatpush1.bf16.msra.mxu0 0
        %1094 = vmatprep.subr.bf16.mxu0 0
        %1095 = vmatpush1.bf16.msra.mxu0 0
        %1096 = vmatprep.subr.bf16.mxu0 0
        %1097 = vmatpush1.bf16.msra.mxu0 0
        %1098 = vmatprep.subr.bf16.mxu0 0
        %1099 = vmatpush1.bf16.msra.mxu0 0
        %1100 = vmatprep.subr.bf16.mxu0 0
        %1101 = vmatpush1.bf16.msra.mxu0 %v1084
        %1102 = vmatprep.subr.bf16.mxu0 0
        %1103 = vmatpush2.bf16.msra.mxu0 0
        %1104 = vmatprep.subr.bf16.mxu0 0
        %1105 = vmatpush2.bf16.msra.mxu0 0
        %1106 = vmatprep.subr.bf16.mxu0 0
        %1107 = vmatpush2.bf16.msra.mxu0 0
        %1108 = vmatprep.subr.bf16.mxu0 0
        %1109 = vmatpush2.bf16.msra.mxu0 0
        %1110 = vmatprep.subr.bf16.mxu0 0
        %1111 = vmatpush2.bf16.msra.mxu0 0
        %1112 = vmatprep.subr.bf16.mxu0 0
        %1113 = vmatpush2.bf16.msra.mxu0 0
        %1114 = vmatprep.subr.bf16.mxu0 0
        %1115 = vmatpush2.bf16.msra.mxu0 0
        %1116 = vmatprep.subr.bf16.mxu0 0
        %1117 = vmatpush2.bf16.msra.mxu0 0
        %1118 = vmatprep.mubr.bf16.mxu0 0
        %1119 = vmatmul.mubr.bf16.gmra.mxu0 %v1081
        %v1120 = vpop.f32.mrf.mxu0
        %v1121 = vadd.f32 0.0, %v1120
        %v1122 = vpop.f32.mrf.mxu0
        %v1123 = vpop.f32.mrf.mxu0
        %v1124 = vpop.f32.mrf.mxu0
        %1125 = vdwg.mxu0
        %v1126 = vrcp.pop %v1076
        %v1127 = vmul.f32 %v1121, %v1126
        %v1128 = vpack.c.bf16 %v1127, %v1127
        %v1129 = vld [vmem:[#allocation13 + $0x8] sm:$0xf]
        %v1131 = vsel %vm699, %v1128, 0
        %v1134 = vsel %vm759, %v1129, 0
        %1136 = vmatprep.subr.bf16.mxu0 0
        %1137 = vmatpush1.bf16.msra.mxu0 0
        %1138 = vmatprep.subr.bf16.mxu0 0
        %1139 = vmatpush1.bf16.msra.mxu0 0
        %1140 = vmatprep.subr.bf16.mxu0 0
        %1141 = vmatpush1.bf16.msra.mxu0 0
        %1142 = vmatprep.subr.bf16.mxu0 0
        %1143 = vmatpush1.bf16.msra.mxu0 0
        %1144 = vmatprep.subr.bf16.mxu0 0
        %1145 = vmatpush1.bf16.msra.mxu0 0
        %1146 = vmatprep.subr.bf16.mxu0 0
        %1147 = vmatpush1.bf16.msra.mxu0 0
        %1148 = vmatprep.subr.bf16.mxu0 0
        %1149 = vmatpush1.bf16.msra.mxu0 0
        %1150 = vmatprep.subr.bf16.mxu0 0
        %1151 = vmatpush1.bf16.msra.mxu0 %v1134
        %1152 = vmatprep.subr.bf16.mxu0 0
        %1153 = vmatpush2.bf16.msra.mxu0 0
        %1154 = vmatprep.subr.bf16.mxu0 0
        %1155 = vmatpush2.bf16.msra.mxu0 0
        %1156 = vmatprep.subr.bf16.mxu0 0
        %1157 = vmatpush2.bf16.msra.mxu0 0
        %1158 = vmatprep.subr.bf16.mxu0 0
        %1159 = vmatpush2.bf16.msra.mxu0 0
        %1160 = vmatprep.subr.bf16.mxu0 0
        %1161 = vmatpush2.bf16.msra.mxu0 0
        %1162 = vmatprep.subr.bf16.mxu0 0
        %1163 = vmatpush2.bf16.msra.mxu0 0
        %1164 = vmatprep.subr.bf16.mxu0 0
        %1165 = vmatpush2.bf16.msra.mxu0 0
        %1166 = vmatprep.subr.bf16.mxu0 0
        %1167 = vmatpush2.bf16.msra.mxu0 0
        %1168 = vmatprep.mubr.bf16.mxu0 0
        %1169 = vmatmul.mubr.bf16.gmra.mxu0 %v1131
        %v1170 = vpop.f32.mrf.mxu0
        %v1171 = vadd.f32 0.0, %v1170
        %v1172 = vpop.f32.mrf.mxu0
        %v1173 = vpop.f32.mrf.mxu0
        %v1174 = vpop.f32.mrf.mxu0
        %1175 = vdwg.mxu0
        %v1176 = vadd.f32 %v1013, %v1171
        %1177 = vrot.lane.b32.xlu0 %v696, 104
        %v1178 = vpop.permute.xlu0 %1177
        %1179 = vrot.lane.b32.xlu0 %v812, 104
        %v1180 = vpop.permute.xlu0 %1179
        %v1182 = vsel %vm699, %v1178, 0
        %v1185 = vsel %vm699, %v1180, 0
        %1187 = vmatprep.subr.bf16.mxu0 0
        %1188 = vmatpush1.bf16.xpose.msra.mxu0 0
        %1189 = vmatprep.subr.bf16.mxu0 0
        %1190 = vmatpush1.bf16.xpose.msra.mxu0 0
        %1191 = vmatprep.subr.bf16.mxu0 0
        %1192 = vmatpush1.bf16.xpose.msra.mxu0 0
        %1193 = vmatprep.subr.bf16.mxu0 0
        %1194 = vmatpush1.bf16.xpose.msra.mxu0 0
        %1195 = vmatprep.subr.bf16.mxu0 0
        %1196 = vmatpush1.bf16.xpose.msra.mxu0 0
        %1197 = vmatprep.subr.bf16.mxu0 0
        %1198 = vmatpush1.bf16.xpose.msra.mxu0 0
        %1199 = vmatprep.subr.bf16.mxu0 0
        %1200 = vmatpush1.bf16.xpose.msra.mxu0 0
        %1201 = vmatprep.subr.bf16.mxu0 0
        %1202 = vmatpush1.bf16.xpose.msra.mxu0 %v1185
        %1203 = vmatprep.subr.bf16.mxu0 0
        %1204 = vmatpush2.bf16.xpose.msra.mxu0 0
        %1205 = vmatprep.subr.bf16.mxu0 0
        %1206 = vmatpush2.bf16.xpose.msra.mxu0 0
        %1207 = vmatprep.subr.bf16.mxu0 0
        %1208 = vmatpush2.bf16.xpose.msra.mxu0 0
        %1209 = vmatprep.subr.bf16.mxu0 0
        %1210 = vmatpush2.bf16.xpose.msra.mxu0 0
        %1211 = vmatprep.subr.bf16.mxu0 0
        %1212 = vmatpush2.bf16.xpose.msra.mxu0 0
        %1213 = vmatprep.subr.bf16.mxu0 0
        %1214 = vmatpush2.bf16.xpose.msra.mxu0 0
        %1215 = vmatprep.subr.bf16.mxu0 0
        %1216 = vmatpush2.bf16.xpose.msra.mxu0 0
        %1217 = vmatprep.subr.bf16.mxu0 0
        %1218 = vmatpush2.bf16.xpose.msra.mxu0 0
        %1219 = vmatprep.mubr.bf16.mxu0 0
        %1220 = vmatmul.mubr.bf16.gmra.mxu0 %v1182
        %v1221 = vpop.f32.mrf.mxu0
        %v1222 = vadd.f32 0.0, %v1221
        %v1223 = vpop.f32.mrf.mxu0
        %v1224 = vpop.f32.mrf.mxu0
        %v1225 = vpop.f32.mrf.mxu0
        %1226 = vdwg.mxu0
        %v1227 = vsel %vm699, %v1222, -inf
        %1228 = vmax.xlane.f32.xlu0 %v1227
        %v1229 = vpop.xlane.xlu0 %1228
        %v1230 = vsub.f32 %v1222, %v1229
        %v1231 = vmul.f32 %v1230, 1.442695
        %v1232 = vpow.pop %v1231
        %v1233 = vsel %vm699, %v1232, 0.0
        %1234 = vadd.xlane.f32.xlu0 %v1233
        %v1235 = vpop.xlane.xlu0 %1234
        %v1236 = vpack.c.bf16 %v1232, %v1232
        %1237 = vrot.lane.b32.xlu0 %v873, 104
        %v1238 = vpop.permute.xlu0 %1237
        %v1240 = vsel %vm699, %v1236, 0
        %v1243 = vsel %vm759, %v1238, 0
        %1245 = vmatprep.subr.bf16.mxu0 0
        %1246 = vmatpush1.bf16.msra.mxu0 0
        %1247 = vmatprep.subr.bf16.mxu0 0
        %1248 = vmatpush1.bf16.msra.mxu0 0
        %1249 = vmatprep.subr.bf16.mxu0 0
        %1250 = vmatpush1.bf16.msra.mxu0 0
        %1251 = vmatprep.subr.bf16.mxu0 0
        %1252 = vmatpush1.bf16.msra.mxu0 0
        %1253 = vmatprep.subr.bf16.mxu0 0
        %1254 = vmatpush1.bf16.msra.mxu0 0
        %1255 = vmatprep.subr.bf16.mxu0 0
        %1256 = vmatpush1.bf16.msra.mxu0 0
        %1257 = vmatprep.subr.bf16.mxu0 0
        %1258 = vmatpush1.bf16.msra.mxu0 0
        %1259 = vmatprep.subr.bf16.mxu0 0
        %1260 = vmatpush1.bf16.msra.mxu0 %v1243
        %1261 = vmatprep.subr.bf16.mxu0 0
        %1262 = vmatpush2.bf16.msra.mxu0 0
        %1263 = vmatprep.subr.bf16.mxu0 0
        %1264 = vmatpush2.bf16.msra.mxu0 0
        %1265 = vmatprep.subr.bf16.mxu0 0
        %1266 = vmatpush2.bf16.msra.mxu0 0
        %1267 = vmatprep.subr.bf16.mxu0 0
        %1268 = vmatpush2.bf16.msra.mxu0 0
        %1269 = vmatprep.subr.bf16.mxu0 0
        %1270 = vmatpush2.bf16.msra.mxu0 0
        %1271 = vmatprep.subr.bf16.mxu0 0
        %1272 = vmatpush2.bf16.msra.mxu0 0
        %1273 = vmatprep.subr.bf16.mxu0 0
        %1274 = vmatpush2.bf16.msra.mxu0 0
        %1275 = vmatprep.subr.bf16.mxu0 0
        %1276 = vmatpush2.bf16.msra.mxu0 0
        %1277 = vmatprep.mubr.bf16.mxu0 0
        %1278 = vmatmul.mubr.bf16.gmra.mxu0 %v1240
        %v1279 = vpop.f32.mrf.mxu0
        %v1280 = vadd.f32 0.0, %v1279
        %v1281 = vpop.f32.mrf.mxu0
        %v1282 = vpop.f32.mrf.mxu0
        %v1283 = vpop.f32.mrf.mxu0
        %1284 = vdwg.mxu0
        %v1285 = vrcp.pop %v1235
        %v1286 = vmul.f32 %v1280, %v1285
        %v1287 = vpack.c.bf16 %v1286, %v1286
        %v1288 = vld [vmem:[#allocation13 + $0xc] sm:$0xf]
        %v1290 = vsel %vm699, %v1287, 0
        %v1293 = vsel %vm759, %v1288, 0
        %1295 = vmatprep.subr.bf16.mxu0 0
        %1296 = vmatpush1.bf16.msra.mxu0 0
        %1297 = vmatprep.subr.bf16.mxu0 0
        %1298 = vmatpush1.bf16.msra.mxu0 0
        %1299 = vmatprep.subr.bf16.mxu0 0
        %1300 = vmatpush1.bf16.msra.mxu0 0
        %1301 = vmatprep.subr.bf16.mxu0 0
        %1302 = vmatpush1.bf16.msra.mxu0 0
        %1303 = vmatprep.subr.bf16.mxu0 0
        %1304 = vmatpush1.bf16.msra.mxu0 0
        %1305 = vmatprep.subr.bf16.mxu0 0
        %1306 = vmatpush1.bf16.msra.mxu0 0
        %1307 = vmatprep.subr.bf16.mxu0 0
        %1308 = vmatpush1.bf16.msra.mxu0 0
        %1309 = vmatprep.subr.bf16.mxu0 0
        %1310 = vmatpush1.bf16.msra.mxu0 %v1293
        %1311 = vmatprep.subr.bf16.mxu0 0
        %1312 = vmatpush2.bf16.msra.mxu0 0
        %1313 = vmatprep.subr.bf16.mxu0 0
        %1314 = vmatpush2.bf16.msra.mxu0 0
        %1315 = vmatprep.subr.bf16.mxu0 0
        %1316 = vmatpush2.bf16.msra.mxu0 0
        %1317 = vmatprep.subr.bf16.mxu0 0
        %1318 = vmatpush2.bf16.msra.mxu0 0
        %1319 = vmatprep.subr.bf16.mxu0 0
        %1320 = vmatpush2.bf16.msra.mxu0 0
        %1321 = vmatprep.subr.bf16.mxu0 0
        %1322 = vmatpush2.bf16.msra.mxu0 0
        %1323 = vmatprep.subr.bf16.mxu0 0
        %1324 = vmatpush2.bf16.msra.mxu0 0
        %1325 = vmatprep.subr.bf16.mxu0 0
        %1326 = vmatpush2.bf16.msra.mxu0 0
        %1327 = vmatprep.mubr.bf16.mxu0 0
        %1328 = vmatmul.mubr.bf16.gmra.mxu0 %v1290
        %v1329 = vpop.f32.mrf.mxu0
        %v1330 = vadd.f32 0.0, %v1329
        %v1331 = vpop.f32.mrf.mxu0
        %v1332 = vpop.f32.mrf.mxu0
        %v1333 = vpop.f32.mrf.mxu0
        %1334 = vdwg.mxu0
        %v1335 = vadd.f32 %v1176, %v1330
        %v1336 = vld [vmem:[%s9] sm:$0x1]
        %v1338 = vlaneseq
        %v1339 = vshrl.u32 %v1338, 7
        %v1340 = vsub.s32 0, %v1339
        %v1341 = vrot.slane %v1336, %v1340
        %v1343 = vadd.f32 %v1335, %v1341
        %1344 = vst.msk [vmem:[%s486] sm:$0xff] %vm652, %v1343
        %s1345 = sand.u32 %s276, 1
        %s1346 = scalar_lea.sflag [#allocation6], %s1345
        %s1347 = sand.u32 %s276, 1
        %s1348 = smul.addr %s1347, 8
        %s1349 = scalar_lea.vmem [#allocation15], %s1348
        // Predicated region
        $region89: #{tpu_custom_call.1} parent=59 // pred_check
          %p1350 = pneg %p286
        $region90: #{tpu_custom_call.1} parent=59 // pred_check_branch
          %1352 = sbr.rel (%p1350) target = $region92
        $region91: #{tpu_custom_call.1} parent=59 // pred_region
          %s1354 = ssub.s32 128, 128
          %1355 = vsyncadd %s1346, %s1354
          %s1356 = sadd.s32 %s37, %s36
          %s1357 = smul.addr %s1356, 128
          %s1358 = scalar_lea.hbm %s10, %s1357
          %s1360 = sshll.u32 %s1349, 4
          %s1361 = int_to_ptr.vmem [resolvable:$true] %s1360
          %1363 = dma.vmem_to_hbm [thread:$0]  %s1361, 128, %s1358, %s1346
        $region92: #{tpu_custom_call.1} parent=59 // pred_fallthru
          _
      $region60: #{tpu_custom_call.1} parent=5 // pred_fallthru
        _
      %p1364 = scmp.le.s32.totalorder 2, %s27
      // Predicated region
      $region93: #{tpu_custom_call.1} parent=5 // pred_check
        %p1365 = pneg %p1364
      $region94: #{tpu_custom_call.1} parent=5 // pred_check_branch
        %1367 = sbr.rel (%p1365) target = $region96
      $region95: #{tpu_custom_call.1} parent=5 // pred_region
        %s1368 = ssub.s32 %s27, 2
        // Predicated region
        $region97: #{tpu_custom_call.1} parent=95 // pred_check
          %p1369 = pneg %p292
        $region98: #{tpu_custom_call.1} parent=95 // pred_check_branch
          %1371 = sbr.rel (%p1369) target = $region100
        $region99: #{tpu_custom_call.1} parent=95 // pred_region
          %s1372 = sand.u32 %s277, 1
          %s1373 = scalar_lea.sflag [#allocation6], %s1372
          %s1374 = sand.u32 %s277, 1
          %s1375 = smul.addr %s1374, 8
          %s1376 = scalar_lea.vmem [#allocation15], %s1375
          %1377 = dma.done %s1373, 128
        $region100: #{tpu_custom_call.1} parent=95 // pred_fallthru
          _
      $region96: #{tpu_custom_call.1} parent=5 // pred_fallthru
        _
    $region6: #{tpu_custom_call.1} parent=1 // loop_footer
      %s31 = sadd.s32 1, %s27
    $region7: #{tpu_custom_call.1} parent=1 // loop_footer_branch
      %26 = sbr.rel target = $region3
    $region8: #{tpu_custom_call.1} parent=1 // loop_exit
      _
    %1378 = vsyncpa [#allocation5], 1
    %s1379 = scalar_lea.sflag [#allocation5], 1
    %1380 = vsyncpa %s1379, 1
    %1381 = vsyncpa [#allocation8], 1
    %s1382 = scalar_lea.sflag [#allocation8], 1
    %1383 = vsyncpa %s1382, 1
    %1384 = vsyncpa [#allocation11], 1
    %1385 = vsyncpa [#allocation14], 1
    %1386 = vsyncpa [#allocation6], 1
    %s1387 = scalar_lea.sflag [#allocation6], 1
    %1388 = vsyncpa %s1387, 1

</llo_original>
